<compile_context>
chip_gen: v6e
topology: v6e:2x2x1
jax: 0.10.0
libtpu: 0.0.40
codegen_flags: <defaults>
</compile_context>

<pallas_src>
import functools

import jax
import jax.numpy as jnp
import numpy as np
from jax.experimental import pallas as pl
from jax.experimental.pallas import tpu as pltpu

_TAPS3x3 = tuple((ky, kx) for ky in range(3) for kx in range(3))


# ----------------------------------------------------------------------------
# Fused Pallas kernel (one grid step == one batch element)
# ----------------------------------------------------------------------------
def _rrm_kernel(x_ref, mask_ref, w1_ref, wfull_ref, wpt_ref, wout_ref,
                bi_ref, bout_ref, o_ref, buf_mid, buf_col,
                *, MX, MB, D, Wp, cmid, plan):
    # x_ref:    (Cin, LX)          pre-padded flat input (also the residual)
    # mask_ref: (1, D)             1.0 at real-image columns of the window
    # w1_ref:   (9, Cmid, Cin)     conv1 per-tap weights (BN folded)
    # wfull_ref:(NF, Cmid, 9*Cmid) tap-concatenated weights for 9-tap layers
    # wpt_ref:  (NP, Cmid, Cmid)   centre-tap weights for degenerate layers
    # wout_ref: (Cfin, 9*Cmid)     tap-concatenated out-conv weights
    # bi_ref:   (6, Cmid, 1)       folded BN biases for conv1..conv6
    # bout_ref: (Cfin, 1)
    # o_ref:    (Cfin, D)          lane-dense output (padded-flat layout)
    # buf_mid:  (Cmid, LB) VMEM    zero-halo padded activation buffer
    # buf_col:  (9*Cmid, D) VMEM   im2col (stacked shifted windows) buffer
    LB = buf_mid.shape[1]
    mask = mask_ref[...]                                  # (1, D)

    # Only the halo of buf_mid must be zero; the interior is fully rewritten
    # before every use.  Re-done each grid step -> megacore-safe.
    buf_mid[:, :MB] = jnp.zeros((cmid, MB), jnp.float32)
    buf_mid[:, MB + D:] = jnp.zeros((cmid, LB - MB - D), jnp.float32)

    # ---- conv1 (+folded BN, ReLU): per-tap K=Cin dots on the padded input
    acc = jnp.zeros((cmid, D), dtype=jnp.float32)
    for t, (ky, kx) in enumerate(_TAPS3x3):
        off = MX + (ky - 1) * Wp + (kx - 1)
        acc = acc + jnp.dot(w1_ref[t], x_ref[:, off:off + D],
                            preferred_element_type=jnp.float32)
    y = jnp.maximum(acc + bi_ref[0], 0.0) * mask
    feat = y

    def im2col(d):
        # Stack the 9 dilated shifted windows of buf_mid along sublanes.
        for t, (ky, kx) in enumerate(_TAPS3x3):
            off = MB + (ky - 1) * d * Wp + (kx - 1) * d
            buf_col[t * cmid:(t + 1) * cmid, :] = buf_mid[:, off:off + D]

    # ---- conv2 .. conv6 ----
    for kind, idx, d, bidx in plan:
        if kind == "full":                 # 9 live taps: im2col + one fat dot
            buf_mid[:, MB:MB + D] = y
            im2col(d)
            acc = jnp.dot(wfull_ref[idx], buf_col[...],
                          preferred_element_type=jnp.float32)
        else:                              # centre tap only: pure 1x1 conv
            acc = jnp.dot(wpt_ref[idx], y,
                          preferred_element_type=jnp.float32)
        y = jnp.maximum(acc + bi_ref[bidx], 0.0) * mask
        feat = feat + y

    # ---- out conv (dil 1) on the feature sum, then residual add ----
    buf_mid[:, MB:MB + D] = feat
    im2col(1)
    acc = jnp.dot(wout_ref[...], buf_col[...],
                  preferred_element_type=jnp.float32)
    o_ref[...] = acc + bout_ref[...] + x_ref[:, MX:MX + D]


# ----------------------------------------------------------------------------
# Host-side wrapper
# ----------------------------------------------------------------------------
def _fold_bn_into_conv(w_hwio, conv_bias, bn_params, eps=1e-5):
    gamma, beta, mean, var = bn_params
    scale = gamma / jnp.sqrt(var + eps)              # (Cout,)
    w_folded = w_hwio * scale                        # broadcast over Cout
    b_folded = (conv_bias - mean) * scale + beta
    return w_folded, b_folded


def rrm_forward(x_nchw, params):
    n, cin, h, w = x_nchw.shape
    cmid = params["conv1"][0].shape[-1]
    w_out = params["out"][0]                         # HWIO (3,3,cmid,cfin)
    cfin = w_out.shape[-1]
    assert cin == cfin, "residual add requires in_channels == 64"
    assert h == w, "TODO(synk): non-square tap pruning not implemented"
    dils = (1, 2, 4, 8, 16, 32)

    # ---- padded flat geometry (inter-row zero gap = largest live dilation)
    d_max = max(d for d in dils if d < h)
    Wp = w + d_max
    D = h * Wp
    MX = -(-(Wp + 1) // 128) * 128                   # conv1 halo, aligned
    LX = MX + D + MX
    MB = -(-(d_max * Wp + d_max) // 128) * 128       # mid-layer halo, aligned
    LB = MB + D + MB

    # ---- input delivered pre-padded in the flat layout (no staging loop)
    xf = x_nchw.astype(jnp.float32)
    x_pad = jnp.pad(xf, ((0, 0), (0, 0), (0, 0), (0, Wp - w)))
    x_pad = x_pad.reshape(n, cin, D)
    x_pad = jnp.pad(x_pad, ((0, 0), (0, 0), (MX, LX - MX - D)))  # (n,cin,LX)

    mask = ((jnp.arange(D) % Wp) < w).astype(jnp.float32).reshape(1, D)

    # ---- fold BN into weights / biases, build tap-concatenated weights ----
    taps = _TAPS3x3
    w1f, b1f = _fold_bn_into_conv(params["conv1"][0], params["conv1"][1],
                                  params["bn1"])
    w1_stk = jnp.stack([w1f[ky, kx].T for (ky, kx) in taps])  # (9,cmid,cin)

    biases = [b1f]
    wfull, wpt, plan = [], [], []
    for layer, d in enumerate(dils[1:], start=2):
        wf, bf = _fold_bn_into_conv(params[f"conv{layer}"][0],
                                    params[f"conv{layer}"][1],
                                    params[f"bn{layer}"])
        biases.append(bf)
        if d < h:                                    # all 9 taps live
            plan.append(("full", len(wfull), d, layer - 1))
            wfull.append(jnp.concatenate(
                [wf[ky, kx].T for (ky, kx) in taps], axis=1))  # (cmid,9*cmid)
        else:                                        # centre tap only
            plan.append(("pt", len(wpt), d, layer - 1))
            wpt.append(wf[1, 1].T)                             # (cmid,cmid)

    wfull = (jnp.stack(wfull) if wfull
             else jnp.zeros((1, cmid, 9 * cmid), jnp.float32))
    wpt = (jnp.stack(wpt) if wpt
           else jnp.zeros((1, cmid, cmid), jnp.float32))
    bi = jnp.stack(biases).reshape(6, cmid, 1)

    wout_cat = jnp.concatenate([w_out[ky, kx].T for (ky, kx) in taps],
                               axis=1)                         # (cfin,9*cmid)
    bout = params["out"][1].reshape(cfin, 1)

    flops_per = 2 * D * (
        9 * cin * cmid
        + sum(9 * cmid * cmid for k, _, _, _ in plan if k == "full")
        + sum(cmid * cmid for k, _, _, _ in plan if k == "pt")
        + 9 * cmid * cfin)
    bytes_accessed = 4 * (x_pad.size + n * cfin * D + w1_stk.size
                          + wfull.size + wpt.size + wout_cat.size
                          + bi.size + bout.size + mask.size)

    kernel = functools.partial(_rrm_kernel, MX=MX, MB=MB, D=D, Wp=Wp,
                               cmid=cmid, plan=tuple(plan))

    out_flat = pl.pallas_call(
        kernel,
        out_shape=jax.ShapeDtypeStruct((n, cfin, D), jnp.float32),
        grid=(n,),
        in_specs=[
            pl.BlockSpec((None, cin, LX), lambda b: (b, 0, 0)),
            pl.BlockSpec((1, D), lambda b: (0, 0)),
            pl.BlockSpec((9, cmid, cin), lambda b: (0, 0, 0)),
            pl.BlockSpec(wfull.shape, lambda b: (0, 0, 0)),
            pl.BlockSpec(wpt.shape, lambda b: (0, 0, 0)),
            pl.BlockSpec((cfin, 9 * cmid), lambda b: (0, 0)),
            pl.BlockSpec((6, cmid, 1), lambda b: (0, 0, 0)),
            pl.BlockSpec((cfin, 1), lambda b: (0, 0)),
        ],
        out_specs=pl.BlockSpec((None, cfin, D), lambda b: (b, 0, 0)),
        scratch_shapes=[pltpu.VMEM((cmid, LB), jnp.float32),
                        pltpu.VMEM((9 * cmid, D), jnp.float32)],
        compiler_params=pltpu.CompilerParams(
            dimension_semantics=("parallel",)),
        cost_estimate=pl.CostEstimate(flops=n * flops_per, transcendentals=0,
                                      bytes_accessed=bytes_accessed),
    )(x_pad, mask, w1_stk, wfull, wpt, wout_cat, bi, bout)

    # Padded-flat -> NCHW (flat r = i*Wp + j).  A consumer could accept the
    # padded-flat layout directly and skip this slice.
    return out_flat.reshape(n, cfin, h, Wp)[:, :, :, :w]


# ----------------------------------------------------------------------------
# Deterministic synthetic parameters
# ----------------------------------------------------------------------------
def make_params(key, in_channels, out_channels):
    def conv_param(k, cin, cout):
        kw, kb = jax.random.split(k)
        w = jax.random.normal(kw, (3, 3, cin, cout), jnp.float32) * 0.05
        b = jax.random.normal(kb, (cout,), jnp.float32) * 0.05
        return w, b

    def bn_param(k, c):
        kg, kb, km, kv = jax.random.split(k, 4)
        gamma = 1.0 + 0.1 * jax.random.normal(kg, (c,), jnp.float32)
        beta = 0.1 * jax.random.normal(kb, (c,), jnp.float32)
        mean = 0.1 * jax.random.normal(km, (c,), jnp.float32)
        var = 1.0 + 0.1 * jax.random.uniform(kv, (c,), jnp.float32)
        return gamma, beta, mean, var

    keys = jax.random.split(key, 13)
    params = {}
    params["conv1"] = conv_param(keys[0], in_channels, out_channels)
    for i, ki in zip(range(2, 7), keys[1:6]):
        params[f"conv{i}"] = conv_param(ki, out_channels, out_channels)
    for i, ki in zip(range(1, 7), keys[6:12]):
        params[f"bn{i}"] = bn_param(ki, out_channels)
    params["out"] = conv_param(keys[12], out_channels, 64)
    return params


# ----------------------------------------------------------------------------
# Pure-JAX reference (XLA conv) for correctness checking
# ----------------------------------------------------------------------------
def _ref_conv(x, w, b, d):
    y = jax.lax.conv_general_dilated(
        x, w, window_strides=(1, 1), padding=[(d, d), (d, d)],
        rhs_dilation=(d, d),
        dimension_numbers=("NHWC", "HWIO", "NHWC"))
    return y + b


def rrm_forward_ref(x_nchw, params):
    x = jnp.transpose(x_nchw, (0, 2, 3, 1)).astype(jnp.float32)
    residual = x
    dils = (1, 2, 4, 8, 16, 32)
    feats = []
    cur = x
    for i, d in enumerate(dils, start=1):
        wgt, b = params[f"conv{i}"]
        gamma, beta, mean, var = params[f"bn{i}"]
        y = _ref_conv(cur, wgt, b, d)
        y = gamma * (y - mean) / jnp.sqrt(var + 1e-5) + beta
        cur = jnp.maximum(y, 0.0)
        feats.append(cur)
    s = sum(feats[1:], feats[0])
    w_out, b_out = params["out"]
    y = _ref_conv(s, w_out, b_out, 1)
    y = residual + y
    return jnp.transpose(y, (0, 3, 1, 2))


if __name__ == "__main__":
    # in_channels must equal 64 (output channels of `self.out`) for the
    # residual add in the original module to be shape-valid.
    batch, in_channels, out_channels, spatial = 2, 64, 8, 16

    key = jax.random.PRNGKey(0)
    k_x, k_p = jax.random.split(key)
    x = jax.random.normal(k_x, (batch, in_channels, spatial, spatial),
                          jnp.float32)
    params = make_params(k_p, in_channels, out_channels)

    rrm_jit = jax.jit(rrm_forward)
    out = jax.block_until_ready(rrm_jit(x, params))
    ref = jax.block_until_ready(rrm_forward_ref(x, params))

    assert out.shape == (batch, 64, spatial, spatial), out.shape
    np.testing.assert_allclose(np.asarray(out), np.asarray(ref),
                               rtol=1e-2, atol=1e-2)
    print("KERNEL_OK")
</pallas_src>

<mosaic_0001>
module attributes {stable_mosaic.version = 11 : i64} {
  func.func @_rrm_kernel(%arg0: i32, %arg1: memref<1x64x640xf32, #tpu.memory_space<vmem>>, %arg2: memref<1x384xf32, #tpu.memory_space<vmem>>, %arg3: memref<9x8x64xf32, #tpu.memory_space<vmem>>, %arg4: memref<3x8x72xf32, #tpu.memory_space<vmem>>, %arg5: memref<2x8x8xf32, #tpu.memory_space<vmem>>, %arg6: memref<64x72xf32, #tpu.memory_space<vmem>>, %arg7: memref<6x8x1xf32, #tpu.memory_space<vmem>>, %arg8: memref<64x1xf32, #tpu.memory_space<vmem>>, %arg9: memref<1x64x384xf32, #tpu.memory_space<vmem>>, %arg10: memref<8x896xf32, #tpu.memory_space<vmem>>, %arg11: memref<72x384xf32, #tpu.memory_space<vmem>>) attributes {dimension_semantics = [#tpu.dimension_semantics<parallel>], iteration_bounds = array<i64: 2>, scalar_prefetch = 0 : i64, scratch_operands = 2 : i64, tpu.core_type = #tpu.core_type<tc>, window_params = [{transform_indices = @transform_0, window_bounds = array<i64: 1, 64, 640>}, {pipeline_mode = #tpu.pipeline_mode<synchronous>, transform_indices = @transform_1, window_bounds = array<i64: 1, 384>}, {pipeline_mode = #tpu.pipeline_mode<synchronous>, transform_indices = @transform_2, window_bounds = array<i64: 9, 8, 64>}, {pipeline_mode = #tpu.pipeline_mode<synchronous>, transform_indices = @transform_3, window_bounds = array<i64: 3, 8, 72>}, {pipeline_mode = #tpu.pipeline_mode<synchronous>, transform_indices = @transform_4, window_bounds = array<i64: 2, 8, 8>}, {pipeline_mode = #tpu.pipeline_mode<synchronous>, transform_indices = @transform_5, window_bounds = array<i64: 64, 72>}, {pipeline_mode = #tpu.pipeline_mode<synchronous>, transform_indices = @transform_6, window_bounds = array<i64: 6, 8, 1>}, {pipeline_mode = #tpu.pipeline_mode<synchronous>, transform_indices = @transform_7, window_bounds = array<i64: 64, 1>}, {transform_indices = @transform_8, window_bounds = array<i64: 1, 64, 384>}]} {
    %c0 = arith.constant 0 : index
    %c0_0 = arith.constant 0 : index
    %0 = vector.load %arg2[%c0, %c0_0] : memref<1x384xf32, #tpu.memory_space<vmem>>, vector<1x384xf32>
    %cst = arith.constant 0.000000e+00 : f32
    %1 = vector.broadcast %cst : f32 to vector<8x256xf32>
    %c0_1 = arith.constant 0 : index
    %c0_2 = arith.constant 0 : index
    %2 = vector.load %arg10[%c0_1, %c0_2] : memref<8x896xf32, #tpu.memory_space<vmem>>, vector<8x256xf32>
    tpu.vector_store %arg10[%c0_1, %c0_2], %1 {strides = array<i32>} : memref<8x896xf32, #tpu.memory_space<vmem>>, vector<8x256xf32>,
    %cst_3 = arith.constant 0.000000e+00 : f32
    %3 = vector.broadcast %cst_3 : f32 to vector<8x256xf32>
    %c0_4 = arith.constant 0 : index
    %c640 = arith.constant 640 : index
    %4 = vector.load %arg10[%c0_4, %c640] : memref<8x896xf32, #tpu.memory_space<vmem>>, vector<8x256xf32>
    tpu.vector_store %arg10[%c0_4, %c640], %3 {strides = array<i32>} : memref<8x896xf32, #tpu.memory_space<vmem>>, vector<8x256xf32>,
    %cst_5 = arith.constant 0.000000e+00 : f32
    %5 = vector.broadcast %cst_5 : f32 to vector<8x384xf32>
    %c0_6 = arith.constant 0 : index
    %c0_7 = arith.constant 0 : index
    %c0_8 = arith.constant 0 : index
    %6 = vector.load %arg3[%c0_6, %c0_7, %c0_8] : memref<9x8x64xf32, #tpu.memory_space<vmem>>, vector<1x8x64xf32>
    %7 = vector.shape_cast %6 : vector<1x8x64xf32> to vector<8x64xf32>
    %c0_9 = arith.constant 0 : index
    %c0_10 = arith.constant 0 : index
    %c103 = arith.constant 103 : index
    %8 = vector.load %arg1[%c0_9, %c0_10, %c103] : memref<1x64x640xf32, #tpu.memory_space<vmem>>, vector<1x64x384xf32>
    %9 = vector.shape_cast %8 : vector<1x64x384xf32> to vector<64x384xf32>
    %cst_11 = arith.constant dense<0.000000e+00> : vector<8x384xf32>
    %10 = tpu.matmul %7, %9, %cst_11 {dimension_numbers = #tpu.dot_dimension_numbers<[1], [0], [0], [1], [0, 0, 1, 1], [], []>} : vector<8x64xf32>, vector<64x384xf32>, vector<8x384xf32> -> vector<8x384xf32>
    %11 = arith.addf %5, %10 : vector<8x384xf32>
    %c1 = arith.constant 1 : index
    %c0_12 = arith.constant 0 : index
    %c0_13 = arith.constant 0 : index
    %12 = vector.load %arg3[%c1, %c0_12, %c0_13] : memref<9x8x64xf32, #tpu.memory_space<vmem>>, vector<1x8x64xf32>
    %13 = vector.shape_cast %12 : vector<1x8x64xf32> to vector<8x64xf32>
    %c0_14 = arith.constant 0 : index
    %c0_15 = arith.constant 0 : index
    %c104 = arith.constant 104 : index
    %14 = vector.load %arg1[%c0_14, %c0_15, %c104] : memref<1x64x640xf32, #tpu.memory_space<vmem>>, vector<1x64x384xf32>
    %15 = vector.shape_cast %14 : vector<1x64x384xf32> to vector<64x384xf32>
    %cst_16 = arith.constant dense<0.000000e+00> : vector<8x384xf32>
    %16 = tpu.matmul %13, %15, %cst_16 {dimension_numbers = #tpu.dot_dimension_numbers<[1], [0], [0], [1], [0, 0, 1, 1], [], []>} : vector<8x64xf32>, vector<64x384xf32>, vector<8x384xf32> -> vector<8x384xf32>
    %17 = arith.addf %11, %16 : vector<8x384xf32>
    %c2 = arith.constant 2 : index
    %c0_17 = arith.constant 0 : index
    %c0_18 = arith.constant 0 : index
    %18 = vector.load %arg3[%c2, %c0_17, %c0_18] : memref<9x8x64xf32, #tpu.memory_space<vmem>>, vector<1x8x64xf32>
    %19 = vector.shape_cast %18 : vector<1x8x64xf32> to vector<8x64xf32>
    %c0_19 = arith.constant 0 : index
    %c0_20 = arith.constant 0 : index
    %c105 = arith.constant 105 : index
    %20 = vector.load %arg1[%c0_19, %c0_20, %c105] : memref<1x64x640xf32, #tpu.memory_space<vmem>>, vector<1x64x384xf32>
    %21 = vector.shape_cast %20 : vector<1x64x384xf32> to vector<64x384xf32>
    %cst_21 = arith.constant dense<0.000000e+00> : vector<8x384xf32>
    %22 = tpu.matmul %19, %21, %cst_21 {dimension_numbers = #tpu.dot_dimension_numbers<[1], [0], [0], [1], [0, 0, 1, 1], [], []>} : vector<8x64xf32>, vector<64x384xf32>, vector<8x384xf32> -> vector<8x384xf32>
    %23 = arith.addf %17, %22 : vector<8x384xf32>
    %c3 = arith.constant 3 : index
    %c0_22 = arith.constant 0 : index
    %c0_23 = arith.constant 0 : index
    %24 = vector.load %arg3[%c3, %c0_22, %c0_23] : memref<9x8x64xf32, #tpu.memory_space<vmem>>, vector<1x8x64xf32>
    %25 = vector.shape_cast %24 : vector<1x8x64xf32> to vector<8x64xf32>
    %c0_24 = arith.constant 0 : index
    %c0_25 = arith.constant 0 : index
    %c127 = arith.constant 127 : index
    %26 = vector.load %arg1[%c0_24, %c0_25, %c127] : memref<1x64x640xf32, #tpu.memory_space<vmem>>, vector<1x64x384xf32>
    %27 = vector.shape_cast %26 : vector<1x64x384xf32> to vector<64x384xf32>
    %cst_26 = arith.constant dense<0.000000e+00> : vector<8x384xf32>
    %28 = tpu.matmul %25, %27, %cst_26 {dimension_numbers = #tpu.dot_dimension_numbers<[1], [0], [0], [1], [0, 0, 1, 1], [], []>} : vector<8x64xf32>, vector<64x384xf32>, vector<8x384xf32> -> vector<8x384xf32>
    %29 = arith.addf %23, %28 : vector<8x384xf32>
    %c4 = arith.constant 4 : index
    %c0_27 = arith.constant 0 : index
    %c0_28 = arith.constant 0 : index
    %30 = vector.load %arg3[%c4, %c0_27, %c0_28] : memref<9x8x64xf32, #tpu.memory_space<vmem>>, vector<1x8x64xf32>
    %31 = vector.shape_cast %30 : vector<1x8x64xf32> to vector<8x64xf32>
    %c0_29 = arith.constant 0 : index
    %c0_30 = arith.constant 0 : index
    %c128 = arith.constant 128 : index
    %32 = vector.load %arg1[%c0_29, %c0_30, %c128] : memref<1x64x640xf32, #tpu.memory_space<vmem>>, vector<1x64x384xf32>
    %33 = vector.shape_cast %32 : vector<1x64x384xf32> to vector<64x384xf32>
    %cst_31 = arith.constant dense<0.000000e+00> : vector<8x384xf32>
    %34 = tpu.matmul %31, %33, %cst_31 {dimension_numbers = #tpu.dot_dimension_numbers<[1], [0], [0], [1], [0, 0, 1, 1], [], []>} : vector<8x64xf32>, vector<64x384xf32>, vector<8x384xf32> -> vector<8x384xf32>
    %35 = arith.addf %29, %34 : vector<8x384xf32>
    %c5 = arith.constant 5 : index
    %c0_32 = arith.constant 0 : index
    %c0_33 = arith.constant 0 : index
    %36 = vector.load %arg3[%c5, %c0_32, %c0_33] : memref<9x8x64xf32, #tpu.memory_space<vmem>>, vector<1x8x64xf32>
    %37 = vector.shape_cast %36 : vector<1x8x64xf32> to vector<8x64xf32>
    %c0_34 = arith.constant 0 : index
    %c0_35 = arith.constant 0 : index
    %c129 = arith.constant 129 : index
    %38 = vector.load %arg1[%c0_34, %c0_35, %c129] : memref<1x64x640xf32, #tpu.memory_space<vmem>>, vector<1x64x384xf32>
    %39 = vector.shape_cast %38 : vector<1x64x384xf32> to vector<64x384xf32>
    %cst_36 = arith.constant dense<0.000000e+00> : vector<8x384xf32>
    %40 = tpu.matmul %37, %39, %cst_36 {dimension_numbers = #tpu.dot_dimension_numbers<[1], [0], [0], [1], [0, 0, 1, 1], [], []>} : vector<8x64xf32>, vector<64x384xf32>, vector<8x384xf32> -> vector<8x384xf32>
    %41 = arith.addf %35, %40 : vector<8x384xf32>
    %c6 = arith.constant 6 : index
    %c0_37 = arith.constant 0 : index
    %c0_38 = arith.constant 0 : index
    %42 = vector.load %arg3[%c6, %c0_37, %c0_38] : memref<9x8x64xf32, #tpu.memory_space<vmem>>, vector<1x8x64xf32>
    %43 = vector.shape_cast %42 : vector<1x8x64xf32> to vector<8x64xf32>
    %c0_39 = arith.constant 0 : index
    %c0_40 = arith.constant 0 : index
    %c151 = arith.constant 151 : index
    %44 = vector.load %arg1[%c0_39, %c0_40, %c151] : memref<1x64x640xf32, #tpu.memory_space<vmem>>, vector<1x64x384xf32>
    %45 = vector.shape_cast %44 : vector<1x64x384xf32> to vector<64x384xf32>
    %cst_41 = arith.constant dense<0.000000e+00> : vector<8x384xf32>
    %46 = tpu.matmul %43, %45, %cst_41 {dimension_numbers = #tpu.dot_dimension_numbers<[1], [0], [0], [1], [0, 0, 1, 1], [], []>} : vector<8x64xf32>, vector<64x384xf32>, vector<8x384xf32> -> vector<8x384xf32>
    %47 = arith.addf %41, %46 : vector<8x384xf32>
    %c7 = arith.constant 7 : index
    %c0_42 = arith.constant 0 : index
    %c0_43 = arith.constant 0 : index
    %48 = vector.load %arg3[%c7, %c0_42, %c0_43] : memref<9x8x64xf32, #tpu.memory_space<vmem>>, vector<1x8x64xf32>
    %49 = vector.shape_cast %48 : vector<1x8x64xf32> to vector<8x64xf32>
    %c0_44 = arith.constant 0 : index
    %c0_45 = arith.constant 0 : index
    %c152 = arith.constant 152 : index
    %50 = vector.load %arg1[%c0_44, %c0_45, %c152] : memref<1x64x640xf32, #tpu.memory_space<vmem>>, vector<1x64x384xf32>
    %51 = vector.shape_cast %50 : vector<1x64x384xf32> to vector<64x384xf32>
    %cst_46 = arith.constant dense<0.000000e+00> : vector<8x384xf32>
    %52 = tpu.matmul %49, %51, %cst_46 {dimension_numbers = #tpu.dot_dimension_numbers<[1], [0], [0], [1], [0, 0, 1, 1], [], []>} : vector<8x64xf32>, vector<64x384xf32>, vector<8x384xf32> -> vector<8x384xf32>
    %53 = arith.addf %47, %52 : vector<8x384xf32>
    %c8 = arith.constant 8 : index
    %c0_47 = arith.constant 0 : index
    %c0_48 = arith.constant 0 : index
    %54 = vector.load %arg3[%c8, %c0_47, %c0_48] : memref<9x8x64xf32, #tpu.memory_space<vmem>>, vector<1x8x64xf32>
    %55 = vector.shape_cast %54 : vector<1x8x64xf32> to vector<8x64xf32>
    %c0_49 = arith.constant 0 : index
    %c0_50 = arith.constant 0 : index
    %c153 = arith.constant 153 : index
    %56 = vector.load %arg1[%c0_49, %c0_50, %c153] : memref<1x64x640xf32, #tpu.memory_space<vmem>>, vector<1x64x384xf32>
    %57 = vector.shape_cast %56 : vector<1x64x384xf32> to vector<64x384xf32>
    %cst_51 = arith.constant dense<0.000000e+00> : vector<8x384xf32>
    %58 = tpu.matmul %55, %57, %cst_51 {dimension_numbers = #tpu.dot_dimension_numbers<[1], [0], [0], [1], [0, 0, 1, 1], [], []>} : vector<8x64xf32>, vector<64x384xf32>, vector<8x384xf32> -> vector<8x384xf32>
    %59 = arith.addf %53, %58 : vector<8x384xf32>
    %c0_52 = arith.constant 0 : index
    %c0_53 = arith.constant 0 : index
    %c0_54 = arith.constant 0 : index
    %60 = vector.load %arg7[%c0_52, %c0_53, %c0_54] : memref<6x8x1xf32, #tpu.memory_space<vmem>>, vector<1x8x1xf32>
    %61 = vector.shape_cast %60 : vector<1x8x1xf32> to vector<8x1xf32>
    %62 = vector.broadcast %61 : vector<8x1xf32> to vector<8x384xf32>
    %63 = arith.addf %59, %62 : vector<8x384xf32>
    %cst_55 = arith.constant 0.000000e+00 : f32
    %64 = vector.broadcast %cst_55 : f32 to vector<8x384xf32>
    %65 = arith.maximumf %63, %64 : vector<8x384xf32>
    %66 = vector.broadcast %0 : vector<1x384xf32> to vector<8x384xf32>
    %67 = arith.mulf %65, %66 : vector<8x384xf32>
    %c0_56 = arith.constant 0 : index
    %c256 = arith.constant 256 : index
    %68 = vector.load %arg10[%c0_56, %c256] : memref<8x896xf32, #tpu.memory_space<vmem>>, vector<8x384xf32>
    tpu.vector_store %arg10[%c0_56, %c256], %67 {strides = array<i32>} : memref<8x896xf32, #tpu.memory_space<vmem>>, vector<8x384xf32>,
    %c0_57 = arith.constant 0 : index
    %c206 = arith.constant 206 : index
    %69 = vector.load %arg10[%c0_57, %c206] : memref<8x896xf32, #tpu.memory_space<vmem>>, vector<8x384xf32>
    %c0_58 = arith.constant 0 : index
    %c0_59 = arith.constant 0 : index
    %70 = vector.load %arg11[%c0_58, %c0_59] : memref<72x384xf32, #tpu.memory_space<vmem>>, vector<8x384xf32>
    tpu.vector_store %arg11[%c0_58, %c0_59], %69 {strides = array<i32>} : memref<72x384xf32, #tpu.memory_space<vmem>>, vector<8x384xf32>,
    %c0_60 = arith.constant 0 : index
    %c208 = arith.constant 208 : index
    %71 = vector.load %arg10[%c0_60, %c208] : memref<8x896xf32, #tpu.memory_space<vmem>>, vector<8x384xf32>
    %c8_61 = arith.constant 8 : index
    %c0_62 = arith.constant 0 : index
    %72 = vector.load %arg11[%c8_61, %c0_62] : memref<72x384xf32, #tpu.memory_space<vmem>>, vector<8x384xf32>
    tpu.vector_store %arg11[%c8_61, %c0_62], %71 {strides = array<i32>} : memref<72x384xf32, #tpu.memory_space<vmem>>, vector<8x384xf32>,
    %c0_63 = arith.constant 0 : index
    %c210 = arith.constant 210 : index
    %73 = vector.load %arg10[%c0_63, %c210] : memref<8x896xf32, #tpu.memory_space<vmem>>, vector<8x384xf32>
    %c16 = arith.constant 16 : index
    %c0_64 = arith.constant 0 : index
    %74 = vector.load %arg11[%c16, %c0_64] : memref<72x384xf32, #tpu.memory_space<vmem>>, vector<8x384xf32>
    tpu.vector_store %arg11[%c16, %c0_64], %73 {strides = array<i32>} : memref<72x384xf32, #tpu.memory_space<vmem>>, vector<8x384xf32>,
    %c0_65 = arith.constant 0 : index
    %c254 = arith.constant 254 : index
    %75 = vector.load %arg10[%c0_65, %c254] : memref<8x896xf32, #tpu.memory_space<vmem>>, vector<8x384xf32>
    %c24 = arith.constant 24 : index
    %c0_66 = arith.constant 0 : index
    %76 = vector.load %arg11[%c24, %c0_66] : memref<72x384xf32, #tpu.memory_space<vmem>>, vector<8x384xf32>
    tpu.vector_store %arg11[%c24, %c0_66], %75 {strides = array<i32>} : memref<72x384xf32, #tpu.memory_space<vmem>>, vector<8x384xf32>,
    %c0_67 = arith.constant 0 : index
    %c256_68 = arith.constant 256 : index
    %77 = vector.load %arg10[%c0_67, %c256_68] : memref<8x896xf32, #tpu.memory_space<vmem>>, vector<8x384xf32>
    %c32 = arith.constant 32 : index
    %c0_69 = arith.constant 0 : index
    %78 = vector.load %arg11[%c32, %c0_69] : memref<72x384xf32, #tpu.memory_space<vmem>>, vector<8x384xf32>
    tpu.vector_store %arg11[%c32, %c0_69], %77 {strides = array<i32>} : memref<72x384xf32, #tpu.memory_space<vmem>>, vector<8x384xf32>,
    %c0_70 = arith.constant 0 : index
    %c258 = arith.constant 258 : index
    %79 = vector.load %arg10[%c0_70, %c258] : memref<8x896xf32, #tpu.memory_space<vmem>>, vector<8x384xf32>
    %c40 = arith.constant 40 : index
    %c0_71 = arith.constant 0 : index
    %80 = vector.load %arg11[%c40, %c0_71] : memref<72x384xf32, #tpu.memory_space<vmem>>, vector<8x384xf32>
    tpu.vector_store %arg11[%c40, %c0_71], %79 {strides = array<i32>} : memref<72x384xf32, #tpu.memory_space<vmem>>, vector<8x384xf32>,
    %c0_72 = arith.constant 0 : index
    %c302 = arith.constant 302 : index
    %81 = vector.load %arg10[%c0_72, %c302] : memref<8x896xf32, #tpu.memory_space<vmem>>, vector<8x384xf32>
    %c48 = arith.constant 48 : index
    %c0_73 = arith.constant 0 : index
    %82 = vector.load %arg11[%c48, %c0_73] : memref<72x384xf32, #tpu.memory_space<vmem>>, vector<8x384xf32>
    tpu.vector_store %arg11[%c48, %c0_73], %81 {strides = array<i32>} : memref<72x384xf32, #tpu.memory_space<vmem>>, vector<8x384xf32>,
    %c0_74 = arith.constant 0 : index
    %c304 = arith.constant 304 : index
    %83 = vector.load %arg10[%c0_74, %c304] : memref<8x896xf32, #tpu.memory_space<vmem>>, vector<8x384xf32>
    %c56 = arith.constant 56 : index
    %c0_75 = arith.constant 0 : index
    %84 = vector.load %arg11[%c56, %c0_75] : memref<72x384xf32, #tpu.memory_space<vmem>>, vector<8x384xf32>
    tpu.vector_store %arg11[%c56, %c0_75], %83 {strides = array<i32>} : memref<72x384xf32, #tpu.memory_space<vmem>>, vector<8x384xf32>,
    %c0_76 = arith.constant 0 : index
    %c306 = arith.constant 306 : index
    %85 = vector.load %arg10[%c0_76, %c306] : memref<8x896xf32, #tpu.memory_space<vmem>>, vector<8x384xf32>
    %c64 = arith.constant 64 : index
    %c0_77 = arith.constant 0 : index
    %86 = vector.load %arg11[%c64, %c0_77] : memref<72x384xf32, #tpu.memory_space<vmem>>, vector<8x384xf32>
    tpu.vector_store %arg11[%c64, %c0_77], %85 {strides = array<i32>} : memref<72x384xf32, #tpu.memory_space<vmem>>, vector<8x384xf32>,
    %c0_78 = arith.constant 0 : index
    %c0_79 = arith.constant 0 : index
    %c0_80 = arith.constant 0 : index
    %87 = vector.load %arg4[%c0_78, %c0_79, %c0_80] : memref<3x8x72xf32, #tpu.memory_space<vmem>>, vector<1x8x72xf32>
    %88 = vector.shape_cast %87 : vector<1x8x72xf32> to vector<8x72xf32>
    %c0_81 = arith.constant 0 : index
    %c0_82 = arith.constant 0 : index
    %89 = vector.load %arg11[%c0_81, %c0_82] : memref<72x384xf32, #tpu.memory_space<vmem>>, vector<72x384xf32>
    %cst_83 = arith.constant dense<0.000000e+00> : vector<8x384xf32>
    %90 = tpu.matmul %88, %89, %cst_83 {dimension_numbers = #tpu.dot_dimension_numbers<[1], [0], [0], [1], [0, 0, 1, 1], [], []>} : vector<8x72xf32>, vector<72x384xf32>, vector<8x384xf32> -> vector<8x384xf32>
    %c1_84 = arith.constant 1 : index
    %c0_85 = arith.constant 0 : index
    %c0_86 = arith.constant 0 : index
    %91 = vector.load %arg7[%c1_84, %c0_85, %c0_86] : memref<6x8x1xf32, #tpu.memory_space<vmem>>, vector<1x8x1xf32>
    %92 = vector.shape_cast %91 : vector<1x8x1xf32> to vector<8x1xf32>
    %93 = vector.broadcast %92 : vector<8x1xf32> to vector<8x384xf32>
    %94 = arith.addf %90, %93 : vector<8x384xf32>
    %cst_87 = arith.constant 0.000000e+00 : f32
    %95 = vector.broadcast %cst_87 : f32 to vector<8x384xf32>
    %96 = arith.maximumf %94, %95 : vector<8x384xf32>
    %97 = vector.broadcast %0 : vector<1x384xf32> to vector<8x384xf32>
    %98 = arith.mulf %96, %97 : vector<8x384xf32>
    %99 = arith.addf %67, %98 : vector<8x384xf32>
    %c0_88 = arith.constant 0 : index
    %c256_89 = arith.constant 256 : index
    %100 = vector.load %arg10[%c0_88, %c256_89] : memref<8x896xf32, #tpu.memory_space<vmem>>, vector<8x384xf32>
    tpu.vector_store %arg10[%c0_88, %c256_89], %98 {strides = array<i32>} : memref<8x896xf32, #tpu.memory_space<vmem>>, vector<8x384xf32>,
    %c0_90 = arith.constant 0 : index
    %c156 = arith.constant 156 : index
    %101 = vector.load %arg10[%c0_90, %c156] : memref<8x896xf32, #tpu.memory_space<vmem>>, vector<8x384xf32>
    %c0_91 = arith.constant 0 : index
    %c0_92 = arith.constant 0 : index
    %102 = vector.load %arg11[%c0_91, %c0_92] : memref<72x384xf32, #tpu.memory_space<vmem>>, vector<8x384xf32>
    tpu.vector_store %arg11[%c0_91, %c0_92], %101 {strides = array<i32>} : memref<72x384xf32, #tpu.memory_space<vmem>>, vector<8x384xf32>,
    %c0_93 = arith.constant 0 : index
    %c160 = arith.constant 160 : index
    %103 = vector.load %arg10[%c0_93, %c160] : memref<8x896xf32, #tpu.memory_space<vmem>>, vector<8x384xf32>
    %c8_94 = arith.constant 8 : index
    %c0_95 = arith.constant 0 : index
    %104 = vector.load %arg11[%c8_94, %c0_95] : memref<72x384xf32, #tpu.memory_space<vmem>>, vector<8x384xf32>
    tpu.vector_store %arg11[%c8_94, %c0_95], %103 {strides = array<i32>} : memref<72x384xf32, #tpu.memory_space<vmem>>, vector<8x384xf32>,
    %c0_96 = arith.constant 0 : index
    %c164 = arith.constant 164 : index
    %105 = vector.load %arg10[%c0_96, %c164] : memref<8x896xf32, #tpu.memory_space<vmem>>, vector<8x384xf32>
    %c16_97 = arith.constant 16 : index
    %c0_98 = arith.constant 0 : index
    %106 = vector.load %arg11[%c16_97, %c0_98] : memref<72x384xf32, #tpu.memory_space<vmem>>, vector<8x384xf32>
    tpu.vector_store %arg11[%c16_97, %c0_98], %105 {strides = array<i32>} : memref<72x384xf32, #tpu.memory_space<vmem>>, vector<8x384xf32>,
    %c0_99 = arith.constant 0 : index
    %c252 = arith.constant 252 : index
    %107 = vector.load %arg10[%c0_99, %c252] : memref<8x896xf32, #tpu.memory_space<vmem>>, vector<8x384xf32>
    %c24_100 = arith.constant 24 : index
    %c0_101 = arith.constant 0 : index
    %108 = vector.load %arg11[%c24_100, %c0_101] : memref<72x384xf32, #tpu.memory_space<vmem>>, vector<8x384xf32>
    tpu.vector_store %arg11[%c24_100, %c0_101], %107 {strides = array<i32>} : memref<72x384xf32, #tpu.memory_space<vmem>>, vector<8x384xf32>,
    %c0_102 = arith.constant 0 : index
    %c256_103 = arith.constant 256 : index
    %109 = vector.load %arg10[%c0_102, %c256_103] : memref<8x896xf32, #tpu.memory_space<vmem>>, vector<8x384xf32>
    %c32_104 = arith.constant 32 : index
    %c0_105 = arith.constant 0 : index
    %110 = vector.load %arg11[%c32_104, %c0_105] : memref<72x384xf32, #tpu.memory_space<vmem>>, vector<8x384xf32>
    tpu.vector_store %arg11[%c32_104, %c0_105], %109 {strides = array<i32>} : memref<72x384xf32, #tpu.memory_space<vmem>>, vector<8x384xf32>,
    %c0_106 = arith.constant 0 : index
    %c260 = arith.constant 260 : index
    %111 = vector.load %arg10[%c0_106, %c260] : memref<8x896xf32, #tpu.memory_space<vmem>>, vector<8x384xf32>
    %c40_107 = arith.constant 40 : index
    %c0_108 = arith.constant 0 : index
    %112 = vector.load %arg11[%c40_107, %c0_108] : memref<72x384xf32, #tpu.memory_space<vmem>>, vector<8x384xf32>
    tpu.vector_store %arg11[%c40_107, %c0_108], %111 {strides = array<i32>} : memref<72x384xf32, #tpu.memory_space<vmem>>, vector<8x384xf32>,
    %c0_109 = arith.constant 0 : index
    %c348 = arith.constant 348 : index
    %113 = vector.load %arg10[%c0_109, %c348] : memref<8x896xf32, #tpu.memory_space<vmem>>, vector<8x384xf32>
    %c48_110 = arith.constant 48 : index
    %c0_111 = arith.constant 0 : index
    %114 = vector.load %arg11[%c48_110, %c0_111] : memref<72x384xf32, #tpu.memory_space<vmem>>, vector<8x384xf32>
    tpu.vector_store %arg11[%c48_110, %c0_111], %113 {strides = array<i32>} : memref<72x384xf32, #tpu.memory_space<vmem>>, vector<8x384xf32>,
    %c0_112 = arith.constant 0 : index
    %c352 = arith.constant 352 : index
    %115 = vector.load %arg10[%c0_112, %c352] : memref<8x896xf32, #tpu.memory_space<vmem>>, vector<8x384xf32>
    %c56_113 = arith.constant 56 : index
    %c0_114 = arith.constant 0 : index
    %116 = vector.load %arg11[%c56_113, %c0_114] : memref<72x384xf32, #tpu.memory_space<vmem>>, vector<8x384xf32>
    tpu.vector_store %arg11[%c56_113, %c0_114], %115 {strides = array<i32>} : memref<72x384xf32, #tpu.memory_space<vmem>>, vector<8x384xf32>,
    %c0_115 = arith.constant 0 : index
    %c356 = arith.constant 356 : index
    %117 = vector.load %arg10[%c0_115, %c356] : memref<8x896xf32, #tpu.memory_space<vmem>>, vector<8x384xf32>
    %c64_116 = arith.constant 64 : index
    %c0_117 = arith.constant 0 : index
    %118 = vector.load %arg11[%c64_116, %c0_117] : memref<72x384xf32, #tpu.memory_space<vmem>>, vector<8x384xf32>
    tpu.vector_store %arg11[%c64_116, %c0_117], %117 {strides = array<i32>} : memref<72x384xf32, #tpu.memory_space<vmem>>, vector<8x384xf32>,
    %c1_118 = arith.constant 1 : index
    %c0_119 = arith.constant 0 : index
    %c0_120 = arith.constant 0 : index
    %119 = vector.load %arg4[%c1_118, %c0_119, %c0_120] : memref<3x8x72xf32, #tpu.memory_space<vmem>>, vector<1x8x72xf32>
    %120 = vector.shape_cast %119 : vector<1x8x72xf32> to vector<8x72xf32>
    %c0_121 = arith.constant 0 : index
    %c0_122 = arith.constant 0 : index
    %121 = vector.load %arg11[%c0_121, %c0_122] : memref<72x384xf32, #tpu.memory_space<vmem>>, vector<72x384xf32>
    %cst_123 = arith.constant dense<0.000000e+00> : vector<8x384xf32>
    %122 = tpu.matmul %120, %121, %cst_123 {dimension_numbers = #tpu.dot_dimension_numbers<[1], [0], [0], [1], [0, 0, 1, 1], [], []>} : vector<8x72xf32>, vector<72x384xf32>, vector<8x384xf32> -> vector<8x384xf32>
    %c2_124 = arith.constant 2 : index
    %c0_125 = arith.constant 0 : index
    %c0_126 = arith.constant 0 : index
    %123 = vector.load %arg7[%c2_124, %c0_125, %c0_126] : memref<6x8x1xf32, #tpu.memory_space<vmem>>, vector<1x8x1xf32>
    %124 = vector.shape_cast %123 : vector<1x8x1xf32> to vector<8x1xf32>
    %125 = vector.broadcast %124 : vector<8x1xf32> to vector<8x384xf32>
    %126 = arith.addf %122, %125 : vector<8x384xf32>
    %cst_127 = arith.constant 0.000000e+00 : f32
    %127 = vector.broadcast %cst_127 : f32 to vector<8x384xf32>
    %128 = arith.maximumf %126, %127 : vector<8x384xf32>
    %129 = vector.broadcast %0 : vector<1x384xf32> to vector<8x384xf32>
    %130 = arith.mulf %128, %129 : vector<8x384xf32>
    %131 = arith.addf %99, %130 : vector<8x384xf32>
    %c0_128 = arith.constant 0 : index
    %c256_129 = arith.constant 256 : index
    %132 = vector.load %arg10[%c0_128, %c256_129] : memref<8x896xf32, #tpu.memory_space<vmem>>, vector<8x384xf32>
    tpu.vector_store %arg10[%c0_128, %c256_129], %130 {strides = array<i32>} : memref<8x896xf32, #tpu.memory_space<vmem>>, vector<8x384xf32>,
    %c0_130 = arith.constant 0 : index
    %c56_131 = arith.constant 56 : index
    %133 = vector.load %arg10[%c0_130, %c56_131] : memref<8x896xf32, #tpu.memory_space<vmem>>, vector<8x384xf32>
    %c0_132 = arith.constant 0 : index
    %c0_133 = arith.constant 0 : index
    %134 = vector.load %arg11[%c0_132, %c0_133] : memref<72x384xf32, #tpu.memory_space<vmem>>, vector<8x384xf32>
    tpu.vector_store %arg11[%c0_132, %c0_133], %133 {strides = array<i32>} : memref<72x384xf32, #tpu.memory_space<vmem>>, vector<8x384xf32>,
    %c0_134 = arith.constant 0 : index
    %c64_135 = arith.constant 64 : index
    %135 = vector.load %arg10[%c0_134, %c64_135] : memref<8x896xf32, #tpu.memory_space<vmem>>, vector<8x384xf32>
    %c8_136 = arith.constant 8 : index
    %c0_137 = arith.constant 0 : index
    %136 = vector.load %arg11[%c8_136, %c0_137] : memref<72x384xf32, #tpu.memory_space<vmem>>, vector<8x384xf32>
    tpu.vector_store %arg11[%c8_136, %c0_137], %135 {strides = array<i32>} : memref<72x384xf32, #tpu.memory_space<vmem>>, vector<8x384xf32>,
    %c0_138 = arith.constant 0 : index
    %c72 = arith.constant 72 : index
    %137 = vector.load %arg10[%c0_138, %c72] : memref<8x896xf32, #tpu.memory_space<vmem>>, vector<8x384xf32>
    %c16_139 = arith.constant 16 : index
    %c0_140 = arith.constant 0 : index
    %138 = vector.load %arg11[%c16_139, %c0_140] : memref<72x384xf32, #tpu.memory_space<vmem>>, vector<8x384xf32>
    tpu.vector_store %arg11[%c16_139, %c0_140], %137 {strides = array<i32>} : memref<72x384xf32, #tpu.memory_space<vmem>>, vector<8x384xf32>,
    %c0_141 = arith.constant 0 : index
    %c248 = arith.constant 248 : index
    %139 = vector.load %arg10[%c0_141, %c248] : memref<8x896xf32, #tpu.memory_space<vmem>>, vector<8x384xf32>
    %c24_142 = arith.constant 24 : index
    %c0_143 = arith.constant 0 : index
    %140 = vector.load %arg11[%c24_142, %c0_143] : memref<72x384xf32, #tpu.memory_space<vmem>>, vector<8x384xf32>
    tpu.vector_store %arg11[%c24_142, %c0_143], %139 {strides = array<i32>} : memref<72x384xf32, #tpu.memory_space<vmem>>, vector<8x384xf32>,
    %c0_144 = arith.constant 0 : index
    %c256_145 = arith.constant 256 : index
    %141 = vector.load %arg10[%c0_144, %c256_145] : memref<8x896xf32, #tpu.memory_space<vmem>>, vector<8x384xf32>
    %c32_146 = arith.constant 32 : index
    %c0_147 = arith.constant 0 : index
    %142 = vector.load %arg11[%c32_146, %c0_147] : memref<72x384xf32, #tpu.memory_space<vmem>>, vector<8x384xf32>
    tpu.vector_store %arg11[%c32_146, %c0_147], %141 {strides = array<i32>} : memref<72x384xf32, #tpu.memory_space<vmem>>, vector<8x384xf32>,
    %c0_148 = arith.constant 0 : index
    %c264 = arith.constant 264 : index
    %143 = vector.load %arg10[%c0_148, %c264] : memref<8x896xf32, #tpu.memory_space<vmem>>, vector<8x384xf32>
    %c40_149 = arith.constant 40 : index
    %c0_150 = arith.constant 0 : index
    %144 = vector.load %arg11[%c40_149, %c0_150] : memref<72x384xf32, #tpu.memory_space<vmem>>, vector<8x384xf32>
    tpu.vector_store %arg11[%c40_149, %c0_150], %143 {strides = array<i32>} : memref<72x384xf32, #tpu.memory_space<vmem>>, vector<8x384xf32>,
    %c0_151 = arith.constant 0 : index
    %c440 = arith.constant 440 : index
    %145 = vector.load %arg10[%c0_151, %c440] : memref<8x896xf32, #tpu.memory_space<vmem>>, vector<8x384xf32>
    %c48_152 = arith.constant 48 : index
    %c0_153 = arith.constant 0 : index
    %146 = vector.load %arg11[%c48_152, %c0_153] : memref<72x384xf32, #tpu.memory_space<vmem>>, vector<8x384xf32>
    tpu.vector_store %arg11[%c48_152, %c0_153], %145 {strides = array<i32>} : memref<72x384xf32, #tpu.memory_space<vmem>>, vector<8x384xf32>,
    %c0_154 = arith.constant 0 : index
    %c448 = arith.constant 448 : index
    %147 = vector.load %arg10[%c0_154, %c448] : memref<8x896xf32, #tpu.memory_space<vmem>>, vector<8x384xf32>
    %c56_155 = arith.constant 56 : index
    %c0_156 = arith.constant 0 : index
    %148 = vector.load %arg11[%c56_155, %c0_156] : memref<72x384xf32, #tpu.memory_space<vmem>>, vector<8x384xf32>
    tpu.vector_store %arg11[%c56_155, %c0_156], %147 {strides = array<i32>} : memref<72x384xf32, #tpu.memory_space<vmem>>, vector<8x384xf32>,
    %c0_157 = arith.constant 0 : index
    %c456 = arith.constant 456 : index
    %149 = vector.load %arg10[%c0_157, %c456] : memref<8x896xf32, #tpu.memory_space<vmem>>, vector<8x384xf32>
    %c64_158 = arith.constant 64 : index
    %c0_159 = arith.constant 0 : index
    %150 = vector.load %arg11[%c64_158, %c0_159] : memref<72x384xf32, #tpu.memory_space<vmem>>, vector<8x384xf32>
    tpu.vector_store %arg11[%c64_158, %c0_159], %149 {strides = array<i32>} : memref<72x384xf32, #tpu.memory_space<vmem>>, vector<8x384xf32>,
    %c2_160 = arith.constant 2 : index
    %c0_161 = arith.constant 0 : index
    %c0_162 = arith.constant 0 : index
    %151 = vector.load %arg4[%c2_160, %c0_161, %c0_162] : memref<3x8x72xf32, #tpu.memory_space<vmem>>, vector<1x8x72xf32>
    %152 = vector.shape_cast %151 : vector<1x8x72xf32> to vector<8x72xf32>
    %c0_163 = arith.constant 0 : index
    %c0_164 = arith.constant 0 : index
    %153 = vector.load %arg11[%c0_163, %c0_164] : memref<72x384xf32, #tpu.memory_space<vmem>>, vector<72x384xf32>
    %cst_165 = arith.constant dense<0.000000e+00> : vector<8x384xf32>
    %154 = tpu.matmul %152, %153, %cst_165 {dimension_numbers = #tpu.dot_dimension_numbers<[1], [0], [0], [1], [0, 0, 1, 1], [], []>} : vector<8x72xf32>, vector<72x384xf32>, vector<8x384xf32> -> vector<8x384xf32>
    %c3_166 = arith.constant 3 : index
    %c0_167 = arith.constant 0 : index
    %c0_168 = arith.constant 0 : index
    %155 = vector.load %arg7[%c3_166, %c0_167, %c0_168] : memref<6x8x1xf32, #tpu.memory_space<vmem>>, vector<1x8x1xf32>
    %156 = vector.shape_cast %155 : vector<1x8x1xf32> to vector<8x1xf32>
    %157 = vector.broadcast %156 : vector<8x1xf32> to vector<8x384xf32>
    %158 = arith.addf %154, %157 : vector<8x384xf32>
    %cst_169 = arith.constant 0.000000e+00 : f32
    %159 = vector.broadcast %cst_169 : f32 to vector<8x384xf32>
    %160 = arith.maximumf %158, %159 : vector<8x384xf32>
    %161 = vector.broadcast %0 : vector<1x384xf32> to vector<8x384xf32>
    %162 = arith.mulf %160, %161 : vector<8x384xf32>
    %163 = arith.addf %131, %162 : vector<8x384xf32>
    %c0_170 = arith.constant 0 : index
    %c0_171 = arith.constant 0 : index
    %c0_172 = arith.constant 0 : index
    %164 = vector.load %arg5[%c0_170, %c0_171, %c0_172] : memref<2x8x8xf32, #tpu.memory_space<vmem>>, vector<1x8x8xf32>
    %165 = vector.shape_cast %164 : vector<1x8x8xf32> to vector<8x8xf32>
    %cst_173 = arith.constant dense<0.000000e+00> : vector<8x384xf32>
    %166 = tpu.matmul %165, %162, %cst_173 {dimension_numbers = #tpu.dot_dimension_numbers<[1], [0], [0], [1], [0, 0, 1, 1], [], []>} : vector<8x8xf32>, vector<8x384xf32>, vector<8x384xf32> -> vector<8x384xf32>
    %c4_174 = arith.constant 4 : index
    %c0_175 = arith.constant 0 : index
    %c0_176 = arith.constant 0 : index
    %167 = vector.load %arg7[%c4_174, %c0_175, %c0_176] : memref<6x8x1xf32, #tpu.memory_space<vmem>>, vector<1x8x1xf32>
    %168 = vector.shape_cast %167 : vector<1x8x1xf32> to vector<8x1xf32>
    %169 = vector.broadcast %168 : vector<8x1xf32> to vector<8x384xf32>
    %170 = arith.addf %166, %169 : vector<8x384xf32>
    %cst_177 = arith.constant 0.000000e+00 : f32
    %171 = vector.broadcast %cst_177 : f32 to vector<8x384xf32>
    %172 = arith.maximumf %170, %171 : vector<8x384xf32>
    %173 = vector.broadcast %0 : vector<1x384xf32> to vector<8x384xf32>
    %174 = arith.mulf %172, %173 : vector<8x384xf32>
    %175 = arith.addf %163, %174 : vector<8x384xf32>
    %c1_178 = arith.constant 1 : index
    %c0_179 = arith.constant 0 : index
    %c0_180 = arith.constant 0 : index
    %176 = vector.load %arg5[%c1_178, %c0_179, %c0_180] : memref<2x8x8xf32, #tpu.memory_space<vmem>>, vector<1x8x8xf32>
    %177 = vector.shape_cast %176 : vector<1x8x8xf32> to vector<8x8xf32>
    %cst_181 = arith.constant dense<0.000000e+00> : vector<8x384xf32>
    %178 = tpu.matmul %177, %174, %cst_181 {dimension_numbers = #tpu.dot_dimension_numbers<[1], [0], [0], [1], [0, 0, 1, 1], [], []>} : vector<8x8xf32>, vector<8x384xf32>, vector<8x384xf32> -> vector<8x384xf32>
    %c5_182 = arith.constant 5 : index
    %c0_183 = arith.constant 0 : index
    %c0_184 = arith.constant 0 : index
    %179 = vector.load %arg7[%c5_182, %c0_183, %c0_184] : memref<6x8x1xf32, #tpu.memory_space<vmem>>, vector<1x8x1xf32>
    %180 = vector.shape_cast %179 : vector<1x8x1xf32> to vector<8x1xf32>
    %181 = vector.broadcast %180 : vector<8x1xf32> to vector<8x384xf32>
    %182 = arith.addf %178, %181 : vector<8x384xf32>
    %cst_185 = arith.constant 0.000000e+00 : f32
    %183 = vector.broadcast %cst_185 : f32 to vector<8x384xf32>
    %184 = arith.maximumf %182, %183 : vector<8x384xf32>
    %185 = vector.broadcast %0 : vector<1x384xf32> to vector<8x384xf32>
    %186 = arith.mulf %184, %185 : vector<8x384xf32>
    %187 = arith.addf %175, %186 : vector<8x384xf32>
    %c0_186 = arith.constant 0 : index
    %c256_187 = arith.constant 256 : index
    %188 = vector.load %arg10[%c0_186, %c256_187] : memref<8x896xf32, #tpu.memory_space<vmem>>, vector<8x384xf32>
    tpu.vector_store %arg10[%c0_186, %c256_187], %187 {strides = array<i32>} : memref<8x896xf32, #tpu.memory_space<vmem>>, vector<8x384xf32>,
    %c0_188 = arith.constant 0 : index
    %c231 = arith.constant 231 : index
    %189 = vector.load %arg10[%c0_188, %c231] : memref<8x896xf32, #tpu.memory_space<vmem>>, vector<8x384xf32>
    %c0_189 = arith.constant 0 : index
    %c0_190 = arith.constant 0 : index
    %190 = vector.load %arg11[%c0_189, %c0_190] : memref<72x384xf32, #tpu.memory_space<vmem>>, vector<8x384xf32>
    tpu.vector_store %arg11[%c0_189, %c0_190], %189 {strides = array<i32>} : memref<72x384xf32, #tpu.memory_space<vmem>>, vector<8x384xf32>,
    %c0_191 = arith.constant 0 : index
    %c232 = arith.constant 232 : index
    %191 = vector.load %arg10[%c0_191, %c232] : memref<8x896xf32, #tpu.memory_space<vmem>>, vector<8x384xf32>
    %c8_192 = arith.constant 8 : index
    %c0_193 = arith.constant 0 : index
    %192 = vector.load %arg11[%c8_192, %c0_193] : memref<72x384xf32, #tpu.memory_space<vmem>>, vector<8x384xf32>
    tpu.vector_store %arg11[%c8_192, %c0_193], %191 {strides = array<i32>} : memref<72x384xf32, #tpu.memory_space<vmem>>, vector<8x384xf32>,
    %c0_194 = arith.constant 0 : index
    %c233 = arith.constant 233 : index
    %193 = vector.load %arg10[%c0_194, %c233] : memref<8x896xf32, #tpu.memory_space<vmem>>, vector<8x384xf32>
    %c16_195 = arith.constant 16 : index
    %c0_196 = arith.constant 0 : index
    %194 = vector.load %arg11[%c16_195, %c0_196] : memref<72x384xf32, #tpu.memory_space<vmem>>, vector<8x384xf32>
    tpu.vector_store %arg11[%c16_195, %c0_196], %193 {strides = array<i32>} : memref<72x384xf32, #tpu.memory_space<vmem>>, vector<8x384xf32>,
    %c0_197 = arith.constant 0 : index
    %c255 = arith.constant 255 : index
    %195 = vector.load %arg10[%c0_197, %c255] : memref<8x896xf32, #tpu.memory_space<vmem>>, vector<8x384xf32>
    %c24_198 = arith.constant 24 : index
    %c0_199 = arith.constant 0 : index
    %196 = vector.load %arg11[%c24_198, %c0_199] : memref<72x384xf32, #tpu.memory_space<vmem>>, vector<8x384xf32>
    tpu.vector_store %arg11[%c24_198, %c0_199], %195 {strides = array<i32>} : memref<72x384xf32, #tpu.memory_space<vmem>>, vector<8x384xf32>,
    %c0_200 = arith.constant 0 : index
    %c256_201 = arith.constant 256 : index
    %197 = vector.load %arg10[%c0_200, %c256_201] : memref<8x896xf32, #tpu.memory_space<vmem>>, vector<8x384xf32>
    %c32_202 = arith.constant 32 : index
    %c0_203 = arith.constant 0 : index
    %198 = vector.load %arg11[%c32_202, %c0_203] : memref<72x384xf32, #tpu.memory_space<vmem>>, vector<8x384xf32>
    tpu.vector_store %arg11[%c32_202, %c0_203], %197 {strides = array<i32>} : memref<72x384xf32, #tpu.memory_space<vmem>>, vector<8x384xf32>,
    %c0_204 = arith.constant 0 : index
    %c257 = arith.constant 257 : index
    %199 = vector.load %arg10[%c0_204, %c257] : memref<8x896xf32, #tpu.memory_space<vmem>>, vector<8x384xf32>
    %c40_205 = arith.constant 40 : index
    %c0_206 = arith.constant 0 : index
    %200 = vector.load %arg11[%c40_205, %c0_206] : memref<72x384xf32, #tpu.memory_space<vmem>>, vector<8x384xf32>
    tpu.vector_store %arg11[%c40_205, %c0_206], %199 {strides = array<i32>} : memref<72x384xf32, #tpu.memory_space<vmem>>, vector<8x384xf32>,
    %c0_207 = arith.constant 0 : index
    %c279 = arith.constant 279 : index
    %201 = vector.load %arg10[%c0_207, %c279] : memref<8x896xf32, #tpu.memory_space<vmem>>, vector<8x384xf32>
    %c48_208 = arith.constant 48 : index
    %c0_209 = arith.constant 0 : index
    %202 = vector.load %arg11[%c48_208, %c0_209] : memref<72x384xf32, #tpu.memory_space<vmem>>, vector<8x384xf32>
    tpu.vector_store %arg11[%c48_208, %c0_209], %201 {strides = array<i32>} : memref<72x384xf32, #tpu.memory_space<vmem>>, vector<8x384xf32>,
    %c0_210 = arith.constant 0 : index
    %c280 = arith.constant 280 : index
    %203 = vector.load %arg10[%c0_210, %c280] : memref<8x896xf32, #tpu.memory_space<vmem>>, vector<8x384xf32>
    %c56_211 = arith.constant 56 : index
    %c0_212 = arith.constant 0 : index
    %204 = vector.load %arg11[%c56_211, %c0_212] : memref<72x384xf32, #tpu.memory_space<vmem>>, vector<8x384xf32>
    tpu.vector_store %arg11[%c56_211, %c0_212], %203 {strides = array<i32>} : memref<72x384xf32, #tpu.memory_space<vmem>>, vector<8x384xf32>,
    %c0_213 = arith.constant 0 : index
    %c281 = arith.constant 281 : index
    %205 = vector.load %arg10[%c0_213, %c281] : memref<8x896xf32, #tpu.memory_space<vmem>>, vector<8x384xf32>
    %c64_214 = arith.constant 64 : index
    %c0_215 = arith.constant 0 : index
    %206 = vector.load %arg11[%c64_214, %c0_215] : memref<72x384xf32, #tpu.memory_space<vmem>>, vector<8x384xf32>
    tpu.vector_store %arg11[%c64_214, %c0_215], %205 {strides = array<i32>} : memref<72x384xf32, #tpu.memory_space<vmem>>, vector<8x384xf32>,
    %c0_216 = arith.constant 0 : index
    %c0_217 = arith.constant 0 : index
    %207 = vector.load %arg6[%c0_216, %c0_217] : memref<64x72xf32, #tpu.memory_space<vmem>>, vector<64x72xf32>
    %c0_218 = arith.constant 0 : index
    %c0_219 = arith.constant 0 : index
    %208 = vector.load %arg11[%c0_218, %c0_219] : memref<72x384xf32, #tpu.memory_space<vmem>>, vector<72x384xf32>
    %cst_220 = arith.constant dense<0.000000e+00> : vector<64x384xf32>
    %209 = tpu.matmul %207, %208, %cst_220 {dimension_numbers = #tpu.dot_dimension_numbers<[1], [0], [0], [1], [0, 0, 1, 1], [], []>} : vector<64x72xf32>, vector<72x384xf32>, vector<64x384xf32> -> vector<64x384xf32>
    %c0_221 = arith.constant 0 : index
    %c0_222 = arith.constant 0 : index
    %210 = vector.load %arg8[%c0_221, %c0_222] : memref<64x1xf32, #tpu.memory_space<vmem>>, vector<64x1xf32>
    %211 = vector.broadcast %210 : vector<64x1xf32> to vector<64x384xf32>
    %212 = arith.addf %209, %211 : vector<64x384xf32>
    %c0_223 = arith.constant 0 : index
    %c0_224 = arith.constant 0 : index
    %c128_225 = arith.constant 128 : index
    %213 = vector.load %arg1[%c0_223, %c0_224, %c128_225] : memref<1x64x640xf32, #tpu.memory_space<vmem>>, vector<1x64x384xf32>
    %214 = vector.shape_cast %213 : vector<1x64x384xf32> to vector<64x384xf32>
    %215 = arith.addf %212, %214 : vector<64x384xf32>
    %c0_226 = arith.constant 0 : index
    %c0_227 = arith.constant 0 : index
    %c0_228 = arith.constant 0 : index
    %216 = vector.load %arg9[%c0_226, %c0_227, %c0_228] : memref<1x64x384xf32, #tpu.memory_space<vmem>>, vector<1x64x384xf32>
    %217 = vector.shape_cast %216 : vector<1x64x384xf32> to vector<64x384xf32>
    %218 = vector.shape_cast %215 : vector<64x384xf32> to vector<1x64x384xf32>
    tpu.vector_store %arg9[%c0_226, %c0_227, %c0_228], %218 {strides = array<i32>} : memref<1x64x384xf32, #tpu.memory_space<vmem>>, vector<1x64x384xf32>,
    return
  }
  func.func @transform_0(%arg0: i32) -> (i32, i32, i32) {
    %c0_i32 = arith.constant 0 : i32
    %c0_i32_0 = arith.constant 0 : i32
    %c0_i32_1 = arith.constant 0 : i32
    return %arg0, %c0_i32, %c0_i32_0 : i32, i32, i32
  }
  func.func @transform_1(%arg0: i32) -> (i32, i32) {
    %c0_i32 = arith.constant 0 : i32
    %c0_i32_0 = arith.constant 0 : i32
    %c0_i32_1 = arith.constant 0 : i32
    return %c0_i32, %c0_i32_0 : i32, i32
  }
  func.func @transform_2(%arg0: i32) -> (i32, i32, i32) {
    %c0_i32 = arith.constant 0 : i32
    %c0_i32_0 = arith.constant 0 : i32
    %c0_i32_1 = arith.constant 0 : i32
    %c0_i32_2 = arith.constant 0 : i32
    return %c0_i32, %c0_i32_0, %c0_i32_1 : i32, i32, i32
  }
  func.func @transform_3(%arg0: i32) -> (i32, i32, i32) {
    %c0_i32 = arith.constant 0 : i32
    %c0_i32_0 = arith.constant 0 : i32
    %c0_i32_1 = arith.constant 0 : i32
    %c0_i32_2 = arith.constant 0 : i32
    return %c0_i32, %c0_i32_0, %c0_i32_1 : i32, i32, i32
  }
  func.func @transform_4(%arg0: i32) -> (i32, i32, i32) {
    %c0_i32 = arith.constant 0 : i32
    %c0_i32_0 = arith.constant 0 : i32
    %c0_i32_1 = arith.constant 0 : i32
    %c0_i32_2 = arith.constant 0 : i32
    return %c0_i32, %c0_i32_0, %c0_i32_1 : i32, i32, i32
  }
  func.func @transform_5(%arg0: i32) -> (i32, i32) {
    %c0_i32 = arith.constant 0 : i32
    %c0_i32_0 = arith.constant 0 : i32
    %c0_i32_1 = arith.constant 0 : i32
    return %c0_i32, %c0_i32_0 : i32, i32
  }
  func.func @transform_6(%arg0: i32) -> (i32, i32, i32) {
    %c0_i32 = arith.constant 0 : i32
    %c0_i32_0 = arith.constant 0 : i32
    %c0_i32_1 = arith.constant 0 : i32
    %c0_i32_2 = arith.constant 0 : i32
    return %c0_i32, %c0_i32_0, %c0_i32_1 : i32, i32, i32
  }
  func.func @transform_7(%arg0: i32) -> (i32, i32) {
    %c0_i32 = arith.constant 0 : i32
    %c0_i32_0 = arith.constant 0 : i32
    %c0_i32_1 = arith.constant 0 : i32
    return %c0_i32, %c0_i32_0 : i32, i32
  }
  func.func @transform_8(%arg0: i32) -> (i32, i32, i32) {
    %c0_i32 = arith.constant 0 : i32
    %c0_i32_0 = arith.constant 0 : i32
    %c0_i32_1 = arith.constant 0 : i32
    return %arg0, %c0_i32, %c0_i32_0 : i32, i32, i32
  }
}

</mosaic_0001>

<llo_original>
// kernel: rrm_forward.1
$region0: #{rrm_forward.1}
  #allocation0 [shape = 'u32[]', space=smem, size = 0x4, offset = 0x4, fixed_abs, tag = 'smem constant byte address 0x4 - core index']
  #allocation1 [shape = 'u32[144,128]{1,0:T(1,128)}', space=vmem, size = 0x12000, scoped, tag = 'internal scratch']
  #allocation2 [shape = 'f32[8,896]{1,0:T(8,128)}', space=vmem, size = 0x7000, scoped, tag = 'scratch operand']
  #allocation3 [shape = 'f32[72,384]{1,0:T(8,128)}', space=vmem, size = 0x1b000, scoped, tag = 'scratch operand']
  %s0 = inlined_call_operand.vmem [shape: f32[2,64,640], index: 0, kind: input, shape index: {}]
  %s1 = inlined_call_operand.vmem [shape: f32[1,384], index: 1, kind: input, shape index: {}]
  %s2 = inlined_call_operand.vmem [shape: f32[9,8,64], index: 2, kind: input, shape index: {}]
  %s3 = inlined_call_operand.vmem [shape: f32[3,8,72], index: 3, kind: input, shape index: {}]
  %s4 = inlined_call_operand.vmem [shape: f32[2,8,8], index: 4, kind: input, shape index: {}]
  %s5 = inlined_call_operand.vmem [shape: f32[64,72], index: 5, kind: input, shape index: {}]
  %s6 = inlined_call_operand.vmem [shape: f32[6,8,1], index: 6, kind: input, shape index: {}]
  %s7 = inlined_call_operand.vmem [shape: f32[64,1], index: 7, kind: input, shape index: {}]
  %s8 = inlined_call_operand.vmem [shape: f32[2,64,384], index: 8, kind: output, shape index: {}]
  %s9 = sld [smem:[#allocation0]]
  $region65: #{rrm_forward.1} parent=0
    _
  %s11 = ssub.s32 1, %s9
  %s12 = scalar_select 0, %s11, %s9
  loop: start=0, step=1, limit=4
  $region2: #{rrm_forward.1} parent=0 // loop_pre_header
    _
  $region3: #{rrm_forward.1} parent=0 // loop_header
    %s14 = sphi 0, %s18
    %p15 = scmp.ge.s32.totalorder %s14, 4
    %s24 = sphi 0, %s26
    %s27 = sphi 0, %s24
    %s28 = sphi 0, %s27
    %s44 = sphi 0, %s28
    %s48 = sphi 0, %s48
    %s50 = sphi 0, %s48
    %s51 = sphi 0, %s50
    %s65 = sphi 0, %s51
    %s69 = sphi 0, %s69
    %s71 = sphi 0, %s69
    %s72 = sphi 0, %s71
    %s86 = sphi 0, %s72
    %s90 = sphi 0, %s90
    %s92 = sphi 0, %s90
    %s93 = sphi 0, %s92
    %s107 = sphi 0, %s93
    %s111 = sphi 0, %s111
    %s113 = sphi 0, %s111
    %s114 = sphi 0, %s113
    %s128 = sphi 0, %s114
    %s132 = sphi 0, %s132
    %s134 = sphi 0, %s132
    %s135 = sphi 0, %s134
    %s149 = sphi 0, %s135
    %s153 = sphi 0, %s153
    %s155 = sphi 0, %s153
    %s156 = sphi 0, %s155
    %s170 = sphi 0, %s156
    %s174 = sphi 0, %s174
    %s176 = sphi 0, %s174
    %s177 = sphi 0, %s176
    %s191 = sphi 0, %s177
    %s197 = sphi 0, %s199
    %s200 = sphi 0, %s197
    %s201 = sphi 0, %s200
    %s217 = sphi 0, %s201
  $region4: #{rrm_forward.1} parent=0 // loop_header_branch
    %17 = sbr.rel (%p15) target = $region8
  $region5: #{rrm_forward.1} parent=0 // loop_body
    %s19 = ssub.s32 %s14, 1
    %s20 = ssub.s32 %s14, 2
    %s21 = sadd.s32 %s14, 1
    %s22 = ssub.s32 %s14, %s21
    %p23 = scmp.eq.s32.totalorder %s22, 0
    %s25 = sadd.s32 %s24, 1
    %s26 = scalar_select %p23, %s24, %s25
    %p29 = pneg %p23
    %p30 = scmp.eq.s32.totalorder %s14, 1
    %p31 = por %p29, %p30
    %p32 = scmp.ne.s32.totalorder %s24, %s27
    %p33 = scmp.eq.s32.totalorder %s14, 0
    %p34 = por %p32, %p33
    %p35 = scmp.ne.s32.totalorder %s24, %s27
    %p36 = scmp.eq.s32.totalorder %s19, 1
    %p37 = por %p35, %p36
    %p38 = scmp.ne.s32.totalorder %s27, %s28
    %p39 = scmp.eq.s32.totalorder %s19, 0
    %p40 = por %p38, %p39
    %p41 = scmp.ne.s32.totalorder %s27, %s28
    %p42 = scmp.eq.s32.totalorder %s20, 1
    %p43 = por %p41, %p42
    %p45 = scmp.ne.s32.totalorder %s28, %s44
    %p46 = scmp.eq.s32.totalorder %s20, 0
    %p47 = por %p45, %p46
    %s49 = sadd.s32 %s48, 1
    %p52 = scmp.eq.s32.totalorder %s14, 1
    %p53 = scmp.ne.s32.totalorder %s48, %s50
    %p54 = scmp.eq.s32.totalorder %s14, 0
    %p55 = por %p53, %p54
    %p56 = scmp.ne.s32.totalorder %s48, %s50
    %p57 = scmp.eq.s32.totalorder %s19, 1
    %p58 = por %p56, %p57
    %p59 = scmp.ne.s32.totalorder %s50, %s51
    %p60 = scmp.eq.s32.totalorder %s19, 0
    %p61 = por %p59, %p60
    %p62 = scmp.ne.s32.totalorder %s50, %s51
    %p63 = scmp.eq.s32.totalorder %s20, 1
    %p64 = por %p62, %p63
    %p66 = scmp.ne.s32.totalorder %s51, %s65
    %p67 = scmp.eq.s32.totalorder %s20, 0
    %p68 = por %p66, %p67
    %s70 = sadd.s32 %s69, 1
    %p73 = scmp.eq.s32.totalorder %s14, 1
    %p74 = scmp.ne.s32.totalorder %s69, %s71
    %p75 = scmp.eq.s32.totalorder %s14, 0
    %p76 = por %p74, %p75
    %p77 = scmp.ne.s32.totalorder %s69, %s71
    %p78 = scmp.eq.s32.totalorder %s19, 1
    %p79 = por %p77, %p78
    %p80 = scmp.ne.s32.totalorder %s71, %s72
    %p81 = scmp.eq.s32.totalorder %s19, 0
    %p82 = por %p80, %p81
    %p83 = scmp.ne.s32.totalorder %s71, %s72
    %p84 = scmp.eq.s32.totalorder %s20, 1
    %p85 = por %p83, %p84
    %p87 = scmp.ne.s32.totalorder %s72, %s86
    %p88 = scmp.eq.s32.totalorder %s20, 0
    %p89 = por %p87, %p88
    %s91 = sadd.s32 %s90, 1
    %p94 = scmp.eq.s32.totalorder %s14, 1
    %p95 = scmp.ne.s32.totalorder %s90, %s92
    %p96 = scmp.eq.s32.totalorder %s14, 0
    %p97 = por %p95, %p96
    %p98 = scmp.ne.s32.totalorder %s90, %s92
    %p99 = scmp.eq.s32.totalorder %s19, 1
    %p100 = por %p98, %p99
    %p101 = scmp.ne.s32.totalorder %s92, %s93
    %p102 = scmp.eq.s32.totalorder %s19, 0
    %p103 = por %p101, %p102
    %p104 = scmp.ne.s32.totalorder %s92, %s93
    %p105 = scmp.eq.s32.totalorder %s20, 1
    %p106 = por %p104, %p105
    %p108 = scmp.ne.s32.totalorder %s93, %s107
    %p109 = scmp.eq.s32.totalorder %s20, 0
    %p110 = por %p108, %p109
    %s112 = sadd.s32 %s111, 1
    %p115 = scmp.eq.s32.totalorder %s14, 1
    %p116 = scmp.ne.s32.totalorder %s111, %s113
    %p117 = scmp.eq.s32.totalorder %s14, 0
    %p118 = por %p116, %p117
    %p119 = scmp.ne.s32.totalorder %s111, %s113
    %p120 = scmp.eq.s32.totalorder %s19, 1
    %p121 = por %p119, %p120
    %p122 = scmp.ne.s32.totalorder %s113, %s114
    %p123 = scmp.eq.s32.totalorder %s19, 0
    %p124 = por %p122, %p123
    %p125 = scmp.ne.s32.totalorder %s113, %s114
    %p126 = scmp.eq.s32.totalorder %s20, 1
    %p127 = por %p125, %p126
    %p129 = scmp.ne.s32.totalorder %s114, %s128
    %p130 = scmp.eq.s32.totalorder %s20, 0
    %p131 = por %p129, %p130
    %s133 = sadd.s32 %s132, 1
    %p136 = scmp.eq.s32.totalorder %s14, 1
    %p137 = scmp.ne.s32.totalorder %s132, %s134
    %p138 = scmp.eq.s32.totalorder %s14, 0
    %p139 = por %p137, %p138
    %p140 = scmp.ne.s32.totalorder %s132, %s134
    %p141 = scmp.eq.s32.totalorder %s19, 1
    %p142 = por %p140, %p141
    %p143 = scmp.ne.s32.totalorder %s134, %s135
    %p144 = scmp.eq.s32.totalorder %s19, 0
    %p145 = por %p143, %p144
    %p146 = scmp.ne.s32.totalorder %s134, %s135
    %p147 = scmp.eq.s32.totalorder %s20, 1
    %p148 = por %p146, %p147
    %p150 = scmp.ne.s32.totalorder %s135, %s149
    %p151 = scmp.eq.s32.totalorder %s20, 0
    %p152 = por %p150, %p151
    %s154 = sadd.s32 %s153, 1
    %p157 = scmp.eq.s32.totalorder %s14, 1
    %p158 = scmp.ne.s32.totalorder %s153, %s155
    %p159 = scmp.eq.s32.totalorder %s14, 0
    %p160 = por %p158, %p159
    %p161 = scmp.ne.s32.totalorder %s153, %s155
    %p162 = scmp.eq.s32.totalorder %s19, 1
    %p163 = por %p161, %p162
    %p164 = scmp.ne.s32.totalorder %s155, %s156
    %p165 = scmp.eq.s32.totalorder %s19, 0
    %p166 = por %p164, %p165
    %p167 = scmp.ne.s32.totalorder %s155, %s156
    %p168 = scmp.eq.s32.totalorder %s20, 1
    %p169 = por %p167, %p168
    %p171 = scmp.ne.s32.totalorder %s156, %s170
    %p172 = scmp.eq.s32.totalorder %s20, 0
    %p173 = por %p171, %p172
    %s175 = sadd.s32 %s174, 1
    %p178 = scmp.eq.s32.totalorder %s14, 1
    %p179 = scmp.ne.s32.totalorder %s174, %s176
    %p180 = scmp.eq.s32.totalorder %s14, 0
    %p181 = por %p179, %p180
    %p182 = scmp.ne.s32.totalorder %s174, %s176
    %p183 = scmp.eq.s32.totalorder %s19, 1
    %p184 = por %p182, %p183
    %p185 = scmp.ne.s32.totalorder %s176, %s177
    %p186 = scmp.eq.s32.totalorder %s19, 0
    %p187 = por %p185, %p186
    %p188 = scmp.ne.s32.totalorder %s176, %s177
    %p189 = scmp.eq.s32.totalorder %s20, 1
    %p190 = por %p188, %p189
    %p192 = scmp.ne.s32.totalorder %s177, %s191
    %p193 = scmp.eq.s32.totalorder %s20, 0
    %p194 = por %p192, %p193
    %s195 = ssub.s32 %s14, %s21
    %p196 = scmp.eq.s32.totalorder %s195, 0
    %s198 = sadd.s32 %s197, 1
    %s199 = scalar_select %p196, %s197, %s198
    %p202 = pneg %p196
    %p203 = scmp.eq.s32.totalorder %s14, 1
    %p204 = por %p202, %p203
    %p205 = scmp.ne.s32.totalorder %s197, %s200
    %p206 = scmp.eq.s32.totalorder %s14, 0
    %p207 = por %p205, %p206
    %p208 = scmp.ne.s32.totalorder %s197, %s200
    %p209 = scmp.eq.s32.totalorder %s19, 1
    %p210 = por %p208, %p209
    %p211 = scmp.ne.s32.totalorder %s200, %s201
    %p212 = scmp.eq.s32.totalorder %s19, 0
    %p213 = por %p211, %p212
    %p214 = scmp.ne.s32.totalorder %s200, %s201
    %p215 = scmp.eq.s32.totalorder %s20, 1
    %p216 = por %p214, %p215
    %p218 = scmp.ne.s32.totalorder %s201, %s217
    %p219 = scmp.eq.s32.totalorder %s20, 0
    %p220 = por %p218, %p219
    %p221 = scmp.le.s32.totalorder 1, %s14
    %p222 = scmp.lt.s32.totalorder %s14, 3
    %p223 = pnand %p221, %p222
    %p224 = pneg %p223
    // Predicated region
    $region9: #{rrm_forward.1} parent=5 // pred_check
      _
    $region10: #{rrm_forward.1} parent=5 // pred_check_branch
      %226 = sbr.rel (%p223) target = $region12
    $region11: #{rrm_forward.1} parent=5 // pred_region
      %s227 = ssub.s32 %s14, 1
      // Predicated region
      $region13: #{rrm_forward.1} parent=11 // pred_check
        %p228 = pneg %p61
      $region14: #{rrm_forward.1} parent=11 // pred_check_branch
        %230 = sbr.rel (%p228) target = $region16
      $region15: #{rrm_forward.1} parent=11 // pred_region
        _
      $region16: #{rrm_forward.1} parent=11 // pred_fallthru
        _
      // Predicated region
      $region17: #{rrm_forward.1} parent=11 // pred_check
        %p231 = pneg %p82
      $region18: #{rrm_forward.1} parent=11 // pred_check_branch
        %233 = sbr.rel (%p231) target = $region20
      $region19: #{rrm_forward.1} parent=11 // pred_region
        _
      $region20: #{rrm_forward.1} parent=11 // pred_fallthru
        _
      // Predicated region
      $region21: #{rrm_forward.1} parent=11 // pred_check
        %p234 = pneg %p103
      $region22: #{rrm_forward.1} parent=11 // pred_check_branch
        %236 = sbr.rel (%p234) target = $region24
      $region23: #{rrm_forward.1} parent=11 // pred_region
        _
      $region24: #{rrm_forward.1} parent=11 // pred_fallthru
        _
      // Predicated region
      $region25: #{rrm_forward.1} parent=11 // pred_check
        %p237 = pneg %p124
      $region26: #{rrm_forward.1} parent=11 // pred_check_branch
        %239 = sbr.rel (%p237) target = $region28
      $region27: #{rrm_forward.1} parent=11 // pred_region
        _
      $region28: #{rrm_forward.1} parent=11 // pred_fallthru
        _
      // Predicated region
      $region29: #{rrm_forward.1} parent=11 // pred_check
        %p240 = pneg %p145
      $region30: #{rrm_forward.1} parent=11 // pred_check_branch
        %242 = sbr.rel (%p240) target = $region32
      $region31: #{rrm_forward.1} parent=11 // pred_region
        _
      $region32: #{rrm_forward.1} parent=11 // pred_fallthru
        _
      // Predicated region
      $region33: #{rrm_forward.1} parent=11 // pred_check
        %p243 = pneg %p166
      $region34: #{rrm_forward.1} parent=11 // pred_check_branch
        %245 = sbr.rel (%p243) target = $region36
      $region35: #{rrm_forward.1} parent=11 // pred_region
        _
      $region36: #{rrm_forward.1} parent=11 // pred_fallthru
        _
      // Predicated region
      $region37: #{rrm_forward.1} parent=11 // pred_check
        %p246 = pneg %p187
      $region38: #{rrm_forward.1} parent=11 // pred_check_branch
        %248 = sbr.rel (%p246) target = $region40
      $region39: #{rrm_forward.1} parent=11 // pred_region
        _
      $region40: #{rrm_forward.1} parent=11 // pred_fallthru
        _
    $region12: #{rrm_forward.1} parent=5 // pred_fallthru
      _
    %p249 = scmp.lt.s32.totalorder %s14, 2
    // Predicated region
    $region41: #{rrm_forward.1} parent=5 // pred_check
      %p250 = pneg %p249
    $region42: #{rrm_forward.1} parent=5 // pred_check_branch
      %252 = sbr.rel (%p250) target = $region44
    $region43: #{rrm_forward.1} parent=5 // pred_region
      // Predicated region
      $region45: #{rrm_forward.1} parent=43 // pred_check
        %p253 = pneg %p34
      $region46: #{rrm_forward.1} parent=43 // pred_check_branch
        %255 = sbr.rel (%p253) target = $region48
      $region47: #{rrm_forward.1} parent=43 // pred_region
        %p256 = scmp.lt.s32.totalorder %s14, 1
        %s257 = scalar_select %p256, %s14, 1
        %s258 = smul.addr %s257, 40
        %s259 = smul.addr %s258, 8
        %s260 = scalar_lea.vmem %s0, %s259
      $region48: #{rrm_forward.1} parent=43 // pred_fallthru
        _
    $region44: #{rrm_forward.1} parent=5 // pred_fallthru
      _
    %p261 = scmp.le.s32.totalorder 1, %s14
    %p262 = scmp.lt.s32.totalorder %s14, 3
    %p263 = pnand %p261, %p262
    %p264 = pneg %p263
    // Predicated region
    $region49: #{rrm_forward.1} parent=5 // pred_check
      _
    $region50: #{rrm_forward.1} parent=5 // pred_check_branch
      %266 = sbr.rel (%p263) target = $region52
    $region51: #{rrm_forward.1} parent=5 // pred_region
      %s267 = ssub.s32 %s14, 1
      %p268 = scmp.lt.s32.totalorder %s19, 1
      %s269 = scalar_select %p268, %s19, 1
      %s270 = smul.addr %s269, 40
      %s271 = smul.addr %s270, 8
      %s272 = scalar_lea.vmem %s0, %s271
      %p273 = pneg %p40
      %p274 = pneg %p37
      %p275 = pneg %p61
      %p276 = pneg %p58
      %p277 = pneg %p82
      %p278 = pneg %p79
      %p279 = pneg %p103
      %p280 = pneg %p100
      %p281 = pneg %p124
      %p282 = pneg %p121
      %p283 = pneg %p145
      %p284 = pneg %p142
      %p285 = pneg %p166
      %p286 = pneg %p163
      %p287 = pneg %p187
      %p288 = pneg %p184
      %p289 = pneg %p213
      %p290 = pneg %p210
      %p291 = scmp.lt.s32.totalorder %s19, 1
      %s292 = scalar_select %p291, %s19, 1
      %s293 = smul.addr %s292, 24
      %s294 = smul.addr %s293, 8
      %s295 = scalar_lea.vmem %s8, %s294
      %p296 = scmp.lt.s32.totalorder %s19, 1
      %s297 = scalar_select %p296, %s19, 1
      %s298 = smul.addr %s297, 40
      %s299 = smul.addr %s298, 8
      %s300 = scalar_lea.vmem %s0, %s299
      %p301 = scmp.lt.s32.totalorder %s19, 1
      %s302 = scalar_select %p301, %s19, 1
      %s303 = smul.addr %s302, 24
      %s304 = smul.addr %s303, 8
      %s305 = scalar_lea.vmem %s8, %s304
      %v306 = vld [vmem:[%s1] sm:$0x7]
      %307 = vst [vmem:[#allocation2] sm:$0xff] 0.0
      %308 = vst [vmem:[#allocation2 + $0x8] sm:$0xff] 0.0
      %309 = vst [vmem:[#allocation2 + $0x28] sm:$0xff] 0.0
      %310 = vst [vmem:[#allocation2 + $0x30] sm:$0xff] 0.0
      %v311 = vld [vmem:[%s2] sm:$0xff]
      %v312 = vld [vmem:[%s300] sm:$0xff]
      %v313 = vld [vmem:[%s300 + $0x8] sm:$0xff]
      %v314 = vld [vmem:[%s300 + $0x10] sm:$0xff]
      %v315 = vld [vmem:[%s300 + $0x18] sm:$0xff]
      %v316 = vld [vmem:[%s300 + $0x28] sm:$0xff]
      %v317 = vld [vmem:[%s300 + $0x30] sm:$0xff]
      %v318 = vld [vmem:[%s300 + $0x38] sm:$0xff]
      %v319 = vld [vmem:[%s300 + $0x40] sm:$0xff]
      %v320 = vld [vmem:[%s300 + $0x50] sm:$0xff]
      %v321 = vld [vmem:[%s300 + $0x58] sm:$0xff]
      %v322 = vld [vmem:[%s300 + $0x60] sm:$0xff]
      %v323 = vld [vmem:[%s300 + $0x68] sm:$0xff]
      %v324 = vld [vmem:[%s300 + $0x78] sm:$0xff]
      %v325 = vld [vmem:[%s300 + $0x80] sm:$0xff]
      %v326 = vld [vmem:[%s300 + $0x88] sm:$0xff]
      %v327 = vld [vmem:[%s300 + $0x90] sm:$0xff]
      %v328 = vld [vmem:[%s300 + $0xa0] sm:$0xff]
      %v329 = vld [vmem:[%s300 + $0xa8] sm:$0xff]
      %v330 = vld [vmem:[%s300 + $0xb0] sm:$0xff]
      %v331 = vld [vmem:[%s300 + $0xb8] sm:$0xff]
      %v332 = vld [vmem:[%s300 + $0xc8] sm:$0xff]
      %v333 = vld [vmem:[%s300 + $0xd0] sm:$0xff]
      %v334 = vld [vmem:[%s300 + $0xd8] sm:$0xff]
      %v335 = vld [vmem:[%s300 + $0xe0] sm:$0xff]
      %v336 = vld [vmem:[%s300 + $0xf0] sm:$0xff]
      %v337 = vld [vmem:[%s300 + $0xf8] sm:$0xff]
      %v338 = vld [vmem:[%s300 + $0x100] sm:$0xff]
      %v339 = vld [vmem:[%s300 + $0x108] sm:$0xff]
      %v340 = vld [vmem:[%s300 + $0x118] sm:$0xff]
      %v341 = vld [vmem:[%s300 + $0x120] sm:$0xff]
      %v342 = vld [vmem:[%s300 + $0x128] sm:$0xff]
      %v343 = vld [vmem:[%s300 + $0x130] sm:$0xff]
      %s344 = scalar_lea.vmem %s2, 8
      %v345 = vld [vmem:[%s344] sm:$0xff]
      %378 = vrot.lane.b32.xlu0 %v312, 24
      %v379 = vpop.permute.xlu0 %378
      %380 = vrot.lane.b32.xlu0 %v313, 24
      %v381 = vpop.permute.xlu0 %380
      %382 = vrot.lane.b32.xlu0 %v314, 24
      %v383 = vpop.permute.xlu0 %382
      %384 = vrot.lane.b32.xlu0 %v315, 24
      %v385 = vpop.permute.xlu0 %384
      %386 = vrot.lane.b32.xlu0 %v316, 24
      %v387 = vpop.permute.xlu0 %386
      %388 = vrot.lane.b32.xlu0 %v317, 24
      %v389 = vpop.permute.xlu0 %388
      %390 = vrot.lane.b32.xlu0 %v318, 24
      %v391 = vpop.permute.xlu0 %390
      %392 = vrot.lane.b32.xlu0 %v319, 24
      %v393 = vpop.permute.xlu0 %392
      %394 = vrot.lane.b32.xlu0 %v320, 24
      %v395 = vpop.permute.xlu0 %394
      %396 = vrot.lane.b32.xlu0 %v321, 24
      %v397 = vpop.permute.xlu0 %396
      %398 = vrot.lane.b32.xlu0 %v322, 24
      %v399 = vpop.permute.xlu0 %398
      %400 = vrot.lane.b32.xlu0 %v323, 24
      %v401 = vpop.permute.xlu0 %400
      %402 = vrot.lane.b32.xlu0 %v324, 24
      %v403 = vpop.permute.xlu0 %402
      %404 = vrot.lane.b32.xlu0 %v325, 24
      %v405 = vpop.permute.xlu0 %404
      %406 = vrot.lane.b32.xlu0 %v326, 24
      %v407 = vpop.permute.xlu0 %406
      %408 = vrot.lane.b32.xlu0 %v327, 24
      %v409 = vpop.permute.xlu0 %408
      %410 = vrot.lane.b32.xlu0 %v328, 24
      %v411 = vpop.permute.xlu0 %410
      %412 = vrot.lane.b32.xlu0 %v329, 24
      %v413 = vpop.permute.xlu0 %412
      %414 = vrot.lane.b32.xlu0 %v330, 24
      %v415 = vpop.permute.xlu0 %414
      %416 = vrot.lane.b32.xlu0 %v331, 24
      %v417 = vpop.permute.xlu0 %416
      %418 = vrot.lane.b32.xlu0 %v332, 24
      %v419 = vpop.permute.xlu0 %418
      %420 = vrot.lane.b32.xlu0 %v333, 24
      %v421 = vpop.permute.xlu0 %420
      %422 = vrot.lane.b32.xlu0 %v334, 24
      %v423 = vpop.permute.xlu0 %422
      %424 = vrot.lane.b32.xlu0 %v335, 24
      %v425 = vpop.permute.xlu0 %424
      %426 = vrot.lane.b32.xlu0 %v336, 24
      %v427 = vpop.permute.xlu0 %426
      %428 = vrot.lane.b32.xlu0 %v337, 24
      %v429 = vpop.permute.xlu0 %428
      %430 = vrot.lane.b32.xlu0 %v338, 24
      %v431 = vpop.permute.xlu0 %430
      %432 = vrot.lane.b32.xlu0 %v339, 24
      %v433 = vpop.permute.xlu0 %432
      %434 = vrot.lane.b32.xlu0 %v340, 24
      %v435 = vpop.permute.xlu0 %434
      %436 = vrot.lane.b32.xlu0 %v341, 24
      %v437 = vpop.permute.xlu0 %436
      %438 = vrot.lane.b32.xlu0 %v342, 24
      %v439 = vpop.permute.xlu0 %438
      %440 = vrot.lane.b32.xlu0 %v343, 24
      %v441 = vpop.permute.xlu0 %440
      %vm442 = vcmask 195584
      %v443 = vsel %vm442, %v379, %v381
      %v444 = vsel %vm442, %v381, %v383
      %v445 = vsel %vm442, %v383, %v385
      %v446 = vsel %vm442, %v387, %v389
      %v447 = vsel %vm442, %v389, %v391
      %v448 = vsel %vm442, %v391, %v393
      %v449 = vsel %vm442, %v395, %v397
      %v450 = vsel %vm442, %v397, %v399
      %v451 = vsel %vm442, %v399, %v401
      %v452 = vsel %vm442, %v403, %v405
      %v453 = vsel %vm442, %v405, %v407
      %v454 = vsel %vm442, %v407, %v409
      %v455 = vsel %vm442, %v411, %v413
      %v456 = vsel %vm442, %v413, %v415
      %v457 = vsel %vm442, %v415, %v417
      %v458 = vsel %vm442, %v419, %v421
      %v459 = vsel %vm442, %v421, %v423
      %v460 = vsel %vm442, %v423, %v425
      %v461 = vsel %vm442, %v427, %v429
      %v462 = vsel %vm442, %v429, %v431
      %v463 = vsel %vm442, %v431, %v433
      %v464 = vsel %vm442, %v435, %v437
      %v465 = vsel %vm442, %v437, %v439
      %v466 = vsel %vm442, %v439, %v441
      %vm491 = vcmask 523264
      %v493 = vsel %vm491, %v345, 0
      %495 = vmatprep.subr.mxu0 0.0
      %496 = vmatpush1.msra.mxu0 0.0
      %497 = vmatprep.subr.mxu0 0.0
      %498 = vmatpush1.msra.mxu0 0.0
      %499 = vmatprep.subr.mxu0 0.0
      %500 = vmatpush1.msra.mxu0 0.0
      %501 = vmatprep.subr.mxu0 0.0
      %502 = vmatpush1.msra.mxu0 0.0
      %503 = vmatprep.subr.mxu0 0.0
      %504 = vmatpush1.msra.mxu0 0.0
      %505 = vmatprep.subr.mxu0 0.0
      %506 = vmatpush1.msra.mxu0 0.0
      %507 = vmatprep.subr.mxu0 0.0
      %508 = vmatpush1.msra.mxu0 0.0
      %509 = vmatprep.subr.mxu0 0.0
      %510 = vmatpush1.msra.mxu0 0.0
      %511 = vmatprep.subr.mxu0 %v465
      %512 = vmatpush1.msra.mxu0 %v464
      %513 = vmatprep.subr.mxu0 %v462
      %514 = vmatpush1.msra.mxu0 %v461
      %515 = vmatprep.subr.mxu0 %v459
      %516 = vmatpush1.msra.mxu0 %v458
      %517 = vmatprep.subr.mxu0 %v456
      %518 = vmatpush1.msra.mxu0 %v455
      %519 = vmatprep.subr.mxu0 %v453
      %520 = vmatpush1.msra.mxu0 %v452
      %521 = vmatprep.subr.mxu0 %v450
      %522 = vmatpush1.msra.mxu0 %v449
      %523 = vmatprep.subr.mxu0 %v447
      %524 = vmatpush1.msra.mxu0 %v446
      %525 = vmatprep.subr.mxu0 %v444
      %526 = vmatpush1.msra.mxu0 %v443
      %527 = vmatprep.subr.mxu0 0.0
      %528 = vmatpush2.msra.mxu0 0.0
      %529 = vmatprep.subr.mxu0 0.0
      %530 = vmatpush2.msra.mxu0 0.0
      %531 = vmatprep.subr.mxu0 0.0
      %532 = vmatpush2.msra.mxu0 0.0
      %533 = vmatprep.subr.mxu0 0.0
      %534 = vmatpush2.msra.mxu0 0.0
      %535 = vmatprep.subr.mxu0 0.0
      %536 = vmatpush2.msra.mxu0 0.0
      %537 = vmatprep.subr.mxu0 0.0
      %538 = vmatpush2.msra.mxu0 0.0
      %539 = vmatprep.subr.mxu0 0.0
      %540 = vmatpush2.msra.mxu0 0.0
      %541 = vmatprep.subr.mxu0 0.0
      %542 = vmatpush2.msra.mxu0 0.0
      %543 = vmatprep.subr.mxu0 0.0
      %544 = vmatpush2.msra.mxu0 0.0
      %545 = vmatprep.subr.mxu0 0.0
      %546 = vmatpush2.msra.mxu0 0.0
      %547 = vmatprep.subr.mxu0 0.0
      %548 = vmatpush2.msra.mxu0 0.0
      %549 = vmatprep.subr.mxu0 0.0
      %550 = vmatpush2.msra.mxu0 0.0
      %551 = vmatprep.subr.mxu0 0.0
      %552 = vmatpush2.msra.mxu0 0.0
      %553 = vmatprep.subr.mxu0 0.0
      %554 = vmatpush2.msra.mxu0 0.0
      %555 = vmatprep.subr.mxu0 0.0
      %556 = vmatpush2.msra.mxu0 0.0
      %557 = vmatprep.subr.mxu0 0.0
      %558 = vmatpush2.msra.mxu0 0.0
      %559 = vmatprep.mubr.f32.mxu0 0.0
      %560 = vmatmul.mubr.f32.gmra.mxu0 %v493
      %v561 = vpop.f32.mrf.mxu0
      %v562 = vadd.f32 0.0, %v561
      %v563 = vpop.f32.mrf.mxu0
      %v564 = vadd.f32 0.0, %v563
      %565 = vdwg.mxu0
      %566 = vmatprep.subr.mxu0 0.0
      %567 = vmatpush1.msra.mxu0 0.0
      %568 = vmatprep.subr.mxu0 0.0
      %569 = vmatpush1.msra.mxu0 0.0
      %570 = vmatprep.subr.mxu0 0.0
      %571 = vmatpush1.msra.mxu0 0.0
      %572 = vmatprep.subr.mxu0 0.0
      %573 = vmatpush1.msra.mxu0 0.0
      %574 = vmatprep.subr.mxu0 0.0
      %575 = vmatpush1.msra.mxu0 0.0
      %576 = vmatprep.subr.mxu0 0.0
      %577 = vmatpush1.msra.mxu0 0.0
      %578 = vmatprep.subr.mxu0 0.0
      %579 = vmatpush1.msra.mxu0 0.0
      %580 = vmatprep.subr.mxu0 0.0
      %581 = vmatpush1.msra.mxu0 0.0
      %582 = vmatprep.subr.mxu0 0.0
      %583 = vmatpush1.msra.mxu0 %v466
      %584 = vmatprep.subr.mxu0 0.0
      %585 = vmatpush1.msra.mxu0 %v463
      %586 = vmatprep.subr.mxu0 0.0
      %587 = vmatpush1.msra.mxu0 %v460
      %588 = vmatprep.subr.mxu0 0.0
      %589 = vmatpush1.msra.mxu0 %v457
      %590 = vmatprep.subr.mxu0 0.0
      %591 = vmatpush1.msra.mxu0 %v454
      %592 = vmatprep.subr.mxu0 0.0
      %593 = vmatpush1.msra.mxu0 %v451
      %594 = vmatprep.subr.mxu0 0.0
      %595 = vmatpush1.msra.mxu0 %v448
      %596 = vmatprep.subr.mxu0 0.0
      %597 = vmatpush1.msra.mxu0 %v445
      %598 = vmatprep.subr.mxu0 0.0
      %599 = vmatpush2.msra.mxu0 0.0
      %600 = vmatprep.subr.mxu0 0.0
      %601 = vmatpush2.msra.mxu0 0.0
      %602 = vmatprep.subr.mxu0 0.0
      %603 = vmatpush2.msra.mxu0 0.0
      %604 = vmatprep.subr.mxu0 0.0
      %605 = vmatpush2.msra.mxu0 0.0
      %606 = vmatprep.subr.mxu0 0.0
      %607 = vmatpush2.msra.mxu0 0.0
      %608 = vmatprep.subr.mxu0 0.0
      %609 = vmatpush2.msra.mxu0 0.0
      %610 = vmatprep.subr.mxu0 0.0
      %611 = vmatpush2.msra.mxu0 0.0
      %612 = vmatprep.subr.mxu0 0.0
      %613 = vmatpush2.msra.mxu0 0.0
      %614 = vmatprep.subr.mxu0 0.0
      %615 = vmatpush2.msra.mxu0 0.0
      %616 = vmatprep.subr.mxu0 0.0
      %617 = vmatpush2.msra.mxu0 0.0
      %618 = vmatprep.subr.mxu0 0.0
      %619 = vmatpush2.msra.mxu0 0.0
      %620 = vmatprep.subr.mxu0 0.0
      %621 = vmatpush2.msra.mxu0 0.0
      %622 = vmatprep.subr.mxu0 0.0
      %623 = vmatpush2.msra.mxu0 0.0
      %624 = vmatprep.subr.mxu0 0.0
      %625 = vmatpush2.msra.mxu0 0.0
      %626 = vmatprep.subr.mxu0 0.0
      %627 = vmatpush2.msra.mxu0 0.0
      %628 = vmatprep.subr.mxu0 0.0
      %629 = vmatpush2.msra.mxu0 0.0
      %630 = vmatprep.mubr.f32.mxu0 0.0
      %631 = vmatmul.mubr.f32.gmra.mxu0 %v493
      %v632 = vpop.f32.mrf.mxu0
      %v633 = vadd.f32 0.0, %v632
      %v634 = vpop.f32.mrf.mxu0
      %635 = vdwg.mxu0
      %636 = vrot.lane.b32.xlu0 %v312, 25
      %v637 = vpop.permute.xlu0 %636
      %638 = vrot.lane.b32.xlu0 %v313, 25
      %v639 = vpop.permute.xlu0 %638
      %640 = vrot.lane.b32.xlu0 %v314, 25
      %v641 = vpop.permute.xlu0 %640
      %642 = vrot.lane.b32.xlu0 %v315, 25
      %v643 = vpop.permute.xlu0 %642
      %644 = vrot.lane.b32.xlu0 %v316, 25
      %v645 = vpop.permute.xlu0 %644
      %646 = vrot.lane.b32.xlu0 %v317, 25
      %v647 = vpop.permute.xlu0 %646
      %648 = vrot.lane.b32.xlu0 %v318, 25
      %v649 = vpop.permute.xlu0 %648
      %650 = vrot.lane.b32.xlu0 %v319, 25
      %v651 = vpop.permute.xlu0 %650
      %652 = vrot.lane.b32.xlu0 %v320, 25
      %v653 = vpop.permute.xlu0 %652
      %654 = vrot.lane.b32.xlu0 %v321, 25
      %v655 = vpop.permute.xlu0 %654
      %656 = vrot.lane.b32.xlu0 %v322, 25
      %v657 = vpop.permute.xlu0 %656
      %658 = vrot.lane.b32.xlu0 %v323, 25
      %v659 = vpop.permute.xlu0 %658
      %660 = vrot.lane.b32.xlu0 %v324, 25
      %v661 = vpop.permute.xlu0 %660
      %662 = vrot.lane.b32.xlu0 %v325, 25
      %v663 = vpop.permute.xlu0 %662
      %664 = vrot.lane.b32.xlu0 %v326, 25
      %v665 = vpop.permute.xlu0 %664
      %666 = vrot.lane.b32.xlu0 %v327, 25
      %v667 = vpop.permute.xlu0 %666
      %668 = vrot.lane.b32.xlu0 %v328, 25
      %v669 = vpop.permute.xlu0 %668
      %670 = vrot.lane.b32.xlu0 %v329, 25
      %v671 = vpop.permute.xlu0 %670
      %672 = vrot.lane.b32.xlu0 %v330, 25
      %v673 = vpop.permute.xlu0 %672
      %674 = vrot.lane.b32.xlu0 %v331, 25
      %v675 = vpop.permute.xlu0 %674
      %676 = vrot.lane.b32.xlu0 %v332, 25
      %v677 = vpop.permute.xlu0 %676
      %678 = vrot.lane.b32.xlu0 %v333, 25
      %v679 = vpop.permute.xlu0 %678
      %680 = vrot.lane.b32.xlu0 %v334, 25
      %v681 = vpop.permute.xlu0 %680
      %682 = vrot.lane.b32.xlu0 %v335, 25
      %v683 = vpop.permute.xlu0 %682
      %684 = vrot.lane.b32.xlu0 %v336, 25
      %v685 = vpop.permute.xlu0 %684
      %686 = vrot.lane.b32.xlu0 %v337, 25
      %v687 = vpop.permute.xlu0 %686
      %688 = vrot.lane.b32.xlu0 %v338, 25
      %v689 = vpop.permute.xlu0 %688
      %690 = vrot.lane.b32.xlu0 %v339, 25
      %v691 = vpop.permute.xlu0 %690
      %692 = vrot.lane.b32.xlu0 %v340, 25
      %v693 = vpop.permute.xlu0 %692
      %694 = vrot.lane.b32.xlu0 %v341, 25
      %v695 = vpop.permute.xlu0 %694
      %696 = vrot.lane.b32.xlu0 %v342, 25
      %v697 = vpop.permute.xlu0 %696
      %698 = vrot.lane.b32.xlu0 %v343, 25
      %v699 = vpop.permute.xlu0 %698
      %vm700 = vcmask 203776
      %v701 = vsel %vm700, %v637, %v639
      %v702 = vsel %vm700, %v639, %v641
      %v703 = vsel %vm700, %v641, %v643
      %v704 = vsel %vm700, %v645, %v647
      %v705 = vsel %vm700, %v647, %v649
      %v706 = vsel %vm700, %v649, %v651
      %v707 = vsel %vm700, %v653, %v655
      %v708 = vsel %vm700, %v655, %v657
      %v709 = vsel %vm700, %v657, %v659
      %v710 = vsel %vm700, %v661, %v663
      %v711 = vsel %vm700, %v663, %v665
      %v712 = vsel %vm700, %v665, %v667
      %v713 = vsel %vm700, %v669, %v671
      %v714 = vsel %vm700, %v671, %v673
      %v715 = vsel %vm700, %v673, %v675
      %v716 = vsel %vm700, %v677, %v679
      %v717 = vsel %vm700, %v679, %v681
      %v718 = vsel %vm700, %v681, %v683
      %v719 = vsel %vm700, %v685, %v687
      %v720 = vsel %vm700, %v687, %v689
      %v721 = vsel %vm700, %v689, %v691
      %v722 = vsel %vm700, %v693, %v695
      %v723 = vsel %vm700, %v695, %v697
      %v724 = vsel %vm700, %v697, %v699
      %v750 = vsel %vm491, %v311, 0
      %752 = vmatprep.subr.mxu0 0.0
      %753 = vmatpush1.msra.mxu0 0.0
      %754 = vmatprep.subr.mxu0 0.0
      %755 = vmatpush1.msra.mxu0 0.0
      %756 = vmatprep.subr.mxu0 0.0
      %757 = vmatpush1.msra.mxu0 0.0
      %758 = vmatprep.subr.mxu0 0.0
      %759 = vmatpush1.msra.mxu0 0.0
      %760 = vmatprep.subr.mxu0 0.0
      %761 = vmatpush1.msra.mxu0 0.0
      %762 = vmatprep.subr.mxu0 0.0
      %763 = vmatpush1.msra.mxu0 0.0
      %764 = vmatprep.subr.mxu0 0.0
      %765 = vmatpush1.msra.mxu0 0.0
      %766 = vmatprep.subr.mxu0 0.0
      %767 = vmatpush1.msra.mxu0 0.0
      %768 = vmatprep.subr.mxu0 %v723
      %769 = vmatpush1.msra.mxu0 %v722
      %770 = vmatprep.subr.mxu0 %v720
      %771 = vmatpush1.msra.mxu0 %v719
      %772 = vmatprep.subr.mxu0 %v717
      %773 = vmatpush1.msra.mxu0 %v716
      %774 = vmatprep.subr.mxu0 %v714
      %775 = vmatpush1.msra.mxu0 %v713
      %776 = vmatprep.subr.mxu0 %v711
      %777 = vmatpush1.msra.mxu0 %v710
      %778 = vmatprep.subr.mxu0 %v708
      %779 = vmatpush1.msra.mxu0 %v707
      %780 = vmatprep.subr.mxu0 %v705
      %781 = vmatpush1.msra.mxu0 %v704
      %782 = vmatprep.subr.mxu0 %v702
      %783 = vmatpush1.msra.mxu0 %v701
      %784 = vmatprep.subr.mxu0 0.0
      %785 = vmatpush2.msra.mxu0 0.0
      %786 = vmatprep.subr.mxu0 0.0
      %787 = vmatpush2.msra.mxu0 0.0
      %788 = vmatprep.subr.mxu0 0.0
      %789 = vmatpush2.msra.mxu0 0.0
      %790 = vmatprep.subr.mxu0 0.0
      %791 = vmatpush2.msra.mxu0 0.0
      %792 = vmatprep.subr.mxu0 0.0
      %793 = vmatpush2.msra.mxu0 0.0
      %794 = vmatprep.subr.mxu0 0.0
      %795 = vmatpush2.msra.mxu0 0.0
      %796 = vmatprep.subr.mxu0 0.0
      %797 = vmatpush2.msra.mxu0 0.0
      %798 = vmatprep.subr.mxu0 0.0
      %799 = vmatpush2.msra.mxu0 0.0
      %800 = vmatprep.subr.mxu0 0.0
      %801 = vmatpush2.msra.mxu0 0.0
      %802 = vmatprep.subr.mxu0 0.0
      %803 = vmatpush2.msra.mxu0 0.0
      %804 = vmatprep.subr.mxu0 0.0
      %805 = vmatpush2.msra.mxu0 0.0
      %806 = vmatprep.subr.mxu0 0.0
      %807 = vmatpush2.msra.mxu0 0.0
      %808 = vmatprep.subr.mxu0 0.0
      %809 = vmatpush2.msra.mxu0 0.0
      %810 = vmatprep.subr.mxu0 0.0
      %811 = vmatpush2.msra.mxu0 0.0
      %812 = vmatprep.subr.mxu0 0.0
      %813 = vmatpush2.msra.mxu0 0.0
      %814 = vmatprep.subr.mxu0 0.0
      %815 = vmatpush2.msra.mxu0 0.0
      %816 = vmatprep.mubr.f32.mxu0 0.0
      %817 = vmatmul.mubr.f32.gmra.mxu0 %v750
      %v818 = vpop.f32.mrf.mxu0
      %v819 = vadd.f32 %v562, %v818
      %v820 = vpop.f32.mrf.mxu0
      %v821 = vadd.f32 %v564, %v820
      %822 = vdwg.mxu0
      %823 = vmatprep.subr.mxu0 0.0
      %824 = vmatpush1.msra.mxu0 0.0
      %825 = vmatprep.subr.mxu0 0.0
      %826 = vmatpush1.msra.mxu0 0.0
      %827 = vmatprep.subr.mxu0 0.0
      %828 = vmatpush1.msra.mxu0 0.0
      %829 = vmatprep.subr.mxu0 0.0
      %830 = vmatpush1.msra.mxu0 0.0
      %831 = vmatprep.subr.mxu0 0.0
      %832 = vmatpush1.msra.mxu0 0.0
      %833 = vmatprep.subr.mxu0 0.0
      %834 = vmatpush1.msra.mxu0 0.0
      %835 = vmatprep.subr.mxu0 0.0
      %836 = vmatpush1.msra.mxu0 0.0
      %837 = vmatprep.subr.mxu0 0.0
      %838 = vmatpush1.msra.mxu0 0.0
      %839 = vmatprep.subr.mxu0 0.0
      %840 = vmatpush1.msra.mxu0 %v724
      %841 = vmatprep.subr.mxu0 0.0
      %842 = vmatpush1.msra.mxu0 %v721
      %843 = vmatprep.subr.mxu0 0.0
      %844 = vmatpush1.msra.mxu0 %v718
      %845 = vmatprep.subr.mxu0 0.0
      %846 = vmatpush1.msra.mxu0 %v715
      %847 = vmatprep.subr.mxu0 0.0
      %848 = vmatpush1.msra.mxu0 %v712
      %849 = vmatprep.subr.mxu0 0.0
      %850 = vmatpush1.msra.mxu0 %v709
      %851 = vmatprep.subr.mxu0 0.0
      %852 = vmatpush1.msra.mxu0 %v706
      %853 = vmatprep.subr.mxu0 0.0
      %854 = vmatpush1.msra.mxu0 %v703
      %855 = vmatprep.subr.mxu0 0.0
      %856 = vmatpush2.msra.mxu0 0.0
      %857 = vmatprep.subr.mxu0 0.0
      %858 = vmatpush2.msra.mxu0 0.0
      %859 = vmatprep.subr.mxu0 0.0
      %860 = vmatpush2.msra.mxu0 0.0
      %861 = vmatprep.subr.mxu0 0.0
      %862 = vmatpush2.msra.mxu0 0.0
      %863 = vmatprep.subr.mxu0 0.0
      %864 = vmatpush2.msra.mxu0 0.0
      %865 = vmatprep.subr.mxu0 0.0
      %866 = vmatpush2.msra.mxu0 0.0
      %867 = vmatprep.subr.mxu0 0.0
      %868 = vmatpush2.msra.mxu0 0.0
      %869 = vmatprep.subr.mxu0 0.0
      %870 = vmatpush2.msra.mxu0 0.0
      %871 = vmatprep.subr.mxu0 0.0
      %872 = vmatpush2.msra.mxu0 0.0
      %873 = vmatprep.subr.mxu0 0.0
      %874 = vmatpush2.msra.mxu0 0.0
      %875 = vmatprep.subr.mxu0 0.0
      %876 = vmatpush2.msra.mxu0 0.0
      %877 = vmatprep.subr.mxu0 0.0
      %878 = vmatpush2.msra.mxu0 0.0
      %879 = vmatprep.subr.mxu0 0.0
      %880 = vmatpush2.msra.mxu0 0.0
      %881 = vmatprep.subr.mxu0 0.0
      %882 = vmatpush2.msra.mxu0 0.0
      %883 = vmatprep.subr.mxu0 0.0
      %884 = vmatpush2.msra.mxu0 0.0
      %885 = vmatprep.subr.mxu0 0.0
      %886 = vmatpush2.msra.mxu0 0.0
      %887 = vmatprep.mubr.f32.mxu0 0.0
      %888 = vmatmul.mubr.f32.gmra.mxu0 %v750
      %v889 = vpop.f32.mrf.mxu0
      %v890 = vadd.f32 %v633, %v889
      %v891 = vpop.f32.mrf.mxu0
      %892 = vdwg.mxu0
      %s893 = scalar_lea.vmem %s2, 16
      %v894 = vld [vmem:[%s893] sm:$0xff]
      %895 = vrot.lane.b32.xlu0 %v312, 23
      %v896 = vpop.permute.xlu0 %895
      %897 = vrot.lane.b32.xlu0 %v313, 23
      %v898 = vpop.permute.xlu0 %897
      %899 = vrot.lane.b32.xlu0 %v314, 23
      %v900 = vpop.permute.xlu0 %899
      %901 = vrot.lane.b32.xlu0 %v315, 23
      %v902 = vpop.permute.xlu0 %901
      %903 = vrot.lane.b32.xlu0 %v316, 23
      %v904 = vpop.permute.xlu0 %903
      %905 = vrot.lane.b32.xlu0 %v317, 23
      %v906 = vpop.permute.xlu0 %905
      %907 = vrot.lane.b32.xlu0 %v318, 23
      %v908 = vpop.permute.xlu0 %907
      %909 = vrot.lane.b32.xlu0 %v319, 23
      %v910 = vpop.permute.xlu0 %909
      %911 = vrot.lane.b32.xlu0 %v320, 23
      %v912 = vpop.permute.xlu0 %911
      %913 = vrot.lane.b32.xlu0 %v321, 23
      %v914 = vpop.permute.xlu0 %913
      %915 = vrot.lane.b32.xlu0 %v322, 23
      %v916 = vpop.permute.xlu0 %915
      %917 = vrot.lane.b32.xlu0 %v323, 23
      %v918 = vpop.permute.xlu0 %917
      %919 = vrot.lane.b32.xlu0 %v324, 23
      %v920 = vpop.permute.xlu0 %919
      %921 = vrot.lane.b32.xlu0 %v325, 23
      %v922 = vpop.permute.xlu0 %921
      %923 = vrot.lane.b32.xlu0 %v326, 23
      %v924 = vpop.permute.xlu0 %923
      %925 = vrot.lane.b32.xlu0 %v327, 23
      %v926 = vpop.permute.xlu0 %925
      %927 = vrot.lane.b32.xlu0 %v328, 23
      %v928 = vpop.permute.xlu0 %927
      %929 = vrot.lane.b32.xlu0 %v329, 23
      %v930 = vpop.permute.xlu0 %929
      %931 = vrot.lane.b32.xlu0 %v330, 23
      %v932 = vpop.permute.xlu0 %931
      %933 = vrot.lane.b32.xlu0 %v331, 23
      %v934 = vpop.permute.xlu0 %933
      %935 = vrot.lane.b32.xlu0 %v332, 23
      %v936 = vpop.permute.xlu0 %935
      %937 = vrot.lane.b32.xlu0 %v333, 23
      %v938 = vpop.permute.xlu0 %937
      %939 = vrot.lane.b32.xlu0 %v334, 23
      %v940 = vpop.permute.xlu0 %939
      %941 = vrot.lane.b32.xlu0 %v335, 23
      %v942 = vpop.permute.xlu0 %941
      %943 = vrot.lane.b32.xlu0 %v336, 23
      %v944 = vpop.permute.xlu0 %943
      %945 = vrot.lane.b32.xlu0 %v337, 23
      %v946 = vpop.permute.xlu0 %945
      %947 = vrot.lane.b32.xlu0 %v338, 23
      %v948 = vpop.permute.xlu0 %947
      %949 = vrot.lane.b32.xlu0 %v339, 23
      %v950 = vpop.permute.xlu0 %949
      %951 = vrot.lane.b32.xlu0 %v340, 23
      %v952 = vpop.permute.xlu0 %951
      %953 = vrot.lane.b32.xlu0 %v341, 23
      %v954 = vpop.permute.xlu0 %953
      %955 = vrot.lane.b32.xlu0 %v342, 23
      %v956 = vpop.permute.xlu0 %955
      %957 = vrot.lane.b32.xlu0 %v343, 23
      %v958 = vpop.permute.xlu0 %957
      %vm959 = vcmask 187392
      %v960 = vsel %vm959, %v896, %v898
      %v961 = vsel %vm959, %v898, %v900
      %v962 = vsel %vm959, %v900, %v902
      %v963 = vsel %vm959, %v904, %v906
      %v964 = vsel %vm959, %v906, %v908
      %v965 = vsel %vm959, %v908, %v910
      %v966 = vsel %vm959, %v912, %v914
      %v967 = vsel %vm959, %v914, %v916
      %v968 = vsel %vm959, %v916, %v918
      %v969 = vsel %vm959, %v920, %v922
      %v970 = vsel %vm959, %v922, %v924
      %v971 = vsel %vm959, %v924, %v926
      %v972 = vsel %vm959, %v928, %v930
      %v973 = vsel %vm959, %v930, %v932
      %v974 = vsel %vm959, %v932, %v934
      %v975 = vsel %vm959, %v936, %v938
      %v976 = vsel %vm959, %v938, %v940
      %v977 = vsel %vm959, %v940, %v942
      %v978 = vsel %vm959, %v944, %v946
      %v979 = vsel %vm959, %v946, %v948
      %v980 = vsel %vm959, %v948, %v950
      %v981 = vsel %vm959, %v952, %v954
      %v982 = vsel %vm959, %v954, %v956
      %v983 = vsel %vm959, %v956, %v958
      %v1009 = vsel %vm491, %v894, 0
      %1011 = vmatprep.subr.mxu0 0.0
      %1012 = vmatpush1.msra.mxu0 0.0
      %1013 = vmatprep.subr.mxu0 0.0
      %1014 = vmatpush1.msra.mxu0 0.0
      %1015 = vmatprep.subr.mxu0 0.0
      %1016 = vmatpush1.msra.mxu0 0.0
      %1017 = vmatprep.subr.mxu0 0.0
      %1018 = vmatpush1.msra.mxu0 0.0
      %1019 = vmatprep.subr.mxu0 0.0
      %1020 = vmatpush1.msra.mxu0 0.0
      %1021 = vmatprep.subr.mxu0 0.0
      %1022 = vmatpush1.msra.mxu0 0.0
      %1023 = vmatprep.subr.mxu0 0.0
      %1024 = vmatpush1.msra.mxu0 0.0
      %1025 = vmatprep.subr.mxu0 0.0
      %1026 = vmatpush1.msra.mxu0 0.0
      %1027 = vmatprep.subr.mxu0 %v982
      %1028 = vmatpush1.msra.mxu0 %v981
      %1029 = vmatprep.subr.mxu0 %v979
      %1030 = vmatpush1.msra.mxu0 %v978
      %1031 = vmatprep.subr.mxu0 %v976
      %1032 = vmatpush1.msra.mxu0 %v975
      %1033 = vmatprep.subr.mxu0 %v973
      %1034 = vmatpush1.msra.mxu0 %v972
      %1035 = vmatprep.subr.mxu0 %v970
      %1036 = vmatpush1.msra.mxu0 %v969
      %1037 = vmatprep.subr.mxu0 %v967
      %1038 = vmatpush1.msra.mxu0 %v966
      %1039 = vmatprep.subr.mxu0 %v964
      %1040 = vmatpush1.msra.mxu0 %v963
      %1041 = vmatprep.subr.mxu0 %v961
      %1042 = vmatpush1.msra.mxu0 %v960
      %1043 = vmatprep.subr.mxu0 0.0
      %1044 = vmatpush2.msra.mxu0 0.0
      %1045 = vmatprep.subr.mxu0 0.0
      %1046 = vmatpush2.msra.mxu0 0.0
      %1047 = vmatprep.subr.mxu0 0.0
      %1048 = vmatpush2.msra.mxu0 0.0
      %1049 = vmatprep.subr.mxu0 0.0
      %1050 = vmatpush2.msra.mxu0 0.0
      %1051 = vmatprep.subr.mxu0 0.0
      %1052 = vmatpush2.msra.mxu0 0.0
      %1053 = vmatprep.subr.mxu0 0.0
      %1054 = vmatpush2.msra.mxu0 0.0
      %1055 = vmatprep.subr.mxu0 0.0
      %1056 = vmatpush2.msra.mxu0 0.0
      %1057 = vmatprep.subr.mxu0 0.0
      %1058 = vmatpush2.msra.mxu0 0.0
      %1059 = vmatprep.subr.mxu0 0.0
      %1060 = vmatpush2.msra.mxu0 0.0
      %1061 = vmatprep.subr.mxu0 0.0
      %1062 = vmatpush2.msra.mxu0 0.0
      %1063 = vmatprep.subr.mxu0 0.0
      %1064 = vmatpush2.msra.mxu0 0.0
      %1065 = vmatprep.subr.mxu0 0.0
      %1066 = vmatpush2.msra.mxu0 0.0
      %1067 = vmatprep.subr.mxu0 0.0
      %1068 = vmatpush2.msra.mxu0 0.0
      %1069 = vmatprep.subr.mxu0 0.0
      %1070 = vmatpush2.msra.mxu0 0.0
      %1071 = vmatprep.subr.mxu0 0.0
      %1072 = vmatpush2.msra.mxu0 0.0
      %1073 = vmatprep.subr.mxu0 0.0
      %1074 = vmatpush2.msra.mxu0 0.0
      %1075 = vmatprep.mubr.f32.mxu0 0.0
      %1076 = vmatmul.mubr.f32.gmra.mxu0 %v1009
      %v1077 = vpop.f32.mrf.mxu0
      %v1078 = vadd.f32 0.0, %v1077
      %v1079 = vpop.f32.mrf.mxu0
      %v1080 = vadd.f32 0.0, %v1079
      %1081 = vdwg.mxu0
      %1082 = vmatprep.subr.mxu0 0.0
      %1083 = vmatpush1.msra.mxu0 0.0
      %1084 = vmatprep.subr.mxu0 0.0
      %1085 = vmatpush1.msra.mxu0 0.0
      %1086 = vmatprep.subr.mxu0 0.0
      %1087 = vmatpush1.msra.mxu0 0.0
      %1088 = vmatprep.subr.mxu0 0.0
      %1089 = vmatpush1.msra.mxu0 0.0
      %1090 = vmatprep.subr.mxu0 0.0
      %1091 = vmatpush1.msra.mxu0 0.0
      %1092 = vmatprep.subr.mxu0 0.0
      %1093 = vmatpush1.msra.mxu0 0.0
      %1094 = vmatprep.subr.mxu0 0.0
      %1095 = vmatpush1.msra.mxu0 0.0
      %1096 = vmatprep.subr.mxu0 0.0
      %1097 = vmatpush1.msra.mxu0 0.0
      %1098 = vmatprep.subr.mxu0 0.0
      %1099 = vmatpush1.msra.mxu0 %v983
      %1100 = vmatprep.subr.mxu0 0.0
      %1101 = vmatpush1.msra.mxu0 %v980
      %1102 = vmatprep.subr.mxu0 0.0
      %1103 = vmatpush1.msra.mxu0 %v977
      %1104 = vmatprep.subr.mxu0 0.0
      %1105 = vmatpush1.msra.mxu0 %v974
      %1106 = vmatprep.subr.mxu0 0.0
      %1107 = vmatpush1.msra.mxu0 %v971
      %1108 = vmatprep.subr.mxu0 0.0
      %1109 = vmatpush1.msra.mxu0 %v968
      %1110 = vmatprep.subr.mxu0 0.0
      %1111 = vmatpush1.msra.mxu0 %v965
      %1112 = vmatprep.subr.mxu0 0.0
      %1113 = vmatpush1.msra.mxu0 %v962
      %1114 = vmatprep.subr.mxu0 0.0
      %1115 = vmatpush2.msra.mxu0 0.0
      %1116 = vmatprep.subr.mxu0 0.0
      %1117 = vmatpush2.msra.mxu0 0.0
      %1118 = vmatprep.subr.mxu0 0.0
      %1119 = vmatpush2.msra.mxu0 0.0
      %1120 = vmatprep.subr.mxu0 0.0
      %1121 = vmatpush2.msra.mxu0 0.0
      %1122 = vmatprep.subr.mxu0 0.0
      %1123 = vmatpush2.msra.mxu0 0.0
      %1124 = vmatprep.subr.mxu0 0.0
      %1125 = vmatpush2.msra.mxu0 0.0
      %1126 = vmatprep.subr.mxu0 0.0
      %1127 = vmatpush2.msra.mxu0 0.0
      %1128 = vmatprep.subr.mxu0 0.0
      %1129 = vmatpush2.msra.mxu0 0.0
      %1130 = vmatprep.subr.mxu0 0.0
      %1131 = vmatpush2.msra.mxu0 0.0
      %1132 = vmatprep.subr.mxu0 0.0
      %1133 = vmatpush2.msra.mxu0 0.0
      %1134 = vmatprep.subr.mxu0 0.0
      %1135 = vmatpush2.msra.mxu0 0.0
      %1136 = vmatprep.subr.mxu0 0.0
      %1137 = vmatpush2.msra.mxu0 0.0
      %1138 = vmatprep.subr.mxu0 0.0
      %1139 = vmatpush2.msra.mxu0 0.0
      %1140 = vmatprep.subr.mxu0 0.0
      %1141 = vmatpush2.msra.mxu0 0.0
      %1142 = vmatprep.subr.mxu0 0.0
      %1143 = vmatpush2.msra.mxu0 0.0
      %1144 = vmatprep.subr.mxu0 0.0
      %1145 = vmatpush2.msra.mxu0 0.0
      %1146 = vmatprep.mubr.f32.mxu0 0.0
      %1147 = vmatmul.mubr.f32.gmra.mxu0 %v1009
      %v1148 = vpop.f32.mrf.mxu0
      %v1149 = vadd.f32 0.0, %v1148
      %v1150 = vpop.f32.mrf.mxu0
      %1151 = vdwg.mxu0
      %v1152 = vadd.f32 %v819, %v1078
      %v1153 = vadd.f32 %v821, %v1080
      %v1154 = vadd.f32 %v890, %v1149
      %s1155 = scalar_lea.vmem %s2, 24
      %v1156 = vld [vmem:[%s1155] sm:$0xff]
      %1157 = vrot.lane.b32.xlu0 %v312, 1
      %v1158 = vpop.permute.xlu0 %1157
      %1159 = vrot.lane.b32.xlu0 %v313, 1
      %v1160 = vpop.permute.xlu0 %1159
      %1161 = vrot.lane.b32.xlu0 %v314, 1
      %v1162 = vpop.permute.xlu0 %1161
      %1163 = vrot.lane.b32.xlu0 %v315, 1
      %v1164 = vpop.permute.xlu0 %1163
      %1165 = vrot.lane.b32.xlu0 %v316, 1
      %v1166 = vpop.permute.xlu0 %1165
      %1167 = vrot.lane.b32.xlu0 %v317, 1
      %v1168 = vpop.permute.xlu0 %1167
      %1169 = vrot.lane.b32.xlu0 %v318, 1
      %v1170 = vpop.permute.xlu0 %1169
      %1171 = vrot.lane.b32.xlu0 %v319, 1
      %v1172 = vpop.permute.xlu0 %1171
      %1173 = vrot.lane.b32.xlu0 %v320, 1
      %v1174 = vpop.permute.xlu0 %1173
      %1175 = vrot.lane.b32.xlu0 %v321, 1
      %v1176 = vpop.permute.xlu0 %1175
      %1177 = vrot.lane.b32.xlu0 %v322, 1
      %v1178 = vpop.permute.xlu0 %1177
      %1179 = vrot.lane.b32.xlu0 %v323, 1
      %v1180 = vpop.permute.xlu0 %1179
      %1181 = vrot.lane.b32.xlu0 %v324, 1
      %v1182 = vpop.permute.xlu0 %1181
      %1183 = vrot.lane.b32.xlu0 %v325, 1
      %v1184 = vpop.permute.xlu0 %1183
      %1185 = vrot.lane.b32.xlu0 %v326, 1
      %v1186 = vpop.permute.xlu0 %1185
      %1187 = vrot.lane.b32.xlu0 %v327, 1
      %v1188 = vpop.permute.xlu0 %1187
      %1189 = vrot.lane.b32.xlu0 %v328, 1
      %v1190 = vpop.permute.xlu0 %1189
      %1191 = vrot.lane.b32.xlu0 %v329, 1
      %v1192 = vpop.permute.xlu0 %1191
      %1193 = vrot.lane.b32.xlu0 %v330, 1
      %v1194 = vpop.permute.xlu0 %1193
      %1195 = vrot.lane.b32.xlu0 %v331, 1
      %v1196 = vpop.permute.xlu0 %1195
      %1197 = vrot.lane.b32.xlu0 %v332, 1
      %v1198 = vpop.permute.xlu0 %1197
      %1199 = vrot.lane.b32.xlu0 %v333, 1
      %v1200 = vpop.permute.xlu0 %1199
      %1201 = vrot.lane.b32.xlu0 %v334, 1
      %v1202 = vpop.permute.xlu0 %1201
      %1203 = vrot.lane.b32.xlu0 %v335, 1
      %v1204 = vpop.permute.xlu0 %1203
      %1205 = vrot.lane.b32.xlu0 %v336, 1
      %v1206 = vpop.permute.xlu0 %1205
      %1207 = vrot.lane.b32.xlu0 %v337, 1
      %v1208 = vpop.permute.xlu0 %1207
      %1209 = vrot.lane.b32.xlu0 %v338, 1
      %v1210 = vpop.permute.xlu0 %1209
      %1211 = vrot.lane.b32.xlu0 %v339, 1
      %v1212 = vpop.permute.xlu0 %1211
      %1213 = vrot.lane.b32.xlu0 %v340, 1
      %v1214 = vpop.permute.xlu0 %1213
      %1215 = vrot.lane.b32.xlu0 %v341, 1
      %v1216 = vpop.permute.xlu0 %1215
      %1217 = vrot.lane.b32.xlu0 %v342, 1
      %v1218 = vpop.permute.xlu0 %1217
      %1219 = vrot.lane.b32.xlu0 %v343, 1
      %v1220 = vpop.permute.xlu0 %1219
      %vm1221 = vcmask 7168
      %v1222 = vsel %vm1221, %v1158, %v1160
      %v1223 = vsel %vm1221, %v1160, %v1162
      %v1224 = vsel %vm1221, %v1162, %v1164
      %v1225 = vsel %vm1221, %v1166, %v1168
      %v1226 = vsel %vm1221, %v1168, %v1170
      %v1227 = vsel %vm1221, %v1170, %v1172
      %v1228 = vsel %vm1221, %v1174, %v1176
      %v1229 = vsel %vm1221, %v1176, %v1178
      %v1230 = vsel %vm1221, %v1178, %v1180
      %v1231 = vsel %vm1221, %v1182, %v1184
      %v1232 = vsel %vm1221, %v1184, %v1186
      %v1233 = vsel %vm1221, %v1186, %v1188
      %v1234 = vsel %vm1221, %v1190, %v1192
      %v1235 = vsel %vm1221, %v1192, %v1194
      %v1236 = vsel %vm1221, %v1194, %v1196
      %v1237 = vsel %vm1221, %v1198, %v1200
      %v1238 = vsel %vm1221, %v1200, %v1202
      %v1239 = vsel %vm1221, %v1202, %v1204
      %v1240 = vsel %vm1221, %v1206, %v1208
      %v1241 = vsel %vm1221, %v1208, %v1210
      %v1242 = vsel %vm1221, %v1210, %v1212
      %v1243 = vsel %vm1221, %v1214, %v1216
      %v1244 = vsel %vm1221, %v1216, %v1218
      %v1245 = vsel %vm1221, %v1218, %v1220
      %v1271 = vsel %vm491, %v1156, 0
      %1273 = vmatprep.subr.mxu0 0.0
      %1274 = vmatpush1.msra.mxu0 0.0
      %1275 = vmatprep.subr.mxu0 0.0
      %1276 = vmatpush1.msra.mxu0 0.0
      %1277 = vmatprep.subr.mxu0 0.0
      %1278 = vmatpush1.msra.mxu0 0.0
      %1279 = vmatprep.subr.mxu0 0.0
      %1280 = vmatpush1.msra.mxu0 0.0
      %1281 = vmatprep.subr.mxu0 0.0
      %1282 = vmatpush1.msra.mxu0 0.0
      %1283 = vmatprep.subr.mxu0 0.0
      %1284 = vmatpush1.msra.mxu0 0.0
      %1285 = vmatprep.subr.mxu0 0.0
      %1286 = vmatpush1.msra.mxu0 0.0
      %1287 = vmatprep.subr.mxu0 0.0
      %1288 = vmatpush1.msra.mxu0 0.0
      %1289 = vmatprep.subr.mxu0 %v1244
      %1290 = vmatpush1.msra.mxu0 %v1243
      %1291 = vmatprep.subr.mxu0 %v1241
      %1292 = vmatpush1.msra.mxu0 %v1240
      %1293 = vmatprep.subr.mxu0 %v1238
      %1294 = vmatpush1.msra.mxu0 %v1237
      %1295 = vmatprep.subr.mxu0 %v1235
      %1296 = vmatpush1.msra.mxu0 %v1234
      %1297 = vmatprep.subr.mxu0 %v1232
      %1298 = vmatpush1.msra.mxu0 %v1231
      %1299 = vmatprep.subr.mxu0 %v1229
      %1300 = vmatpush1.msra.mxu0 %v1228
      %1301 = vmatprep.subr.mxu0 %v1226
      %1302 = vmatpush1.msra.mxu0 %v1225
      %1303 = vmatprep.subr.mxu0 %v1223
      %1304 = vmatpush1.msra.mxu0 %v1222
      %1305 = vmatprep.subr.mxu0 0.0
      %1306 = vmatpush2.msra.mxu0 0.0
      %1307 = vmatprep.subr.mxu0 0.0
      %1308 = vmatpush2.msra.mxu0 0.0
      %1309 = vmatprep.subr.mxu0 0.0
      %1310 = vmatpush2.msra.mxu0 0.0
      %1311 = vmatprep.subr.mxu0 0.0
      %1312 = vmatpush2.msra.mxu0 0.0
      %1313 = vmatprep.subr.mxu0 0.0
      %1314 = vmatpush2.msra.mxu0 0.0
      %1315 = vmatprep.subr.mxu0 0.0
      %1316 = vmatpush2.msra.mxu0 0.0
      %1317 = vmatprep.subr.mxu0 0.0
      %1318 = vmatpush2.msra.mxu0 0.0
      %1319 = vmatprep.subr.mxu0 0.0
      %1320 = vmatpush2.msra.mxu0 0.0
      %1321 = vmatprep.subr.mxu0 0.0
      %1322 = vmatpush2.msra.mxu0 0.0
      %1323 = vmatprep.subr.mxu0 0.0
      %1324 = vmatpush2.msra.mxu0 0.0
      %1325 = vmatprep.subr.mxu0 0.0
      %1326 = vmatpush2.msra.mxu0 0.0
      %1327 = vmatprep.subr.mxu0 0.0
      %1328 = vmatpush2.msra.mxu0 0.0
      %1329 = vmatprep.subr.mxu0 0.0
      %1330 = vmatpush2.msra.mxu0 0.0
      %1331 = vmatprep.subr.mxu0 0.0
      %1332 = vmatpush2.msra.mxu0 0.0
      %1333 = vmatprep.subr.mxu0 0.0
      %1334 = vmatpush2.msra.mxu0 0.0
      %1335 = vmatprep.subr.mxu0 0.0
      %1336 = vmatpush2.msra.mxu0 0.0
      %1337 = vmatprep.mubr.f32.mxu0 0.0
      %1338 = vmatmul.mubr.f32.gmra.mxu0 %v1271
      %v1339 = vpop.f32.mrf.mxu0
      %v1340 = vadd.f32 0.0, %v1339
      %v1341 = vpop.f32.mrf.mxu0
      %v1342 = vadd.f32 0.0, %v1341
      %1343 = vdwg.mxu0
      %1344 = vmatprep.subr.mxu0 0.0
      %1345 = vmatpush1.msra.mxu0 0.0
      %1346 = vmatprep.subr.mxu0 0.0
      %1347 = vmatpush1.msra.mxu0 0.0
      %1348 = vmatprep.subr.mxu0 0.0
      %1349 = vmatpush1.msra.mxu0 0.0
      %1350 = vmatprep.subr.mxu0 0.0
      %1351 = vmatpush1.msra.mxu0 0.0
      %1352 = vmatprep.subr.mxu0 0.0
      %1353 = vmatpush1.msra.mxu0 0.0
      %1354 = vmatprep.subr.mxu0 0.0
      %1355 = vmatpush1.msra.mxu0 0.0
      %1356 = vmatprep.subr.mxu0 0.0
      %1357 = vmatpush1.msra.mxu0 0.0
      %1358 = vmatprep.subr.mxu0 0.0
      %1359 = vmatpush1.msra.mxu0 0.0
      %1360 = vmatprep.subr.mxu0 0.0
      %1361 = vmatpush1.msra.mxu0 %v1245
      %1362 = vmatprep.subr.mxu0 0.0
      %1363 = vmatpush1.msra.mxu0 %v1242
      %1364 = vmatprep.subr.mxu0 0.0
      %1365 = vmatpush1.msra.mxu0 %v1239
      %1366 = vmatprep.subr.mxu0 0.0
      %1367 = vmatpush1.msra.mxu0 %v1236
      %1368 = vmatprep.subr.mxu0 0.0
      %1369 = vmatpush1.msra.mxu0 %v1233
      %1370 = vmatprep.subr.mxu0 0.0
      %1371 = vmatpush1.msra.mxu0 %v1230
      %1372 = vmatprep.subr.mxu0 0.0
      %1373 = vmatpush1.msra.mxu0 %v1227
      %1374 = vmatprep.subr.mxu0 0.0
      %1375 = vmatpush1.msra.mxu0 %v1224
      %1376 = vmatprep.subr.mxu0 0.0
      %1377 = vmatpush2.msra.mxu0 0.0
      %1378 = vmatprep.subr.mxu0 0.0
      %1379 = vmatpush2.msra.mxu0 0.0
      %1380 = vmatprep.subr.mxu0 0.0
      %1381 = vmatpush2.msra.mxu0 0.0
      %1382 = vmatprep.subr.mxu0 0.0
      %1383 = vmatpush2.msra.mxu0 0.0
      %1384 = vmatprep.subr.mxu0 0.0
      %1385 = vmatpush2.msra.mxu0 0.0
      %1386 = vmatprep.subr.mxu0 0.0
      %1387 = vmatpush2.msra.mxu0 0.0
      %1388 = vmatprep.subr.mxu0 0.0
      %1389 = vmatpush2.msra.mxu0 0.0
      %1390 = vmatprep.subr.mxu0 0.0
      %1391 = vmatpush2.msra.mxu0 0.0
      %1392 = vmatprep.subr.mxu0 0.0
      %1393 = vmatpush2.msra.mxu0 0.0
      %1394 = vmatprep.subr.mxu0 0.0
      %1395 = vmatpush2.msra.mxu0 0.0
      %1396 = vmatprep.subr.mxu0 0.0
      %1397 = vmatpush2.msra.mxu0 0.0
      %1398 = vmatprep.subr.mxu0 0.0
      %1399 = vmatpush2.msra.mxu0 0.0
      %1400 = vmatprep.subr.mxu0 0.0
      %1401 = vmatpush2.msra.mxu0 0.0
      %1402 = vmatprep.subr.mxu0 0.0
      %1403 = vmatpush2.msra.mxu0 0.0
      %1404 = vmatprep.subr.mxu0 0.0
      %1405 = vmatpush2.msra.mxu0 0.0
      %1406 = vmatprep.subr.mxu0 0.0
      %1407 = vmatpush2.msra.mxu0 0.0
      %1408 = vmatprep.mubr.f32.mxu0 0.0
      %1409 = vmatmul.mubr.f32.gmra.mxu0 %v1271
      %v1410 = vpop.f32.mrf.mxu0
      %v1411 = vadd.f32 0.0, %v1410
      %v1412 = vpop.f32.mrf.mxu0
      %1413 = vdwg.mxu0
      %v1414 = vadd.f32 %v1152, %v1340
      %v1415 = vadd.f32 %v1153, %v1342
      %v1416 = vadd.f32 %v1154, %v1411
      %s1417 = scalar_lea.vmem %s2, 32
      %v1418 = vld [vmem:[%s1417] sm:$0xff]
      %v1420 = vsel %vm491, %v1418, 0
      %1422 = vmatprep.subr.mxu0 0.0
      %1423 = vmatpush1.msra.mxu0 0.0
      %1424 = vmatprep.subr.mxu0 0.0
      %1425 = vmatpush1.msra.mxu0 0.0
      %1426 = vmatprep.subr.mxu0 0.0
      %1427 = vmatpush1.msra.mxu0 0.0
      %1428 = vmatprep.subr.mxu0 0.0
      %1429 = vmatpush1.msra.mxu0 0.0
      %1430 = vmatprep.subr.mxu0 0.0
      %1431 = vmatpush1.msra.mxu0 0.0
      %1432 = vmatprep.subr.mxu0 0.0
      %1433 = vmatpush1.msra.mxu0 0.0
      %1434 = vmatprep.subr.mxu0 0.0
      %1435 = vmatpush1.msra.mxu0 0.0
      %1436 = vmatprep.subr.mxu0 0.0
      %1437 = vmatpush1.msra.mxu0 0.0
      %1438 = vmatprep.subr.mxu0 %v342
      %1439 = vmatpush1.msra.mxu0 %v341
      %1440 = vmatprep.subr.mxu0 %v338
      %1441 = vmatpush1.msra.mxu0 %v337
      %1442 = vmatprep.subr.mxu0 %v334
      %1443 = vmatpush1.msra.mxu0 %v333
      %1444 = vmatprep.subr.mxu0 %v330
      %1445 = vmatpush1.msra.mxu0 %v329
      %1446 = vmatprep.subr.mxu0 %v326
      %1447 = vmatpush1.msra.mxu0 %v325
      %1448 = vmatprep.subr.mxu0 %v322
      %1449 = vmatpush1.msra.mxu0 %v321
      %1450 = vmatprep.subr.mxu0 %v318
      %1451 = vmatpush1.msra.mxu0 %v317
      %1452 = vmatprep.subr.mxu0 %v314
      %1453 = vmatpush1.msra.mxu0 %v313
      %1454 = vmatprep.subr.mxu0 0.0
      %1455 = vmatpush2.msra.mxu0 0.0
      %1456 = vmatprep.subr.mxu0 0.0
      %1457 = vmatpush2.msra.mxu0 0.0
      %1458 = vmatprep.subr.mxu0 0.0
      %1459 = vmatpush2.msra.mxu0 0.0
      %1460 = vmatprep.subr.mxu0 0.0
      %1461 = vmatpush2.msra.mxu0 0.0
      %1462 = vmatprep.subr.mxu0 0.0
      %1463 = vmatpush2.msra.mxu0 0.0
      %1464 = vmatprep.subr.mxu0 0.0
      %1465 = vmatpush2.msra.mxu0 0.0
      %1466 = vmatprep.subr.mxu0 0.0
      %1467 = vmatpush2.msra.mxu0 0.0
      %1468 = vmatprep.subr.mxu0 0.0
      %1469 = vmatpush2.msra.mxu0 0.0
      %1470 = vmatprep.subr.mxu0 0.0
      %1471 = vmatpush2.msra.mxu0 0.0
      %1472 = vmatprep.subr.mxu0 0.0
      %1473 = vmatpush2.msra.mxu0 0.0
      %1474 = vmatprep.subr.mxu0 0.0
      %1475 = vmatpush2.msra.mxu0 0.0
      %1476 = vmatprep.subr.mxu0 0.0
      %1477 = vmatpush2.msra.mxu0 0.0
      %1478 = vmatprep.subr.mxu0 0.0
      %1479 = vmatpush2.msra.mxu0 0.0
      %1480 = vmatprep.subr.mxu0 0.0
      %1481 = vmatpush2.msra.mxu0 0.0
      %1482 = vmatprep.subr.mxu0 0.0
      %1483 = vmatpush2.msra.mxu0 0.0
      %1484 = vmatprep.subr.mxu0 0.0
      %1485 = vmatpush2.msra.mxu0 0.0
      %1486 = vmatprep.mubr.f32.mxu0 0.0
      %1487 = vmatmul.mubr.f32.gmra.mxu0 %v1420
      %v1488 = vpop.f32.mrf.mxu0
      %v1489 = vadd.f32 0.0, %v1488
      %v1490 = vpop.f32.mrf.mxu0
      %v1491 = vadd.f32 0.0, %v1490
      %1492 = vdwg.mxu0
      %1493 = vmatprep.subr.mxu0 0.0
      %1494 = vmatpush1.msra.mxu0 0.0
      %1495 = vmatprep.subr.mxu0 0.0
      %1496 = vmatpush1.msra.mxu0 0.0
      %1497 = vmatprep.subr.mxu0 0.0
      %1498 = vmatpush1.msra.mxu0 0.0
      %1499 = vmatprep.subr.mxu0 0.0
      %1500 = vmatpush1.msra.mxu0 0.0
      %1501 = vmatprep.subr.mxu0 0.0
      %1502 = vmatpush1.msra.mxu0 0.0
      %1503 = vmatprep.subr.mxu0 0.0
      %1504 = vmatpush1.msra.mxu0 0.0
      %1505 = vmatprep.subr.mxu0 0.0
      %1506 = vmatpush1.msra.mxu0 0.0
      %1507 = vmatprep.subr.mxu0 0.0
      %1508 = vmatpush1.msra.mxu0 0.0
      %1509 = vmatprep.subr.mxu0 0.0
      %1510 = vmatpush1.msra.mxu0 %v343
      %1511 = vmatprep.subr.mxu0 0.0
      %1512 = vmatpush1.msra.mxu0 %v339
      %1513 = vmatprep.subr.mxu0 0.0
      %1514 = vmatpush1.msra.mxu0 %v335
      %1515 = vmatprep.subr.mxu0 0.0
      %1516 = vmatpush1.msra.mxu0 %v331
      %1517 = vmatprep.subr.mxu0 0.0
      %1518 = vmatpush1.msra.mxu0 %v327
      %1519 = vmatprep.subr.mxu0 0.0
      %1520 = vmatpush1.msra.mxu0 %v323
      %1521 = vmatprep.subr.mxu0 0.0
      %1522 = vmatpush1.msra.mxu0 %v319
      %1523 = vmatprep.subr.mxu0 0.0
      %1524 = vmatpush1.msra.mxu0 %v315
      %1525 = vmatprep.subr.mxu0 0.0
      %1526 = vmatpush2.msra.mxu0 0.0
      %1527 = vmatprep.subr.mxu0 0.0
      %1528 = vmatpush2.msra.mxu0 0.0
      %1529 = vmatprep.subr.mxu0 0.0
      %1530 = vmatpush2.msra.mxu0 0.0
      %1531 = vmatprep.subr.mxu0 0.0
      %1532 = vmatpush2.msra.mxu0 0.0
      %1533 = vmatprep.subr.mxu0 0.0
      %1534 = vmatpush2.msra.mxu0 0.0
      %1535 = vmatprep.subr.mxu0 0.0
      %1536 = vmatpush2.msra.mxu0 0.0
      %1537 = vmatprep.subr.mxu0 0.0
      %1538 = vmatpush2.msra.mxu0 0.0
      %1539 = vmatprep.subr.mxu0 0.0
      %1540 = vmatpush2.msra.mxu0 0.0
      %1541 = vmatprep.subr.mxu0 0.0
      %1542 = vmatpush2.msra.mxu0 0.0
      %1543 = vmatprep.subr.mxu0 0.0
      %1544 = vmatpush2.msra.mxu0 0.0
      %1545 = vmatprep.subr.mxu0 0.0
      %1546 = vmatpush2.msra.mxu0 0.0
      %1547 = vmatprep.subr.mxu0 0.0
      %1548 = vmatpush2.msra.mxu0 0.0
      %1549 = vmatprep.subr.mxu0 0.0
      %1550 = vmatpush2.msra.mxu0 0.0
      %1551 = vmatprep.subr.mxu0 0.0
      %1552 = vmatpush2.msra.mxu0 0.0
      %1553 = vmatprep.subr.mxu0 0.0
      %1554 = vmatpush2.msra.mxu0 0.0
      %1555 = vmatprep.subr.mxu0 0.0
      %1556 = vmatpush2.msra.mxu0 0.0
      %1557 = vmatprep.mubr.f32.mxu0 0.0
      %1558 = vmatmul.mubr.f32.gmra.mxu0 %v1420
      %v1559 = vpop.f32.mrf.mxu0
      %v1560 = vadd.f32 0.0, %v1559
      %v1561 = vpop.f32.mrf.mxu0
      %1562 = vdwg.mxu0
      %v1563 = vadd.f32 %v1414, %v1489
      %v1564 = vadd.f32 %v1415, %v1491
      %v1565 = vadd.f32 %v1416, %v1560
      %s1566 = scalar_lea.vmem %s2, 40
      %v1567 = vld [vmem:[%s1566] sm:$0xff]
      %v1568 = vld [vmem:[%s300 + $0x8] sm:$0xff]
      %v1569 = vld [vmem:[%s300 + $0x10] sm:$0xff]
      %v1570 = vld [vmem:[%s300 + $0x18] sm:$0xff]
      %v1571 = vld [vmem:[%s300 + $0x20] sm:$0xff]
      %v1572 = vld [vmem:[%s300 + $0x30] sm:$0xff]
      %v1573 = vld [vmem:[%s300 + $0x38] sm:$0xff]
      %v1574 = vld [vmem:[%s300 + $0x40] sm:$0xff]
      %v1575 = vld [vmem:[%s300 + $0x48] sm:$0xff]
      %v1576 = vld [vmem:[%s300 + $0x58] sm:$0xff]
      %v1577 = vld [vmem:[%s300 + $0x60] sm:$0xff]
      %v1578 = vld [vmem:[%s300 + $0x68] sm:$0xff]
      %v1579 = vld [vmem:[%s300 + $0x70] sm:$0xff]
      %v1580 = vld [vmem:[%s300 + $0x80] sm:$0xff]
      %v1581 = vld [vmem:[%s300 + $0x88] sm:$0xff]
      %v1582 = vld [vmem:[%s300 + $0x90] sm:$0xff]
      %v1583 = vld [vmem:[%s300 + $0x98] sm:$0xff]
      %v1584 = vld [vmem:[%s300 + $0xa8] sm:$0xff]
      %v1585 = vld [vmem:[%s300 + $0xb0] sm:$0xff]
      %v1586 = vld [vmem:[%s300 + $0xb8] sm:$0xff]
      %v1587 = vld [vmem:[%s300 + $0xc0] sm:$0xff]
      %v1588 = vld [vmem:[%s300 + $0xd0] sm:$0xff]
      %v1589 = vld [vmem:[%s300 + $0xd8] sm:$0xff]
      %v1590 = vld [vmem:[%s300 + $0xe0] sm:$0xff]
      %v1591 = vld [vmem:[%s300 + $0xe8] sm:$0xff]
      %v1592 = vld [vmem:[%s300 + $0xf8] sm:$0xff]
      %v1593 = vld [vmem:[%s300 + $0x100] sm:$0xff]
      %v1594 = vld [vmem:[%s300 + $0x108] sm:$0xff]
      %v1595 = vld [vmem:[%s300 + $0x110] sm:$0xff]
      %v1596 = vld [vmem:[%s300 + $0x120] sm:$0xff]
      %v1597 = vld [vmem:[%s300 + $0x128] sm:$0xff]
      %v1598 = vld [vmem:[%s300 + $0x130] sm:$0xff]
      %v1599 = vld [vmem:[%s300 + $0x138] sm:$0xff]
      %1632 = vrot.lane.b32.xlu0 %v1568, 127
      %v1633 = vpop.permute.xlu0 %1632
      %1634 = vrot.lane.b32.xlu0 %v1569, 127
      %v1635 = vpop.permute.xlu0 %1634
      %1636 = vrot.lane.b32.xlu0 %v1570, 127
      %v1637 = vpop.permute.xlu0 %1636
      %1638 = vrot.lane.b32.xlu0 %v1571, 127
      %v1639 = vpop.permute.xlu0 %1638
      %1640 = vrot.lane.b32.xlu0 %v1572, 127
      %v1641 = vpop.permute.xlu0 %1640
      %1642 = vrot.lane.b32.xlu0 %v1573, 127
      %v1643 = vpop.permute.xlu0 %1642
      %1644 = vrot.lane.b32.xlu0 %v1574, 127
      %v1645 = vpop.permute.xlu0 %1644
      %1646 = vrot.lane.b32.xlu0 %v1575, 127
      %v1647 = vpop.permute.xlu0 %1646
      %1648 = vrot.lane.b32.xlu0 %v1576, 127
      %v1649 = vpop.permute.xlu0 %1648
      %1650 = vrot.lane.b32.xlu0 %v1577, 127
      %v1651 = vpop.permute.xlu0 %1650
      %1652 = vrot.lane.b32.xlu0 %v1578, 127
      %v1653 = vpop.permute.xlu0 %1652
      %1654 = vrot.lane.b32.xlu0 %v1579, 127
      %v1655 = vpop.permute.xlu0 %1654
      %1656 = vrot.lane.b32.xlu0 %v1580, 127
      %v1657 = vpop.permute.xlu0 %1656
      %1658 = vrot.lane.b32.xlu0 %v1581, 127
      %v1659 = vpop.permute.xlu0 %1658
      %1660 = vrot.lane.b32.xlu0 %v1582, 127
      %v1661 = vpop.permute.xlu0 %1660
      %1662 = vrot.lane.b32.xlu0 %v1583, 127
      %v1663 = vpop.permute.xlu0 %1662
      %1664 = vrot.lane.b32.xlu0 %v1584, 127
      %v1665 = vpop.permute.xlu0 %1664
      %1666 = vrot.lane.b32.xlu0 %v1585, 127
      %v1667 = vpop.permute.xlu0 %1666
      %1668 = vrot.lane.b32.xlu0 %v1586, 127
      %v1669 = vpop.permute.xlu0 %1668
      %1670 = vrot.lane.b32.xlu0 %v1587, 127
      %v1671 = vpop.permute.xlu0 %1670
      %1672 = vrot.lane.b32.xlu0 %v1588, 127
      %v1673 = vpop.permute.xlu0 %1672
      %1674 = vrot.lane.b32.xlu0 %v1589, 127
      %v1675 = vpop.permute.xlu0 %1674
      %1676 = vrot.lane.b32.xlu0 %v1590, 127
      %v1677 = vpop.permute.xlu0 %1676
      %1678 = vrot.lane.b32.xlu0 %v1591, 127
      %v1679 = vpop.permute.xlu0 %1678
      %1680 = vrot.lane.b32.xlu0 %v1592, 127
      %v1681 = vpop.permute.xlu0 %1680
      %1682 = vrot.lane.b32.xlu0 %v1593, 127
      %v1683 = vpop.permute.xlu0 %1682
      %1684 = vrot.lane.b32.xlu0 %v1594, 127
      %v1685 = vpop.permute.xlu0 %1684
      %1686 = vrot.lane.b32.xlu0 %v1595, 127
      %v1687 = vpop.permute.xlu0 %1686
      %1688 = vrot.lane.b32.xlu0 %v1596, 127
      %v1689 = vpop.permute.xlu0 %1688
      %1690 = vrot.lane.b32.xlu0 %v1597, 127
      %v1691 = vpop.permute.xlu0 %1690
      %1692 = vrot.lane.b32.xlu0 %v1598, 127
      %v1693 = vpop.permute.xlu0 %1692
      %1694 = vrot.lane.b32.xlu0 %v1599, 127
      %v1695 = vpop.permute.xlu0 %1694
      %vm1696 = vcmask 1039360
      %v1697 = vsel %vm1696, %v1633, %v1635
      %v1698 = vsel %vm1696, %v1635, %v1637
      %v1699 = vsel %vm1696, %v1637, %v1639
      %v1700 = vsel %vm1696, %v1641, %v1643
      %v1701 = vsel %vm1696, %v1643, %v1645
      %v1702 = vsel %vm1696, %v1645, %v1647
      %v1703 = vsel %vm1696, %v1649, %v1651
      %v1704 = vsel %vm1696, %v1651, %v1653
      %v1705 = vsel %vm1696, %v1653, %v1655
      %v1706 = vsel %vm1696, %v1657, %v1659
      %v1707 = vsel %vm1696, %v1659, %v1661
      %v1708 = vsel %vm1696, %v1661, %v1663
      %v1709 = vsel %vm1696, %v1665, %v1667
      %v1710 = vsel %vm1696, %v1667, %v1669
      %v1711 = vsel %vm1696, %v1669, %v1671
      %v1712 = vsel %vm1696, %v1673, %v1675
      %v1713 = vsel %vm1696, %v1675, %v1677
      %v1714 = vsel %vm1696, %v1677, %v1679
      %v1715 = vsel %vm1696, %v1681, %v1683
      %v1716 = vsel %vm1696, %v1683, %v1685
      %v1717 = vsel %vm1696, %v1685, %v1687
      %v1718 = vsel %vm1696, %v1689, %v1691
      %v1719 = vsel %vm1696, %v1691, %v1693
      %v1720 = vsel %vm1696, %v1693, %v1695
      %v1746 = vsel %vm491, %v1567, 0
      %1748 = vmatprep.subr.mxu0 0.0
      %1749 = vmatpush1.msra.mxu0 0.0
      %1750 = vmatprep.subr.mxu0 0.0
      %1751 = vmatpush1.msra.mxu0 0.0
      %1752 = vmatprep.subr.mxu0 0.0
      %1753 = vmatpush1.msra.mxu0 0.0
      %1754 = vmatprep.subr.mxu0 0.0
      %1755 = vmatpush1.msra.mxu0 0.0
      %1756 = vmatprep.subr.mxu0 0.0
      %1757 = vmatpush1.msra.mxu0 0.0
      %1758 = vmatprep.subr.mxu0 0.0
      %1759 = vmatpush1.msra.mxu0 0.0
      %1760 = vmatprep.subr.mxu0 0.0
      %1761 = vmatpush1.msra.mxu0 0.0
      %1762 = vmatprep.subr.mxu0 0.0
      %1763 = vmatpush1.msra.mxu0 0.0
      %1764 = vmatprep.subr.mxu0 %v1719
      %1765 = vmatpush1.msra.mxu0 %v1718
      %1766 = vmatprep.subr.mxu0 %v1716
      %1767 = vmatpush1.msra.mxu0 %v1715
      %1768 = vmatprep.subr.mxu0 %v1713
      %1769 = vmatpush1.msra.mxu0 %v1712
      %1770 = vmatprep.subr.mxu0 %v1710
      %1771 = vmatpush1.msra.mxu0 %v1709
      %1772 = vmatprep.subr.mxu0 %v1707
      %1773 = vmatpush1.msra.mxu0 %v1706
      %1774 = vmatprep.subr.mxu0 %v1704
      %1775 = vmatpush1.msra.mxu0 %v1703
      %1776 = vmatprep.subr.mxu0 %v1701
      %1777 = vmatpush1.msra.mxu0 %v1700
      %1778 = vmatprep.subr.mxu0 %v1698
      %1779 = vmatpush1.msra.mxu0 %v1697
      %1780 = vmatprep.subr.mxu0 0.0
      %1781 = vmatpush2.msra.mxu0 0.0
      %1782 = vmatprep.subr.mxu0 0.0
      %1783 = vmatpush2.msra.mxu0 0.0
      %1784 = vmatprep.subr.mxu0 0.0
      %1785 = vmatpush2.msra.mxu0 0.0
      %1786 = vmatprep.subr.mxu0 0.0
      %1787 = vmatpush2.msra.mxu0 0.0
      %1788 = vmatprep.subr.mxu0 0.0
      %1789 = vmatpush2.msra.mxu0 0.0
      %1790 = vmatprep.subr.mxu0 0.0
      %1791 = vmatpush2.msra.mxu0 0.0
      %1792 = vmatprep.subr.mxu0 0.0
      %1793 = vmatpush2.msra.mxu0 0.0
      %1794 = vmatprep.subr.mxu0 0.0
      %1795 = vmatpush2.msra.mxu0 0.0
      %1796 = vmatprep.subr.mxu0 0.0
      %1797 = vmatpush2.msra.mxu0 0.0
      %1798 = vmatprep.subr.mxu0 0.0
      %1799 = vmatpush2.msra.mxu0 0.0
      %1800 = vmatprep.subr.mxu0 0.0
      %1801 = vmatpush2.msra.mxu0 0.0
      %1802 = vmatprep.subr.mxu0 0.0
      %1803 = vmatpush2.msra.mxu0 0.0
      %1804 = vmatprep.subr.mxu0 0.0
      %1805 = vmatpush2.msra.mxu0 0.0
      %1806 = vmatprep.subr.mxu0 0.0
      %1807 = vmatpush2.msra.mxu0 0.0
      %1808 = vmatprep.subr.mxu0 0.0
      %1809 = vmatpush2.msra.mxu0 0.0
      %1810 = vmatprep.subr.mxu0 0.0
      %1811 = vmatpush2.msra.mxu0 0.0
      %1812 = vmatprep.mubr.f32.mxu0 0.0
      %1813 = vmatmul.mubr.f32.gmra.mxu0 %v1746
      %v1814 = vpop.f32.mrf.mxu0
      %v1815 = vadd.f32 0.0, %v1814
      %v1816 = vpop.f32.mrf.mxu0
      %v1817 = vadd.f32 0.0, %v1816
      %1818 = vdwg.mxu0
      %1819 = vmatprep.subr.mxu0 0.0
      %1820 = vmatpush1.msra.mxu0 0.0
      %1821 = vmatprep.subr.mxu0 0.0
      %1822 = vmatpush1.msra.mxu0 0.0
      %1823 = vmatprep.subr.mxu0 0.0
      %1824 = vmatpush1.msra.mxu0 0.0
      %1825 = vmatprep.subr.mxu0 0.0
      %1826 = vmatpush1.msra.mxu0 0.0
      %1827 = vmatprep.subr.mxu0 0.0
      %1828 = vmatpush1.msra.mxu0 0.0
      %1829 = vmatprep.subr.mxu0 0.0
      %1830 = vmatpush1.msra.mxu0 0.0
      %1831 = vmatprep.subr.mxu0 0.0
      %1832 = vmatpush1.msra.mxu0 0.0
      %1833 = vmatprep.subr.mxu0 0.0
      %1834 = vmatpush1.msra.mxu0 0.0
      %1835 = vmatprep.subr.mxu0 0.0
      %1836 = vmatpush1.msra.mxu0 %v1720
      %1837 = vmatprep.subr.mxu0 0.0
      %1838 = vmatpush1.msra.mxu0 %v1717
      %1839 = vmatprep.subr.mxu0 0.0
      %1840 = vmatpush1.msra.mxu0 %v1714
      %1841 = vmatprep.subr.mxu0 0.0
      %1842 = vmatpush1.msra.mxu0 %v1711
      %1843 = vmatprep.subr.mxu0 0.0
      %1844 = vmatpush1.msra.mxu0 %v1708
      %1845 = vmatprep.subr.mxu0 0.0
      %1846 = vmatpush1.msra.mxu0 %v1705
      %1847 = vmatprep.subr.mxu0 0.0
      %1848 = vmatpush1.msra.mxu0 %v1702
      %1849 = vmatprep.subr.mxu0 0.0
      %1850 = vmatpush1.msra.mxu0 %v1699
      %1851 = vmatprep.subr.mxu0 0.0
      %1852 = vmatpush2.msra.mxu0 0.0
      %1853 = vmatprep.subr.mxu0 0.0
      %1854 = vmatpush2.msra.mxu0 0.0
      %1855 = vmatprep.subr.mxu0 0.0
      %1856 = vmatpush2.msra.mxu0 0.0
      %1857 = vmatprep.subr.mxu0 0.0
      %1858 = vmatpush2.msra.mxu0 0.0
      %1859 = vmatprep.subr.mxu0 0.0
      %1860 = vmatpush2.msra.mxu0 0.0
      %1861 = vmatprep.subr.mxu0 0.0
      %1862 = vmatpush2.msra.mxu0 0.0
      %1863 = vmatprep.subr.mxu0 0.0
      %1864 = vmatpush2.msra.mxu0 0.0
      %1865 = vmatprep.subr.mxu0 0.0
      %1866 = vmatpush2.msra.mxu0 0.0
      %1867 = vmatprep.subr.mxu0 0.0
      %1868 = vmatpush2.msra.mxu0 0.0
      %1869 = vmatprep.subr.mxu0 0.0
      %1870 = vmatpush2.msra.mxu0 0.0
      %1871 = vmatprep.subr.mxu0 0.0
      %1872 = vmatpush2.msra.mxu0 0.0
      %1873 = vmatprep.subr.mxu0 0.0
      %1874 = vmatpush2.msra.mxu0 0.0
      %1875 = vmatprep.subr.mxu0 0.0
      %1876 = vmatpush2.msra.mxu0 0.0
      %1877 = vmatprep.subr.mxu0 0.0
      %1878 = vmatpush2.msra.mxu0 0.0
      %1879 = vmatprep.subr.mxu0 0.0
      %1880 = vmatpush2.msra.mxu0 0.0
      %1881 = vmatprep.subr.mxu0 0.0
      %1882 = vmatpush2.msra.mxu0 0.0
      %1883 = vmatprep.mubr.f32.mxu0 0.0
      %1884 = vmatmul.mubr.f32.gmra.mxu0 %v1746
      %v1885 = vpop.f32.mrf.mxu0
      %v1886 = vadd.f32 0.0, %v1885
      %v1887 = vpop.f32.mrf.mxu0
      %1888 = vdwg.mxu0
      %v1889 = vadd.f32 %v1563, %v1815
      %v1890 = vadd.f32 %v1564, %v1817
      %v1891 = vadd.f32 %v1565, %v1886
      %s1892 = scalar_lea.vmem %s2, 48
      %v1893 = vld [vmem:[%s1892] sm:$0xff]
      %1894 = vrot.lane.b32.xlu0 %v1568, 105
      %v1895 = vpop.permute.xlu0 %1894
      %1896 = vrot.lane.b32.xlu0 %v1569, 105
      %v1897 = vpop.permute.xlu0 %1896
      %1898 = vrot.lane.b32.xlu0 %v1570, 105
      %v1899 = vpop.permute.xlu0 %1898
      %1900 = vrot.lane.b32.xlu0 %v1571, 105
      %v1901 = vpop.permute.xlu0 %1900
      %1902 = vrot.lane.b32.xlu0 %v1572, 105
      %v1903 = vpop.permute.xlu0 %1902
      %1904 = vrot.lane.b32.xlu0 %v1573, 105
      %v1905 = vpop.permute.xlu0 %1904
      %1906 = vrot.lane.b32.xlu0 %v1574, 105
      %v1907 = vpop.permute.xlu0 %1906
      %1908 = vrot.lane.b32.xlu0 %v1575, 105
      %v1909 = vpop.permute.xlu0 %1908
      %1910 = vrot.lane.b32.xlu0 %v1576, 105
      %v1911 = vpop.permute.xlu0 %1910
      %1912 = vrot.lane.b32.xlu0 %v1577, 105
      %v1913 = vpop.permute.xlu0 %1912
      %1914 = vrot.lane.b32.xlu0 %v1578, 105
      %v1915 = vpop.permute.xlu0 %1914
      %1916 = vrot.lane.b32.xlu0 %v1579, 105
      %v1917 = vpop.permute.xlu0 %1916
      %1918 = vrot.lane.b32.xlu0 %v1580, 105
      %v1919 = vpop.permute.xlu0 %1918
      %1920 = vrot.lane.b32.xlu0 %v1581, 105
      %v1921 = vpop.permute.xlu0 %1920
      %1922 = vrot.lane.b32.xlu0 %v1582, 105
      %v1923 = vpop.permute.xlu0 %1922
      %1924 = vrot.lane.b32.xlu0 %v1583, 105
      %v1925 = vpop.permute.xlu0 %1924
      %1926 = vrot.lane.b32.xlu0 %v1584, 105
      %v1927 = vpop.permute.xlu0 %1926
      %1928 = vrot.lane.b32.xlu0 %v1585, 105
      %v1929 = vpop.permute.xlu0 %1928
      %1930 = vrot.lane.b32.xlu0 %v1586, 105
      %v1931 = vpop.permute.xlu0 %1930
      %1932 = vrot.lane.b32.xlu0 %v1587, 105
      %v1933 = vpop.permute.xlu0 %1932
      %1934 = vrot.lane.b32.xlu0 %v1588, 105
      %v1935 = vpop.permute.xlu0 %1934
      %1936 = vrot.lane.b32.xlu0 %v1589, 105
      %v1937 = vpop.permute.xlu0 %1936
      %1938 = vrot.lane.b32.xlu0 %v1590, 105
      %v1939 = vpop.permute.xlu0 %1938
      %1940 = vrot.lane.b32.xlu0 %v1591, 105
      %v1941 = vpop.permute.xlu0 %1940
      %1942 = vrot.lane.b32.xlu0 %v1592, 105
      %v1943 = vpop.permute.xlu0 %1942
      %1944 = vrot.lane.b32.xlu0 %v1593, 105
      %v1945 = vpop.permute.xlu0 %1944
      %1946 = vrot.lane.b32.xlu0 %v1594, 105
      %v1947 = vpop.permute.xlu0 %1946
      %1948 = vrot.lane.b32.xlu0 %v1595, 105
      %v1949 = vpop.permute.xlu0 %1948
      %1950 = vrot.lane.b32.xlu0 %v1596, 105
      %v1951 = vpop.permute.xlu0 %1950
      %1952 = vrot.lane.b32.xlu0 %v1597, 105
      %v1953 = vpop.permute.xlu0 %1952
      %1954 = vrot.lane.b32.xlu0 %v1598, 105
      %v1955 = vpop.permute.xlu0 %1954
      %1956 = vrot.lane.b32.xlu0 %v1599, 105
      %v1957 = vpop.permute.xlu0 %1956
      %vm1958 = vcmask 859136
      %v1959 = vsel %vm1958, %v1895, %v1897
      %v1960 = vsel %vm1958, %v1897, %v1899
      %v1961 = vsel %vm1958, %v1899, %v1901
      %v1962 = vsel %vm1958, %v1903, %v1905
      %v1963 = vsel %vm1958, %v1905, %v1907
      %v1964 = vsel %vm1958, %v1907, %v1909
      %v1965 = vsel %vm1958, %v1911, %v1913
      %v1966 = vsel %vm1958, %v1913, %v1915
      %v1967 = vsel %vm1958, %v1915, %v1917
      %v1968 = vsel %vm1958, %v1919, %v1921
      %v1969 = vsel %vm1958, %v1921, %v1923
      %v1970 = vsel %vm1958, %v1923, %v1925
      %v1971 = vsel %vm1958, %v1927, %v1929
      %v1972 = vsel %vm1958, %v1929, %v1931
      %v1973 = vsel %vm1958, %v1931, %v1933
      %v1974 = vsel %vm1958, %v1935, %v1937
      %v1975 = vsel %vm1958, %v1937, %v1939
      %v1976 = vsel %vm1958, %v1939, %v1941
      %v1977 = vsel %vm1958, %v1943, %v1945
      %v1978 = vsel %vm1958, %v1945, %v1947
      %v1979 = vsel %vm1958, %v1947, %v1949
      %v1980 = vsel %vm1958, %v1951, %v1953
      %v1981 = vsel %vm1958, %v1953, %v1955
      %v1982 = vsel %vm1958, %v1955, %v1957
      %v2008 = vsel %vm491, %v1893, 0
      %2010 = vmatprep.subr.mxu0 0.0
      %2011 = vmatpush1.msra.mxu0 0.0
      %2012 = vmatprep.subr.mxu0 0.0
      %2013 = vmatpush1.msra.mxu0 0.0
      %2014 = vmatprep.subr.mxu0 0.0
      %2015 = vmatpush1.msra.mxu0 0.0
      %2016 = vmatprep.subr.mxu0 0.0
      %2017 = vmatpush1.msra.mxu0 0.0
      %2018 = vmatprep.subr.mxu0 0.0
      %2019 = vmatpush1.msra.mxu0 0.0
      %2020 = vmatprep.subr.mxu0 0.0
      %2021 = vmatpush1.msra.mxu0 0.0
      %2022 = vmatprep.subr.mxu0 0.0
      %2023 = vmatpush1.msra.mxu0 0.0
      %2024 = vmatprep.subr.mxu0 0.0
      %2025 = vmatpush1.msra.mxu0 0.0
      %2026 = vmatprep.subr.mxu0 %v1981
      %2027 = vmatpush1.msra.mxu0 %v1980
      %2028 = vmatprep.subr.mxu0 %v1978
      %2029 = vmatpush1.msra.mxu0 %v1977
      %2030 = vmatprep.subr.mxu0 %v1975
      %2031 = vmatpush1.msra.mxu0 %v1974
      %2032 = vmatprep.subr.mxu0 %v1972
      %2033 = vmatpush1.msra.mxu0 %v1971
      %2034 = vmatprep.subr.mxu0 %v1969
      %2035 = vmatpush1.msra.mxu0 %v1968
      %2036 = vmatprep.subr.mxu0 %v1966
      %2037 = vmatpush1.msra.mxu0 %v1965
      %2038 = vmatprep.subr.mxu0 %v1963
      %2039 = vmatpush1.msra.mxu0 %v1962
      %2040 = vmatprep.subr.mxu0 %v1960
      %2041 = vmatpush1.msra.mxu0 %v1959
      %2042 = vmatprep.subr.mxu0 0.0
      %2043 = vmatpush2.msra.mxu0 0.0
      %2044 = vmatprep.subr.mxu0 0.0
      %2045 = vmatpush2.msra.mxu0 0.0
      %2046 = vmatprep.subr.mxu0 0.0
      %2047 = vmatpush2.msra.mxu0 0.0
      %2048 = vmatprep.subr.mxu0 0.0
      %2049 = vmatpush2.msra.mxu0 0.0
      %2050 = vmatprep.subr.mxu0 0.0
      %2051 = vmatpush2.msra.mxu0 0.0
      %2052 = vmatprep.subr.mxu0 0.0
      %2053 = vmatpush2.msra.mxu0 0.0
      %2054 = vmatprep.subr.mxu0 0.0
      %2055 = vmatpush2.msra.mxu0 0.0
      %2056 = vmatprep.subr.mxu0 0.0
      %2057 = vmatpush2.msra.mxu0 0.0
      %2058 = vmatprep.subr.mxu0 0.0
      %2059 = vmatpush2.msra.mxu0 0.0
      %2060 = vmatprep.subr.mxu0 0.0
      %2061 = vmatpush2.msra.mxu0 0.0
      %2062 = vmatprep.subr.mxu0 0.0
      %2063 = vmatpush2.msra.mxu0 0.0
      %2064 = vmatprep.subr.mxu0 0.0
      %2065 = vmatpush2.msra.mxu0 0.0
      %2066 = vmatprep.subr.mxu0 0.0
      %2067 = vmatpush2.msra.mxu0 0.0
      %2068 = vmatprep.subr.mxu0 0.0
      %2069 = vmatpush2.msra.mxu0 0.0
      %2070 = vmatprep.subr.mxu0 0.0
      %2071 = vmatpush2.msra.mxu0 0.0
      %2072 = vmatprep.subr.mxu0 0.0
      %2073 = vmatpush2.msra.mxu0 0.0
      %2074 = vmatprep.mubr.f32.mxu0 0.0
      %2075 = vmatmul.mubr.f32.gmra.mxu0 %v2008
      %v2076 = vpop.f32.mrf.mxu0
      %v2077 = vadd.f32 0.0, %v2076
      %v2078 = vpop.f32.mrf.mxu0
      %v2079 = vadd.f32 0.0, %v2078
      %2080 = vdwg.mxu0
      %2081 = vmatprep.subr.mxu0 0.0
      %2082 = vmatpush1.msra.mxu0 0.0
      %2083 = vmatprep.subr.mxu0 0.0
      %2084 = vmatpush1.msra.mxu0 0.0
      %2085 = vmatprep.subr.mxu0 0.0
      %2086 = vmatpush1.msra.mxu0 0.0
      %2087 = vmatprep.subr.mxu0 0.0
      %2088 = vmatpush1.msra.mxu0 0.0
      %2089 = vmatprep.subr.mxu0 0.0
      %2090 = vmatpush1.msra.mxu0 0.0
      %2091 = vmatprep.subr.mxu0 0.0
      %2092 = vmatpush1.msra.mxu0 0.0
      %2093 = vmatprep.subr.mxu0 0.0
      %2094 = vmatpush1.msra.mxu0 0.0
      %2095 = vmatprep.subr.mxu0 0.0
      %2096 = vmatpush1.msra.mxu0 0.0
      %2097 = vmatprep.subr.mxu0 0.0
      %2098 = vmatpush1.msra.mxu0 %v1982
      %2099 = vmatprep.subr.mxu0 0.0
      %2100 = vmatpush1.msra.mxu0 %v1979
      %2101 = vmatprep.subr.mxu0 0.0
      %2102 = vmatpush1.msra.mxu0 %v1976
      %2103 = vmatprep.subr.mxu0 0.0
      %2104 = vmatpush1.msra.mxu0 %v1973
      %2105 = vmatprep.subr.mxu0 0.0
      %2106 = vmatpush1.msra.mxu0 %v1970
      %2107 = vmatprep.subr.mxu0 0.0
      %2108 = vmatpush1.msra.mxu0 %v1967
      %2109 = vmatprep.subr.mxu0 0.0
      %2110 = vmatpush1.msra.mxu0 %v1964
      %2111 = vmatprep.subr.mxu0 0.0
      %2112 = vmatpush1.msra.mxu0 %v1961
      %2113 = vmatprep.subr.mxu0 0.0
      %2114 = vmatpush2.msra.mxu0 0.0
      %2115 = vmatprep.subr.mxu0 0.0
      %2116 = vmatpush2.msra.mxu0 0.0
      %2117 = vmatprep.subr.mxu0 0.0
      %2118 = vmatpush2.msra.mxu0 0.0
      %2119 = vmatprep.subr.mxu0 0.0
      %2120 = vmatpush2.msra.mxu0 0.0
      %2121 = vmatprep.subr.mxu0 0.0
      %2122 = vmatpush2.msra.mxu0 0.0
      %2123 = vmatprep.subr.mxu0 0.0
      %2124 = vmatpush2.msra.mxu0 0.0
      %2125 = vmatprep.subr.mxu0 0.0
      %2126 = vmatpush2.msra.mxu0 0.0
      %2127 = vmatprep.subr.mxu0 0.0
      %2128 = vmatpush2.msra.mxu0 0.0
      %2129 = vmatprep.subr.mxu0 0.0
      %2130 = vmatpush2.msra.mxu0 0.0
      %2131 = vmatprep.subr.mxu0 0.0
      %2132 = vmatpush2.msra.mxu0 0.0
      %2133 = vmatprep.subr.mxu0 0.0
      %2134 = vmatpush2.msra.mxu0 0.0
      %2135 = vmatprep.subr.mxu0 0.0
      %2136 = vmatpush2.msra.mxu0 0.0
      %2137 = vmatprep.subr.mxu0 0.0
      %2138 = vmatpush2.msra.mxu0 0.0
      %2139 = vmatprep.subr.mxu0 0.0
      %2140 = vmatpush2.msra.mxu0 0.0
      %2141 = vmatprep.subr.mxu0 0.0
      %2142 = vmatpush2.msra.mxu0 0.0
      %2143 = vmatprep.subr.mxu0 0.0
      %2144 = vmatpush2.msra.mxu0 0.0
      %2145 = vmatprep.mubr.f32.mxu0 0.0
      %2146 = vmatmul.mubr.f32.gmra.mxu0 %v2008
      %v2147 = vpop.f32.mrf.mxu0
      %v2148 = vadd.f32 0.0, %v2147
      %v2149 = vpop.f32.mrf.mxu0
      %2150 = vdwg.mxu0
      %v2151 = vadd.f32 %v1889, %v2077
      %v2152 = vadd.f32 %v1890, %v2079
      %v2153 = vadd.f32 %v1891, %v2148
      %s2154 = scalar_lea.vmem %s2, 56
      %v2155 = vld [vmem:[%s2154] sm:$0xff]
      %2156 = vrot.lane.b32.xlu0 %v1568, 104
      %v2157 = vpop.permute.xlu0 %2156
      %2158 = vrot.lane.b32.xlu0 %v1569, 104
      %v2159 = vpop.permute.xlu0 %2158
      %2160 = vrot.lane.b32.xlu0 %v1570, 104
      %v2161 = vpop.permute.xlu0 %2160
      %2162 = vrot.lane.b32.xlu0 %v1571, 104
      %v2163 = vpop.permute.xlu0 %2162
      %2164 = vrot.lane.b32.xlu0 %v1572, 104
      %v2165 = vpop.permute.xlu0 %2164
      %2166 = vrot.lane.b32.xlu0 %v1573, 104
      %v2167 = vpop.permute.xlu0 %2166
      %2168 = vrot.lane.b32.xlu0 %v1574, 104
      %v2169 = vpop.permute.xlu0 %2168
      %2170 = vrot.lane.b32.xlu0 %v1575, 104
      %v2171 = vpop.permute.xlu0 %2170
      %2172 = vrot.lane.b32.xlu0 %v1576, 104
      %v2173 = vpop.permute.xlu0 %2172
      %2174 = vrot.lane.b32.xlu0 %v1577, 104
      %v2175 = vpop.permute.xlu0 %2174
      %2176 = vrot.lane.b32.xlu0 %v1578, 104
      %v2177 = vpop.permute.xlu0 %2176
      %2178 = vrot.lane.b32.xlu0 %v1579, 104
      %v2179 = vpop.permute.xlu0 %2178
      %2180 = vrot.lane.b32.xlu0 %v1580, 104
      %v2181 = vpop.permute.xlu0 %2180
      %2182 = vrot.lane.b32.xlu0 %v1581, 104
      %v2183 = vpop.permute.xlu0 %2182
      %2184 = vrot.lane.b32.xlu0 %v1582, 104
      %v2185 = vpop.permute.xlu0 %2184
      %2186 = vrot.lane.b32.xlu0 %v1583, 104
      %v2187 = vpop.permute.xlu0 %2186
      %2188 = vrot.lane.b32.xlu0 %v1584, 104
      %v2189 = vpop.permute.xlu0 %2188
      %2190 = vrot.lane.b32.xlu0 %v1585, 104
      %v2191 = vpop.permute.xlu0 %2190
      %2192 = vrot.lane.b32.xlu0 %v1586, 104
      %v2193 = vpop.permute.xlu0 %2192
      %2194 = vrot.lane.b32.xlu0 %v1587, 104
      %v2195 = vpop.permute.xlu0 %2194
      %2196 = vrot.lane.b32.xlu0 %v1588, 104
      %v2197 = vpop.permute.xlu0 %2196
      %2198 = vrot.lane.b32.xlu0 %v1589, 104
      %v2199 = vpop.permute.xlu0 %2198
      %2200 = vrot.lane.b32.xlu0 %v1590, 104
      %v2201 = vpop.permute.xlu0 %2200
      %2202 = vrot.lane.b32.xlu0 %v1591, 104
      %v2203 = vpop.permute.xlu0 %2202
      %2204 = vrot.lane.b32.xlu0 %v1592, 104
      %v2205 = vpop.permute.xlu0 %2204
      %2206 = vrot.lane.b32.xlu0 %v1593, 104
      %v2207 = vpop.permute.xlu0 %2206
      %2208 = vrot.lane.b32.xlu0 %v1594, 104
      %v2209 = vpop.permute.xlu0 %2208
      %2210 = vrot.lane.b32.xlu0 %v1595, 104
      %v2211 = vpop.permute.xlu0 %2210
      %2212 = vrot.lane.b32.xlu0 %v1596, 104
      %v2213 = vpop.permute.xlu0 %2212
      %2214 = vrot.lane.b32.xlu0 %v1597, 104
      %v2215 = vpop.permute.xlu0 %2214
      %2216 = vrot.lane.b32.xlu0 %v1598, 104
      %v2217 = vpop.permute.xlu0 %2216
      %2218 = vrot.lane.b32.xlu0 %v1599, 104
      %v2219 = vpop.permute.xlu0 %2218
      %vm2220 = vcmask 850944
      %v2221 = vsel %vm2220, %v2157, %v2159
      %v2222 = vsel %vm2220, %v2159, %v2161
      %v2223 = vsel %vm2220, %v2161, %v2163
      %v2224 = vsel %vm2220, %v2165, %v2167
      %v2225 = vsel %vm2220, %v2167, %v2169
      %v2226 = vsel %vm2220, %v2169, %v2171
      %v2227 = vsel %vm2220, %v2173, %v2175
      %v2228 = vsel %vm2220, %v2175, %v2177
      %v2229 = vsel %vm2220, %v2177, %v2179
      %v2230 = vsel %vm2220, %v2181, %v2183
      %v2231 = vsel %vm2220, %v2183, %v2185
      %v2232 = vsel %vm2220, %v2185, %v2187
      %v2233 = vsel %vm2220, %v2189, %v2191
      %v2234 = vsel %vm2220, %v2191, %v2193
      %v2235 = vsel %vm2220, %v2193, %v2195
      %v2236 = vsel %vm2220, %v2197, %v2199
      %v2237 = vsel %vm2220, %v2199, %v2201
      %v2238 = vsel %vm2220, %v2201, %v2203
      %v2239 = vsel %vm2220, %v2205, %v2207
      %v2240 = vsel %vm2220, %v2207, %v2209
      %v2241 = vsel %vm2220, %v2209, %v2211
      %v2242 = vsel %vm2220, %v2213, %v2215
      %v2243 = vsel %vm2220, %v2215, %v2217
      %v2244 = vsel %vm2220, %v2217, %v2219
      %v2270 = vsel %vm491, %v2155, 0
      %2272 = vmatprep.subr.mxu0 0.0
      %2273 = vmatpush1.msra.mxu0 0.0
      %2274 = vmatprep.subr.mxu0 0.0
      %2275 = vmatpush1.msra.mxu0 0.0
      %2276 = vmatprep.subr.mxu0 0.0
      %2277 = vmatpush1.msra.mxu0 0.0
      %2278 = vmatprep.subr.mxu0 0.0
      %2279 = vmatpush1.msra.mxu0 0.0
      %2280 = vmatprep.subr.mxu0 0.0
      %2281 = vmatpush1.msra.mxu0 0.0
      %2282 = vmatprep.subr.mxu0 0.0
      %2283 = vmatpush1.msra.mxu0 0.0
      %2284 = vmatprep.subr.mxu0 0.0
      %2285 = vmatpush1.msra.mxu0 0.0
      %2286 = vmatprep.subr.mxu0 0.0
      %2287 = vmatpush1.msra.mxu0 0.0
      %2288 = vmatprep.subr.mxu0 %v2243
      %2289 = vmatpush1.msra.mxu0 %v2242
      %2290 = vmatprep.subr.mxu0 %v2240
      %2291 = vmatpush1.msra.mxu0 %v2239
      %2292 = vmatprep.subr.mxu0 %v2237
      %2293 = vmatpush1.msra.mxu0 %v2236
      %2294 = vmatprep.subr.mxu0 %v2234
      %2295 = vmatpush1.msra.mxu0 %v2233
      %2296 = vmatprep.subr.mxu0 %v2231
      %2297 = vmatpush1.msra.mxu0 %v2230
      %2298 = vmatprep.subr.mxu0 %v2228
      %2299 = vmatpush1.msra.mxu0 %v2227
      %2300 = vmatprep.subr.mxu0 %v2225
      %2301 = vmatpush1.msra.mxu0 %v2224
      %2302 = vmatprep.subr.mxu0 %v2222
      %2303 = vmatpush1.msra.mxu0 %v2221
      %2304 = vmatprep.subr.mxu0 0.0
      %2305 = vmatpush2.msra.mxu0 0.0
      %2306 = vmatprep.subr.mxu0 0.0
      %2307 = vmatpush2.msra.mxu0 0.0
      %2308 = vmatprep.subr.mxu0 0.0
      %2309 = vmatpush2.msra.mxu0 0.0
      %2310 = vmatprep.subr.mxu0 0.0
      %2311 = vmatpush2.msra.mxu0 0.0
      %2312 = vmatprep.subr.mxu0 0.0
      %2313 = vmatpush2.msra.mxu0 0.0
      %2314 = vmatprep.subr.mxu0 0.0
      %2315 = vmatpush2.msra.mxu0 0.0
      %2316 = vmatprep.subr.mxu0 0.0
      %2317 = vmatpush2.msra.mxu0 0.0
      %2318 = vmatprep.subr.mxu0 0.0
      %2319 = vmatpush2.msra.mxu0 0.0
      %2320 = vmatprep.subr.mxu0 0.0
      %2321 = vmatpush2.msra.mxu0 0.0
      %2322 = vmatprep.subr.mxu0 0.0
      %2323 = vmatpush2.msra.mxu0 0.0
      %2324 = vmatprep.subr.mxu0 0.0
      %2325 = vmatpush2.msra.mxu0 0.0
      %2326 = vmatprep.subr.mxu0 0.0
      %2327 = vmatpush2.msra.mxu0 0.0
      %2328 = vmatprep.subr.mxu0 0.0
      %2329 = vmatpush2.msra.mxu0 0.0
      %2330 = vmatprep.subr.mxu0 0.0
      %2331 = vmatpush2.msra.mxu0 0.0
      %2332 = vmatprep.subr.mxu0 0.0
      %2333 = vmatpush2.msra.mxu0 0.0
      %2334 = vmatprep.subr.mxu0 0.0
      %2335 = vmatpush2.msra.mxu0 0.0
      %2336 = vmatprep.mubr.f32.mxu0 0.0
      %2337 = vmatmul.mubr.f32.gmra.mxu0 %v2270
      %v2338 = vpop.f32.mrf.mxu0
      %v2339 = vadd.f32 0.0, %v2338
      %v2340 = vpop.f32.mrf.mxu0
      %v2341 = vadd.f32 0.0, %v2340
      %2342 = vdwg.mxu0
      %2343 = vmatprep.subr.mxu0 0.0
      %2344 = vmatpush1.msra.mxu0 0.0
      %2345 = vmatprep.subr.mxu0 0.0
      %2346 = vmatpush1.msra.mxu0 0.0
      %2347 = vmatprep.subr.mxu0 0.0
      %2348 = vmatpush1.msra.mxu0 0.0
      %2349 = vmatprep.subr.mxu0 0.0
      %2350 = vmatpush1.msra.mxu0 0.0
      %2351 = vmatprep.subr.mxu0 0.0
      %2352 = vmatpush1.msra.mxu0 0.0
      %2353 = vmatprep.subr.mxu0 0.0
      %2354 = vmatpush1.msra.mxu0 0.0
      %2355 = vmatprep.subr.mxu0 0.0
      %2356 = vmatpush1.msra.mxu0 0.0
      %2357 = vmatprep.subr.mxu0 0.0
      %2358 = vmatpush1.msra.mxu0 0.0
      %2359 = vmatprep.subr.mxu0 0.0
      %2360 = vmatpush1.msra.mxu0 %v2244
      %2361 = vmatprep.subr.mxu0 0.0
      %2362 = vmatpush1.msra.mxu0 %v2241
      %2363 = vmatprep.subr.mxu0 0.0
      %2364 = vmatpush1.msra.mxu0 %v2238
      %2365 = vmatprep.subr.mxu0 0.0
      %2366 = vmatpush1.msra.mxu0 %v2235
      %2367 = vmatprep.subr.mxu0 0.0
      %2368 = vmatpush1.msra.mxu0 %v2232
      %2369 = vmatprep.subr.mxu0 0.0
      %2370 = vmatpush1.msra.mxu0 %v2229
      %2371 = vmatprep.subr.mxu0 0.0
      %2372 = vmatpush1.msra.mxu0 %v2226
      %2373 = vmatprep.subr.mxu0 0.0
      %2374 = vmatpush1.msra.mxu0 %v2223
      %2375 = vmatprep.subr.mxu0 0.0
      %2376 = vmatpush2.msra.mxu0 0.0
      %2377 = vmatprep.subr.mxu0 0.0
      %2378 = vmatpush2.msra.mxu0 0.0
      %2379 = vmatprep.subr.mxu0 0.0
      %2380 = vmatpush2.msra.mxu0 0.0
      %2381 = vmatprep.subr.mxu0 0.0
      %2382 = vmatpush2.msra.mxu0 0.0
      %2383 = vmatprep.subr.mxu0 0.0
      %2384 = vmatpush2.msra.mxu0 0.0
      %2385 = vmatprep.subr.mxu0 0.0
      %2386 = vmatpush2.msra.mxu0 0.0
      %2387 = vmatprep.subr.mxu0 0.0
      %2388 = vmatpush2.msra.mxu0 0.0
      %2389 = vmatprep.subr.mxu0 0.0
      %2390 = vmatpush2.msra.mxu0 0.0
      %2391 = vmatprep.subr.mxu0 0.0
      %2392 = vmatpush2.msra.mxu0 0.0
      %2393 = vmatprep.subr.mxu0 0.0
      %2394 = vmatpush2.msra.mxu0 0.0
      %2395 = vmatprep.subr.mxu0 0.0
      %2396 = vmatpush2.msra.mxu0 0.0
      %2397 = vmatprep.subr.mxu0 0.0
      %2398 = vmatpush2.msra.mxu0 0.0
      %2399 = vmatprep.subr.mxu0 0.0
      %2400 = vmatpush2.msra.mxu0 0.0
      %2401 = vmatprep.subr.mxu0 0.0
      %2402 = vmatpush2.msra.mxu0 0.0
      %2403 = vmatprep.subr.mxu0 0.0
      %2404 = vmatpush2.msra.mxu0 0.0
      %2405 = vmatprep.subr.mxu0 0.0
      %2406 = vmatpush2.msra.mxu0 0.0
      %2407 = vmatprep.mubr.f32.mxu0 0.0
      %2408 = vmatmul.mubr.f32.gmra.mxu0 %v2270
      %v2409 = vpop.f32.mrf.mxu0
      %v2410 = vadd.f32 0.0, %v2409
      %v2411 = vpop.f32.mrf.mxu0
      %2412 = vdwg.mxu0
      %v2413 = vadd.f32 %v2151, %v2339
      %v2414 = vadd.f32 %v2152, %v2341
      %v2415 = vadd.f32 %v2153, %v2410
      %s2416 = scalar_lea.vmem %s2, 64
      %v2417 = vld [vmem:[%s2416] sm:$0xff]
      %2418 = vrot.lane.b32.xlu0 %v1568, 103
      %v2419 = vpop.permute.xlu0 %2418
      %2420 = vrot.lane.b32.xlu0 %v1569, 103
      %v2421 = vpop.permute.xlu0 %2420
      %2422 = vrot.lane.b32.xlu0 %v1570, 103
      %v2423 = vpop.permute.xlu0 %2422
      %2424 = vrot.lane.b32.xlu0 %v1571, 103
      %v2425 = vpop.permute.xlu0 %2424
      %2426 = vrot.lane.b32.xlu0 %v1572, 103
      %v2427 = vpop.permute.xlu0 %2426
      %2428 = vrot.lane.b32.xlu0 %v1573, 103
      %v2429 = vpop.permute.xlu0 %2428
      %2430 = vrot.lane.b32.xlu0 %v1574, 103
      %v2431 = vpop.permute.xlu0 %2430
      %2432 = vrot.lane.b32.xlu0 %v1575, 103
      %v2433 = vpop.permute.xlu0 %2432
      %2434 = vrot.lane.b32.xlu0 %v1576, 103
      %v2435 = vpop.permute.xlu0 %2434
      %2436 = vrot.lane.b32.xlu0 %v1577, 103
      %v2437 = vpop.permute.xlu0 %2436
      %2438 = vrot.lane.b32.xlu0 %v1578, 103
      %v2439 = vpop.permute.xlu0 %2438
      %2440 = vrot.lane.b32.xlu0 %v1579, 103
      %v2441 = vpop.permute.xlu0 %2440
      %2442 = vrot.lane.b32.xlu0 %v1580, 103
      %v2443 = vpop.permute.xlu0 %2442
      %2444 = vrot.lane.b32.xlu0 %v1581, 103
      %v2445 = vpop.permute.xlu0 %2444
      %2446 = vrot.lane.b32.xlu0 %v1582, 103
      %v2447 = vpop.permute.xlu0 %2446
      %2448 = vrot.lane.b32.xlu0 %v1583, 103
      %v2449 = vpop.permute.xlu0 %2448
      %2450 = vrot.lane.b32.xlu0 %v1584, 103
      %v2451 = vpop.permute.xlu0 %2450
      %2452 = vrot.lane.b32.xlu0 %v1585, 103
      %v2453 = vpop.permute.xlu0 %2452
      %2454 = vrot.lane.b32.xlu0 %v1586, 103
      %v2455 = vpop.permute.xlu0 %2454
      %2456 = vrot.lane.b32.xlu0 %v1587, 103
      %v2457 = vpop.permute.xlu0 %2456
      %2458 = vrot.lane.b32.xlu0 %v1588, 103
      %v2459 = vpop.permute.xlu0 %2458
      %2460 = vrot.lane.b32.xlu0 %v1589, 103
      %v2461 = vpop.permute.xlu0 %2460
      %2462 = vrot.lane.b32.xlu0 %v1590, 103
      %v2463 = vpop.permute.xlu0 %2462
      %2464 = vrot.lane.b32.xlu0 %v1591, 103
      %v2465 = vpop.permute.xlu0 %2464
      %2466 = vrot.lane.b32.xlu0 %v1592, 103
      %v2467 = vpop.permute.xlu0 %2466
      %2468 = vrot.lane.b32.xlu0 %v1593, 103
      %v2469 = vpop.permute.xlu0 %2468
      %2470 = vrot.lane.b32.xlu0 %v1594, 103
      %v2471 = vpop.permute.xlu0 %2470
      %2472 = vrot.lane.b32.xlu0 %v1595, 103
      %v2473 = vpop.permute.xlu0 %2472
      %2474 = vrot.lane.b32.xlu0 %v1596, 103
      %v2475 = vpop.permute.xlu0 %2474
      %2476 = vrot.lane.b32.xlu0 %v1597, 103
      %v2477 = vpop.permute.xlu0 %2476
      %2478 = vrot.lane.b32.xlu0 %v1598, 103
      %v2479 = vpop.permute.xlu0 %2478
      %2480 = vrot.lane.b32.xlu0 %v1599, 103
      %v2481 = vpop.permute.xlu0 %2480
      %vm2482 = vcmask 842752
      %v2483 = vsel %vm2482, %v2419, %v2421
      %v2484 = vsel %vm2482, %v2421, %v2423
      %v2485 = vsel %vm2482, %v2423, %v2425
      %v2486 = vsel %vm2482, %v2427, %v2429
      %v2487 = vsel %vm2482, %v2429, %v2431
      %v2488 = vsel %vm2482, %v2431, %v2433
      %v2489 = vsel %vm2482, %v2435, %v2437
      %v2490 = vsel %vm2482, %v2437, %v2439
      %v2491 = vsel %vm2482, %v2439, %v2441
      %v2492 = vsel %vm2482, %v2443, %v2445
      %v2493 = vsel %vm2482, %v2445, %v2447
      %v2494 = vsel %vm2482, %v2447, %v2449
      %v2495 = vsel %vm2482, %v2451, %v2453
      %v2496 = vsel %vm2482, %v2453, %v2455
      %v2497 = vsel %vm2482, %v2455, %v2457
      %v2498 = vsel %vm2482, %v2459, %v2461
      %v2499 = vsel %vm2482, %v2461, %v2463
      %v2500 = vsel %vm2482, %v2463, %v2465
      %v2501 = vsel %vm2482, %v2467, %v2469
      %v2502 = vsel %vm2482, %v2469, %v2471
      %v2503 = vsel %vm2482, %v2471, %v2473
      %v2504 = vsel %vm2482, %v2475, %v2477
      %v2505 = vsel %vm2482, %v2477, %v2479
      %v2506 = vsel %vm2482, %v2479, %v2481
      %v2532 = vsel %vm491, %v2417, 0
      %2534 = vmatprep.subr.mxu0 0.0
      %2535 = vmatpush1.msra.mxu0 0.0
      %2536 = vmatprep.subr.mxu0 0.0
      %2537 = vmatpush1.msra.mxu0 0.0
      %2538 = vmatprep.subr.mxu0 0.0
      %2539 = vmatpush1.msra.mxu0 0.0
      %2540 = vmatprep.subr.mxu0 0.0
      %2541 = vmatpush1.msra.mxu0 0.0
      %2542 = vmatprep.subr.mxu0 0.0
      %2543 = vmatpush1.msra.mxu0 0.0
      %2544 = vmatprep.subr.mxu0 0.0
      %2545 = vmatpush1.msra.mxu0 0.0
      %2546 = vmatprep.subr.mxu0 0.0
      %2547 = vmatpush1.msra.mxu0 0.0
      %2548 = vmatprep.subr.mxu0 0.0
      %2549 = vmatpush1.msra.mxu0 0.0
      %2550 = vmatprep.subr.mxu0 %v2505
      %2551 = vmatpush1.msra.mxu0 %v2504
      %2552 = vmatprep.subr.mxu0 %v2502
      %2553 = vmatpush1.msra.mxu0 %v2501
      %2554 = vmatprep.subr.mxu0 %v2499
      %2555 = vmatpush1.msra.mxu0 %v2498
      %2556 = vmatprep.subr.mxu0 %v2496
      %2557 = vmatpush1.msra.mxu0 %v2495
      %2558 = vmatprep.subr.mxu0 %v2493
      %2559 = vmatpush1.msra.mxu0 %v2492
      %2560 = vmatprep.subr.mxu0 %v2490
      %2561 = vmatpush1.msra.mxu0 %v2489
      %2562 = vmatprep.subr.mxu0 %v2487
      %2563 = vmatpush1.msra.mxu0 %v2486
      %2564 = vmatprep.subr.mxu0 %v2484
      %2565 = vmatpush1.msra.mxu0 %v2483
      %2566 = vmatprep.subr.mxu0 0.0
      %2567 = vmatpush2.msra.mxu0 0.0
      %2568 = vmatprep.subr.mxu0 0.0
      %2569 = vmatpush2.msra.mxu0 0.0
      %2570 = vmatprep.subr.mxu0 0.0
      %2571 = vmatpush2.msra.mxu0 0.0
      %2572 = vmatprep.subr.mxu0 0.0
      %2573 = vmatpush2.msra.mxu0 0.0
      %2574 = vmatprep.subr.mxu0 0.0
      %2575 = vmatpush2.msra.mxu0 0.0
      %2576 = vmatprep.subr.mxu0 0.0
      %2577 = vmatpush2.msra.mxu0 0.0
      %2578 = vmatprep.subr.mxu0 0.0
      %2579 = vmatpush2.msra.mxu0 0.0
      %2580 = vmatprep.subr.mxu0 0.0
      %2581 = vmatpush2.msra.mxu0 0.0
      %2582 = vmatprep.subr.mxu0 0.0
      %2583 = vmatpush2.msra.mxu0 0.0
      %2584 = vmatprep.subr.mxu0 0.0
      %2585 = vmatpush2.msra.mxu0 0.0
      %2586 = vmatprep.subr.mxu0 0.0
      %2587 = vmatpush2.msra.mxu0 0.0
      %2588 = vmatprep.subr.mxu0 0.0
      %2589 = vmatpush2.msra.mxu0 0.0
      %2590 = vmatprep.subr.mxu0 0.0
      %2591 = vmatpush2.msra.mxu0 0.0
      %2592 = vmatprep.subr.mxu0 0.0
      %2593 = vmatpush2.msra.mxu0 0.0
      %2594 = vmatprep.subr.mxu0 0.0
      %2595 = vmatpush2.msra.mxu0 0.0
      %2596 = vmatprep.subr.mxu0 0.0
      %2597 = vmatpush2.msra.mxu0 0.0
      %2598 = vmatprep.mubr.f32.mxu0 0.0
      %2599 = vmatmul.mubr.f32.gmra.mxu0 %v2532
      %v2600 = vpop.f32.mrf.mxu0
      %v2601 = vadd.f32 0.0, %v2600
      %v2602 = vpop.f32.mrf.mxu0
      %v2603 = vadd.f32 0.0, %v2602
      %2604 = vdwg.mxu0
      %2605 = vmatprep.subr.mxu0 0.0
      %2606 = vmatpush1.msra.mxu0 0.0
      %2607 = vmatprep.subr.mxu0 0.0
      %2608 = vmatpush1.msra.mxu0 0.0
      %2609 = vmatprep.subr.mxu0 0.0
      %2610 = vmatpush1.msra.mxu0 0.0
      %2611 = vmatprep.subr.mxu0 0.0
      %2612 = vmatpush1.msra.mxu0 0.0
      %2613 = vmatprep.subr.mxu0 0.0
      %2614 = vmatpush1.msra.mxu0 0.0
      %2615 = vmatprep.subr.mxu0 0.0
      %2616 = vmatpush1.msra.mxu0 0.0
      %2617 = vmatprep.subr.mxu0 0.0
      %2618 = vmatpush1.msra.mxu0 0.0
      %2619 = vmatprep.subr.mxu0 0.0
      %2620 = vmatpush1.msra.mxu0 0.0
      %2621 = vmatprep.subr.mxu0 0.0
      %2622 = vmatpush1.msra.mxu0 %v2506
      %2623 = vmatprep.subr.mxu0 0.0
      %2624 = vmatpush1.msra.mxu0 %v2503
      %2625 = vmatprep.subr.mxu0 0.0
      %2626 = vmatpush1.msra.mxu0 %v2500
      %2627 = vmatprep.subr.mxu0 0.0
      %2628 = vmatpush1.msra.mxu0 %v2497
      %2629 = vmatprep.subr.mxu0 0.0
      %2630 = vmatpush1.msra.mxu0 %v2494
      %2631 = vmatprep.subr.mxu0 0.0
      %2632 = vmatpush1.msra.mxu0 %v2491
      %2633 = vmatprep.subr.mxu0 0.0
      %2634 = vmatpush1.msra.mxu0 %v2488
      %2635 = vmatprep.subr.mxu0 0.0
      %2636 = vmatpush1.msra.mxu0 %v2485
      %2637 = vmatprep.subr.mxu0 0.0
      %2638 = vmatpush2.msra.mxu0 0.0
      %2639 = vmatprep.subr.mxu0 0.0
      %2640 = vmatpush2.msra.mxu0 0.0
      %2641 = vmatprep.subr.mxu0 0.0
      %2642 = vmatpush2.msra.mxu0 0.0
      %2643 = vmatprep.subr.mxu0 0.0
      %2644 = vmatpush2.msra.mxu0 0.0
      %2645 = vmatprep.subr.mxu0 0.0
      %2646 = vmatpush2.msra.mxu0 0.0
      %2647 = vmatprep.subr.mxu0 0.0
      %2648 = vmatpush2.msra.mxu0 0.0
      %2649 = vmatprep.subr.mxu0 0.0
      %2650 = vmatpush2.msra.mxu0 0.0
      %2651 = vmatprep.subr.mxu0 0.0
      %2652 = vmatpush2.msra.mxu0 0.0
      %2653 = vmatprep.subr.mxu0 0.0
      %2654 = vmatpush2.msra.mxu0 0.0
      %2655 = vmatprep.subr.mxu0 0.0
      %2656 = vmatpush2.msra.mxu0 0.0
      %2657 = vmatprep.subr.mxu0 0.0
      %2658 = vmatpush2.msra.mxu0 0.0
      %2659 = vmatprep.subr.mxu0 0.0
      %2660 = vmatpush2.msra.mxu0 0.0
      %2661 = vmatprep.subr.mxu0 0.0
      %2662 = vmatpush2.msra.mxu0 0.0
      %2663 = vmatprep.subr.mxu0 0.0
      %2664 = vmatpush2.msra.mxu0 0.0
      %2665 = vmatprep.subr.mxu0 0.0
      %2666 = vmatpush2.msra.mxu0 0.0
      %2667 = vmatprep.subr.mxu0 0.0
      %2668 = vmatpush2.msra.mxu0 0.0
      %2669 = vmatprep.mubr.f32.mxu0 0.0
      %2670 = vmatmul.mubr.f32.gmra.mxu0 %v2532
      %v2671 = vpop.f32.mrf.mxu0
      %v2672 = vadd.f32 0.0, %v2671
      %v2673 = vpop.f32.mrf.mxu0
      %2674 = vdwg.mxu0
      %v2675 = vadd.f32 %v2413, %v2601
      %v2676 = vadd.f32 %v2414, %v2603
      %v2677 = vadd.f32 %v2415, %v2672
      %v2678 = vld [vmem:[%s6] sm:$0xff]
      %2680 = vset.pattern.permute.xlu0 0
      %2681 = vperm.xlu0 %2680, %v2678
      %v2682 = vpop.permute.xlu0 %2681
      %v2684 = vadd.f32 %v2675, %v2682
      %v2685 = vadd.f32 %v2676, %v2682
      %v2686 = vadd.f32 %v2677, %v2682
      %v2687 = vmax.f32 %v2684, 0.0
      %v2688 = vmax.f32 %v2685, 0.0
      %v2689 = vmax.f32 %v2686, 0.0
      %v2691 = vlaneseq
      %v2692 = vshrl.u32 %v2691, 7
      %v2693 = vsub.s32 0, %v2692
      %v2694 = vrot.slane %v306, %v2693
      %v2695 = vlaneseq
      %v2696 = vshrl.u32 %v2695, 7
      %v2697 = vsub.s32 1, %v2696
      %v2698 = vrot.slane %v306, %v2697
      %v2699 = vlaneseq
      %v2700 = vshrl.u32 %v2699, 7
      %v2701 = vsub.s32 2, %v2700
      %v2702 = vrot.slane %v306, %v2701
      %v2706 = vmul.f32 %v2687, %v2694
      %v2707 = vmul.f32 %v2688, %v2698
      %v2708 = vmul.f32 %v2689, %v2702
      %2709 = vst [vmem:[#allocation2 + $0x10] sm:$0xff] %v2706
      %2710 = vst [vmem:[#allocation2 + $0x18] sm:$0xff] %v2707
      %2711 = vst [vmem:[#allocation2 + $0x20] sm:$0xff] %v2708
      %v2712 = vld [vmem:[#allocation2 + $0x8] sm:$0xff]
      %v2713 = vld [vmem:[#allocation2 + $0x10] sm:$0xff]
      %v2714 = vld [vmem:[#allocation2 + $0x18] sm:$0xff]
      %v2715 = vld [vmem:[#allocation2 + $0x20] sm:$0xff]
      %2720 = vrot.lane.b32.xlu0 %v2712, 50
      %v2721 = vpop.permute.xlu0 %2720
      %2722 = vrot.lane.b32.xlu0 %v2713, 50
      %v2723 = vpop.permute.xlu0 %2722
      %2724 = vrot.lane.b32.xlu0 %v2714, 50
      %v2725 = vpop.permute.xlu0 %2724
      %2726 = vrot.lane.b32.xlu0 %v2715, 50
      %v2727 = vpop.permute.xlu0 %2726
      %vm2728 = vcmask 408576
      %v2729 = vsel %vm2728, %v2721, %v2723
      %v2730 = vsel %vm2728, %v2723, %v2725
      %v2731 = vsel %vm2728, %v2725, %v2727
      %2735 = vst [vmem:[#allocation3] sm:$0xff] %v2729
      %2736 = vst [vmem:[#allocation3 + $0x8] sm:$0xff] %v2730
      %2737 = vst [vmem:[#allocation3 + $0x10] sm:$0xff] %v2731
      %v2738 = vld [vmem:[#allocation2 + $0x8] sm:$0xff]
      %v2739 = vld [vmem:[#allocation2 + $0x10] sm:$0xff]
      %v2740 = vld [vmem:[#allocation2 + $0x18] sm:$0xff]
      %v2741 = vld [vmem:[#allocation2 + $0x20] sm:$0xff]
      %2746 = vrot.lane.b32.xlu0 %v2738, 48
      %v2747 = vpop.permute.xlu0 %2746
      %2748 = vrot.lane.b32.xlu0 %v2739, 48
      %v2749 = vpop.permute.xlu0 %2748
      %2750 = vrot.lane.b32.xlu0 %v2740, 48
      %v2751 = vpop.permute.xlu0 %2750
      %2752 = vrot.lane.b32.xlu0 %v2741, 48
      %v2753 = vpop.permute.xlu0 %2752
      %vm2754 = vcmask 392192
      %v2755 = vsel %vm2754, %v2747, %v2749
      %v2756 = vsel %vm2754, %v2749, %v2751
      %v2757 = vsel %vm2754, %v2751, %v2753
      %2761 = vst [vmem:[#allocation3 + $0x18] sm:$0xff] %v2755
      %2762 = vst [vmem:[#allocation3 + $0x20] sm:$0xff] %v2756
      %2763 = vst [vmem:[#allocation3 + $0x28] sm:$0xff] %v2757
      %v2764 = vld [vmem:[#allocation2 + $0x8] sm:$0xff]
      %v2765 = vld [vmem:[#allocation2 + $0x10] sm:$0xff]
      %v2766 = vld [vmem:[#allocation2 + $0x18] sm:$0xff]
      %v2767 = vld [vmem:[#allocation2 + $0x20] sm:$0xff]
      %2772 = vrot.lane.b32.xlu0 %v2764, 46
      %v2773 = vpop.permute.xlu0 %2772
      %2774 = vrot.lane.b32.xlu0 %v2765, 46
      %v2775 = vpop.permute.xlu0 %2774
      %2776 = vrot.lane.b32.xlu0 %v2766, 46
      %v2777 = vpop.permute.xlu0 %2776
      %2778 = vrot.lane.b32.xlu0 %v2767, 46
      %v2779 = vpop.permute.xlu0 %2778
      %vm2780 = vcmask 375808
      %v2781 = vsel %vm2780, %v2773, %v2775
      %v2782 = vsel %vm2780, %v2775, %v2777
      %v2783 = vsel %vm2780, %v2777, %v2779
      %2787 = vst [vmem:[#allocation3 + $0x30] sm:$0xff] %v2781
      %2788 = vst [vmem:[#allocation3 + $0x38] sm:$0xff] %v2782
      %2789 = vst [vmem:[#allocation3 + $0x40] sm:$0xff] %v2783
      %v2790 = vld [vmem:[#allocation2 + $0x8] sm:$0xff]
      %v2791 = vld [vmem:[#allocation2 + $0x10] sm:$0xff]
      %v2792 = vld [vmem:[#allocation2 + $0x18] sm:$0xff]
      %v2793 = vld [vmem:[#allocation2 + $0x20] sm:$0xff]
      %2798 = vrot.lane.b32.xlu0 %v2790, 2
      %v2799 = vpop.permute.xlu0 %2798
      %2800 = vrot.lane.b32.xlu0 %v2791, 2
      %v2801 = vpop.permute.xlu0 %2800
      %2802 = vrot.lane.b32.xlu0 %v2792, 2
      %v2803 = vpop.permute.xlu0 %2802
      %2804 = vrot.lane.b32.xlu0 %v2793, 2
      %v2805 = vpop.permute.xlu0 %2804
      %vm2806 = vcmask 15360
      %v2807 = vsel %vm2806, %v2799, %v2801
      %v2808 = vsel %vm2806, %v2801, %v2803
      %v2809 = vsel %vm2806, %v2803, %v2805
      %2813 = vst [vmem:[#allocation3 + $0x48] sm:$0xff] %v2807
      %2814 = vst [vmem:[#allocation3 + $0x50] sm:$0xff] %v2808
      %2815 = vst [vmem:[#allocation3 + $0x58] sm:$0xff] %v2809
      %v2816 = vld [vmem:[#allocation2 + $0x10] sm:$0xff]
      %v2817 = vld [vmem:[#allocation2 + $0x18] sm:$0xff]
      %v2818 = vld [vmem:[#allocation2 + $0x20] sm:$0xff]
      %2819 = vst [vmem:[#allocation3 + $0x60] sm:$0xff] %v2816
      %2820 = vst [vmem:[#allocation3 + $0x68] sm:$0xff] %v2817
      %2821 = vst [vmem:[#allocation3 + $0x70] sm:$0xff] %v2818
      %v2822 = vld [vmem:[#allocation2 + $0x10] sm:$0xff]
      %v2823 = vld [vmem:[#allocation2 + $0x18] sm:$0xff]
      %v2824 = vld [vmem:[#allocation2 + $0x20] sm:$0xff]
      %v2825 = vld [vmem:[#allocation2 + $0x28] sm:$0xff]
      %2830 = vrot.lane.b32.xlu0 %v2822, 126
      %v2831 = vpop.permute.xlu0 %2830
      %2832 = vrot.lane.b32.xlu0 %v2823, 126
      %v2833 = vpop.permute.xlu0 %2832
      %2834 = vrot.lane.b32.xlu0 %v2824, 126
      %v2835 = vpop.permute.xlu0 %2834
      %2836 = vrot.lane.b32.xlu0 %v2825, 126
      %v2837 = vpop.permute.xlu0 %2836
      %vm2838 = vcmask 1031168
      %v2839 = vsel %vm2838, %v2831, %v2833
      %v2840 = vsel %vm2838, %v2833, %v2835
      %v2841 = vsel %vm2838, %v2835, %v2837
      %2845 = vst [vmem:[#allocation3 + $0x78] sm:$0xff] %v2839
      %2846 = vst [vmem:[#allocation3 + $0x80] sm:$0xff] %v2840
      %2847 = vst [vmem:[#allocation3 + $0x88] sm:$0xff] %v2841
      %v2848 = vld [vmem:[#allocation2 + $0x10] sm:$0xff]
      %v2849 = vld [vmem:[#allocation2 + $0x18] sm:$0xff]
      %v2850 = vld [vmem:[#allocation2 + $0x20] sm:$0xff]
      %v2851 = vld [vmem:[#allocation2 + $0x28] sm:$0xff]
      %2856 = vrot.lane.b32.xlu0 %v2848, 82
      %v2857 = vpop.permute.xlu0 %2856
      %2858 = vrot.lane.b32.xlu0 %v2849, 82
      %v2859 = vpop.permute.xlu0 %2858
      %2860 = vrot.lane.b32.xlu0 %v2850, 82
      %v2861 = vpop.permute.xlu0 %2860
      %2862 = vrot.lane.b32.xlu0 %v2851, 82
      %v2863 = vpop.permute.xlu0 %2862
      %vm2864 = vcmask 670720
      %v2865 = vsel %vm2864, %v2857, %v2859
      %v2866 = vsel %vm2864, %v2859, %v2861
      %v2867 = vsel %vm2864, %v2861, %v2863
      %2871 = vst [vmem:[#allocation3 + $0x90] sm:$0xff] %v2865
      %2872 = vst [vmem:[#allocation3 + $0x98] sm:$0xff] %v2866
      %2873 = vst [vmem:[#allocation3 + $0xa0] sm:$0xff] %v2867
      %v2874 = vld [vmem:[#allocation2 + $0x10] sm:$0xff]
      %v2875 = vld [vmem:[#allocation2 + $0x18] sm:$0xff]
      %v2876 = vld [vmem:[#allocation2 + $0x20] sm:$0xff]
      %v2877 = vld [vmem:[#allocation2 + $0x28] sm:$0xff]
      %2882 = vrot.lane.b32.xlu0 %v2874, 80
      %v2883 = vpop.permute.xlu0 %2882
      %2884 = vrot.lane.b32.xlu0 %v2875, 80
      %v2885 = vpop.permute.xlu0 %2884
      %2886 = vrot.lane.b32.xlu0 %v2876, 80
      %v2887 = vpop.permute.xlu0 %2886
      %2888 = vrot.lane.b32.xlu0 %v2877, 80
      %v2889 = vpop.permute.xlu0 %2888
      %vm2890 = vcmask 654336
      %v2891 = vsel %vm2890, %v2883, %v2885
      %v2892 = vsel %vm2890, %v2885, %v2887
      %v2893 = vsel %vm2890, %v2887, %v2889
      %2897 = vst [vmem:[#allocation3 + $0xa8] sm:$0xff] %v2891
      %2898 = vst [vmem:[#allocation3 + $0xb0] sm:$0xff] %v2892
      %2899 = vst [vmem:[#allocation3 + $0xb8] sm:$0xff] %v2893
      %v2900 = vld [vmem:[#allocation2 + $0x10] sm:$0xff]
      %v2901 = vld [vmem:[#allocation2 + $0x18] sm:$0xff]
      %v2902 = vld [vmem:[#allocation2 + $0x20] sm:$0xff]
      %v2903 = vld [vmem:[#allocation2 + $0x28] sm:$0xff]
      %2908 = vrot.lane.b32.xlu0 %v2900, 78
      %v2909 = vpop.permute.xlu0 %2908
      %2910 = vrot.lane.b32.xlu0 %v2901, 78
      %v2911 = vpop.permute.xlu0 %2910
      %2912 = vrot.lane.b32.xlu0 %v2902, 78
      %v2913 = vpop.permute.xlu0 %2912
      %2914 = vrot.lane.b32.xlu0 %v2903, 78
      %v2915 = vpop.permute.xlu0 %2914
      %vm2916 = vcmask 637952
      %v2917 = vsel %vm2916, %v2909, %v2911
      %v2918 = vsel %vm2916, %v2911, %v2913
      %v2919 = vsel %vm2916, %v2913, %v2915
      %2923 = vst [vmem:[#allocation3 + $0xc0] sm:$0xff] %v2917
      %2924 = vst [vmem:[#allocation3 + $0xc8] sm:$0xff] %v2918
      %2925 = vst [vmem:[#allocation3 + $0xd0] sm:$0xff] %v2919
      %v2926 = vld [vmem:[%s3] sm:$0xff]
      %v2927 = vld [vmem:[#allocation3] sm:$0xff]
      %v2928 = vld [vmem:[#allocation3 + $0x8] sm:$0xff]
      %v2929 = vld [vmem:[#allocation3 + $0x10] sm:$0xff]
      %v2930 = vld [vmem:[#allocation3 + $0x18] sm:$0xff]
      %v2931 = vld [vmem:[#allocation3 + $0x20] sm:$0xff]
      %v2932 = vld [vmem:[#allocation3 + $0x28] sm:$0xff]
      %v2933 = vld [vmem:[#allocation3 + $0x30] sm:$0xff]
      %v2934 = vld [vmem:[#allocation3 + $0x38] sm:$0xff]
      %v2935 = vld [vmem:[#allocation3 + $0x40] sm:$0xff]
      %v2936 = vld [vmem:[#allocation3 + $0x48] sm:$0xff]
      %v2937 = vld [vmem:[#allocation3 + $0x50] sm:$0xff]
      %v2938 = vld [vmem:[#allocation3 + $0x58] sm:$0xff]
      %v2939 = vld [vmem:[#allocation3 + $0x60] sm:$0xff]
      %v2940 = vld [vmem:[#allocation3 + $0x68] sm:$0xff]
      %v2941 = vld [vmem:[#allocation3 + $0x70] sm:$0xff]
      %v2942 = vld [vmem:[#allocation3 + $0x78] sm:$0xff]
      %v2943 = vld [vmem:[#allocation3 + $0x80] sm:$0xff]
      %v2944 = vld [vmem:[#allocation3 + $0x88] sm:$0xff]
      %v2945 = vld [vmem:[#allocation3 + $0x90] sm:$0xff]
      %v2946 = vld [vmem:[#allocation3 + $0x98] sm:$0xff]
      %v2947 = vld [vmem:[#allocation3 + $0xa0] sm:$0xff]
      %v2948 = vld [vmem:[#allocation3 + $0xa8] sm:$0xff]
      %v2949 = vld [vmem:[#allocation3 + $0xb0] sm:$0xff]
      %v2950 = vld [vmem:[#allocation3 + $0xb8] sm:$0xff]
      %v2951 = vld [vmem:[#allocation3 + $0xc0] sm:$0xff]
      %v2952 = vld [vmem:[#allocation3 + $0xc8] sm:$0xff]
      %v2953 = vld [vmem:[#allocation3 + $0xd0] sm:$0xff]
      %s2954 = scalar_lea.vmem %s6, 8
      %v2955 = vld [vmem:[%s2954] sm:$0xff]
      %2957 = vset.pattern.permute.xlu0 0
      %2958 = vperm.xlu0 %2957, %v2955
      %v2959 = vpop.permute.xlu0 %2958
      %vm2961 = vcmask 588800
      %v2963 = vsel %vm2961, %v2926, 0
      %2965 = vmatprep.subr.mxu0 0.0
      %2966 = vmatpush1.msra.mxu0 0.0
      %2967 = vmatprep.subr.mxu0 0.0
      %2968 = vmatpush1.msra.mxu0 0.0
      %2969 = vmatprep.subr.mxu0 0.0
      %2970 = vmatpush1.msra.mxu0 0.0
      %2971 = vmatprep.subr.mxu0 0.0
      %2972 = vmatpush1.msra.mxu0 0.0
      %2973 = vmatprep.subr.mxu0 0.0
      %2974 = vmatpush1.msra.mxu0 0.0
      %2975 = vmatprep.subr.mxu0 0.0
      %2976 = vmatpush1.msra.mxu0 0.0
      %2977 = vmatprep.subr.mxu0 0.0
      %2978 = vmatpush1.msra.mxu0 0.0
      %2979 = vmatprep.subr.mxu0 %v2952
      %2980 = vmatpush1.msra.mxu0 %v2951
      %2981 = vmatprep.subr.mxu0 %v2949
      %2982 = vmatpush1.msra.mxu0 %v2948
      %2983 = vmatprep.subr.mxu0 %v2946
      %2984 = vmatpush1.msra.mxu0 %v2945
      %2985 = vmatprep.subr.mxu0 %v2943
      %2986 = vmatpush1.msra.mxu0 %v2942
      %2987 = vmatprep.subr.mxu0 %v2940
      %2988 = vmatpush1.msra.mxu0 %v2939
      %2989 = vmatprep.subr.mxu0 %v2937
      %2990 = vmatpush1.msra.mxu0 %v2936
      %2991 = vmatprep.subr.mxu0 %v2934
      %2992 = vmatpush1.msra.mxu0 %v2933
      %2993 = vmatprep.subr.mxu0 %v2931
      %2994 = vmatpush1.msra.mxu0 %v2930
      %2995 = vmatprep.subr.mxu0 %v2928
      %2996 = vmatpush1.msra.mxu0 %v2927
      %2997 = vmatprep.subr.mxu0 0.0
      %2998 = vmatpush2.msra.mxu0 0.0
      %2999 = vmatprep.subr.mxu0 0.0
      %3000 = vmatpush2.msra.mxu0 0.0
      %3001 = vmatprep.subr.mxu0 0.0
      %3002 = vmatpush2.msra.mxu0 0.0
      %3003 = vmatprep.subr.mxu0 0.0
      %3004 = vmatpush2.msra.mxu0 0.0
      %3005 = vmatprep.subr.mxu0 0.0
      %3006 = vmatpush2.msra.mxu0 0.0
      %3007 = vmatprep.subr.mxu0 0.0
      %3008 = vmatpush2.msra.mxu0 0.0
      %3009 = vmatprep.subr.mxu0 0.0
      %3010 = vmatpush2.msra.mxu0 0.0
      %3011 = vmatprep.subr.mxu0 0.0
      %3012 = vmatpush2.msra.mxu0 0.0
      %3013 = vmatprep.subr.mxu0 0.0
      %3014 = vmatpush2.msra.mxu0 0.0
      %3015 = vmatprep.subr.mxu0 0.0
      %3016 = vmatpush2.msra.mxu0 0.0
      %3017 = vmatprep.subr.mxu0 0.0
      %3018 = vmatpush2.msra.mxu0 0.0
      %3019 = vmatprep.subr.mxu0 0.0
      %3020 = vmatpush2.msra.mxu0 0.0
      %3021 = vmatprep.subr.mxu0 0.0
      %3022 = vmatpush2.msra.mxu0 0.0
      %3023 = vmatprep.subr.mxu0 0.0
      %3024 = vmatpush2.msra.mxu0 0.0
      %3025 = vmatprep.subr.mxu0 0.0
      %3026 = vmatpush2.msra.mxu0 0.0
      %3027 = vmatprep.subr.mxu0 0.0
      %3028 = vmatpush2.msra.mxu0 0.0
      %3029 = vmatprep.mubr.f32.mxu0 0.0
      %3030 = vmatmul.mubr.f32.gmra.mxu0 %v2963
      %v3031 = vpop.f32.mrf.mxu0
      %v3032 = vadd.f32 %v2959, %v3031
      %v3033 = vpop.f32.mrf.mxu0
      %v3034 = vadd.f32 %v2959, %v3033
      %3035 = vdwg.mxu0
      %3036 = vmatprep.subr.mxu0 0.0
      %3037 = vmatpush1.msra.mxu0 0.0
      %3038 = vmatprep.subr.mxu0 0.0
      %3039 = vmatpush1.msra.mxu0 0.0
      %3040 = vmatprep.subr.mxu0 0.0
      %3041 = vmatpush1.msra.mxu0 0.0
      %3042 = vmatprep.subr.mxu0 0.0
      %3043 = vmatpush1.msra.mxu0 0.0
      %3044 = vmatprep.subr.mxu0 0.0
      %3045 = vmatpush1.msra.mxu0 0.0
      %3046 = vmatprep.subr.mxu0 0.0
      %3047 = vmatpush1.msra.mxu0 0.0
      %3048 = vmatprep.subr.mxu0 0.0
      %3049 = vmatpush1.msra.mxu0 0.0
      %3050 = vmatprep.subr.mxu0 0.0
      %3051 = vmatpush1.msra.mxu0 %v2953
      %3052 = vmatprep.subr.mxu0 0.0
      %3053 = vmatpush1.msra.mxu0 %v2950
      %3054 = vmatprep.subr.mxu0 0.0
      %3055 = vmatpush1.msra.mxu0 %v2947
      %3056 = vmatprep.subr.mxu0 0.0
      %3057 = vmatpush1.msra.mxu0 %v2944
      %3058 = vmatprep.subr.mxu0 0.0
      %3059 = vmatpush1.msra.mxu0 %v2941
      %3060 = vmatprep.subr.mxu0 0.0
      %3061 = vmatpush1.msra.mxu0 %v2938
      %3062 = vmatprep.subr.mxu0 0.0
      %3063 = vmatpush1.msra.mxu0 %v2935
      %3064 = vmatprep.subr.mxu0 0.0
      %3065 = vmatpush1.msra.mxu0 %v2932
      %3066 = vmatprep.subr.mxu0 0.0
      %3067 = vmatpush1.msra.mxu0 %v2929
      %3068 = vmatprep.subr.mxu0 0.0
      %3069 = vmatpush2.msra.mxu0 0.0
      %3070 = vmatprep.subr.mxu0 0.0
      %3071 = vmatpush2.msra.mxu0 0.0
      %3072 = vmatprep.subr.mxu0 0.0
      %3073 = vmatpush2.msra.mxu0 0.0
      %3074 = vmatprep.subr.mxu0 0.0
      %3075 = vmatpush2.msra.mxu0 0.0
      %3076 = vmatprep.subr.mxu0 0.0
      %3077 = vmatpush2.msra.mxu0 0.0
      %3078 = vmatprep.subr.mxu0 0.0
      %3079 = vmatpush2.msra.mxu0 0.0
      %3080 = vmatprep.subr.mxu0 0.0
      %3081 = vmatpush2.msra.mxu0 0.0
      %3082 = vmatprep.subr.mxu0 0.0
      %3083 = vmatpush2.msra.mxu0 0.0
      %3084 = vmatprep.subr.mxu0 0.0
      %3085 = vmatpush2.msra.mxu0 0.0
      %3086 = vmatprep.subr.mxu0 0.0
      %3087 = vmatpush2.msra.mxu0 0.0
      %3088 = vmatprep.subr.mxu0 0.0
      %3089 = vmatpush2.msra.mxu0 0.0
      %3090 = vmatprep.subr.mxu0 0.0
      %3091 = vmatpush2.msra.mxu0 0.0
      %3092 = vmatprep.subr.mxu0 0.0
      %3093 = vmatpush2.msra.mxu0 0.0
      %3094 = vmatprep.subr.mxu0 0.0
      %3095 = vmatpush2.msra.mxu0 0.0
      %3096 = vmatprep.subr.mxu0 0.0
      %3097 = vmatpush2.msra.mxu0 0.0
      %3098 = vmatprep.subr.mxu0 0.0
      %3099 = vmatpush2.msra.mxu0 0.0
      %3100 = vmatprep.mubr.f32.mxu0 0.0
      %3101 = vmatmul.mubr.f32.gmra.mxu0 %v2963
      %v3102 = vpop.f32.mrf.mxu0
      %v3103 = vadd.f32 %v2959, %v3102
      %v3104 = vpop.f32.mrf.mxu0
      %3105 = vdwg.mxu0
      %v3106 = vmax.f32 %v3032, 0.0
      %v3107 = vmax.f32 %v3034, 0.0
      %v3108 = vmax.f32 %v3103, 0.0
      %v3109 = vmul.f32 %v3106, %v2694
      %v3110 = vmul.f32 %v3107, %v2698
      %v3111 = vmul.f32 %v3108, %v2702
      %v3112 = vadd.f32 %v2706, %v3109
      %v3113 = vadd.f32 %v2707, %v3110
      %v3114 = vadd.f32 %v2708, %v3111
      %3115 = vst [vmem:[#allocation2 + $0x10] sm:$0xff] %v3109
      %3116 = vst [vmem:[#allocation2 + $0x18] sm:$0xff] %v3110
      %3117 = vst [vmem:[#allocation2 + $0x20] sm:$0xff] %v3111
      %v3118 = vld [vmem:[#allocation2 + $0x8] sm:$0xff]
      %v3119 = vld [vmem:[#allocation2 + $0x10] sm:$0xff]
      %v3120 = vld [vmem:[#allocation2 + $0x18] sm:$0xff]
      %v3121 = vld [vmem:[#allocation2 + $0x20] sm:$0xff]
      %3126 = vrot.lane.b32.xlu0 %v3118, 100
      %v3127 = vpop.permute.xlu0 %3126
      %3128 = vrot.lane.b32.xlu0 %v3119, 100
      %v3129 = vpop.permute.xlu0 %3128
      %3130 = vrot.lane.b32.xlu0 %v3120, 100
      %v3131 = vpop.permute.xlu0 %3130
      %3132 = vrot.lane.b32.xlu0 %v3121, 100
      %v3133 = vpop.permute.xlu0 %3132
      %vm3134 = vcmask 818176
      %v3135 = vsel %vm3134, %v3127, %v3129
      %v3136 = vsel %vm3134, %v3129, %v3131
      %v3137 = vsel %vm3134, %v3131, %v3133
      %3141 = vst [vmem:[#allocation3] sm:$0xff] %v3135
      %3142 = vst [vmem:[#allocation3 + $0x8] sm:$0xff] %v3136
      %3143 = vst [vmem:[#allocation3 + $0x10] sm:$0xff] %v3137
      %v3144 = vld [vmem:[#allocation2 + $0x8] sm:$0xff]
      %v3145 = vld [vmem:[#allocation2 + $0x10] sm:$0xff]
      %v3146 = vld [vmem:[#allocation2 + $0x18] sm:$0xff]
      %v3147 = vld [vmem:[#allocation2 + $0x20] sm:$0xff]
      %3152 = vrot.lane.b32.xlu0 %v3144, 96
      %v3153 = vpop.permute.xlu0 %3152
      %3154 = vrot.lane.b32.xlu0 %v3145, 96
      %v3155 = vpop.permute.xlu0 %3154
      %3156 = vrot.lane.b32.xlu0 %v3146, 96
      %v3157 = vpop.permute.xlu0 %3156
      %3158 = vrot.lane.b32.xlu0 %v3147, 96
      %v3159 = vpop.permute.xlu0 %3158
      %vm3160 = vcmask 785408
      %v3161 = vsel %vm3160, %v3153, %v3155
      %v3162 = vsel %vm3160, %v3155, %v3157
      %v3163 = vsel %vm3160, %v3157, %v3159
      %3167 = vst [vmem:[#allocation3 + $0x18] sm:$0xff] %v3161
      %3168 = vst [vmem:[#allocation3 + $0x20] sm:$0xff] %v3162
      %3169 = vst [vmem:[#allocation3 + $0x28] sm:$0xff] %v3163
      %v3170 = vld [vmem:[#allocation2 + $0x8] sm:$0xff]
      %v3171 = vld [vmem:[#allocation2 + $0x10] sm:$0xff]
      %v3172 = vld [vmem:[#allocation2 + $0x18] sm:$0xff]
      %v3173 = vld [vmem:[#allocation2 + $0x20] sm:$0xff]
      %3178 = vrot.lane.b32.xlu0 %v3170, 92
      %v3179 = vpop.permute.xlu0 %3178
      %3180 = vrot.lane.b32.xlu0 %v3171, 92
      %v3181 = vpop.permute.xlu0 %3180
      %3182 = vrot.lane.b32.xlu0 %v3172, 92
      %v3183 = vpop.permute.xlu0 %3182
      %3184 = vrot.lane.b32.xlu0 %v3173, 92
      %v3185 = vpop.permute.xlu0 %3184
      %vm3186 = vcmask 752640
      %v3187 = vsel %vm3186, %v3179, %v3181
      %v3188 = vsel %vm3186, %v3181, %v3183
      %v3189 = vsel %vm3186, %v3183, %v3185
      %3193 = vst [vmem:[#allocation3 + $0x30] sm:$0xff] %v3187
      %3194 = vst [vmem:[#allocation3 + $0x38] sm:$0xff] %v3188
      %3195 = vst [vmem:[#allocation3 + $0x40] sm:$0xff] %v3189
      %v3196 = vld [vmem:[#allocation2 + $0x8] sm:$0xff]
      %v3197 = vld [vmem:[#allocation2 + $0x10] sm:$0xff]
      %v3198 = vld [vmem:[#allocation2 + $0x18] sm:$0xff]
      %v3199 = vld [vmem:[#allocation2 + $0x20] sm:$0xff]
      %3204 = vrot.lane.b32.xlu0 %v3196, 4
      %v3205 = vpop.permute.xlu0 %3204
      %3206 = vrot.lane.b32.xlu0 %v3197, 4
      %v3207 = vpop.permute.xlu0 %3206
      %3208 = vrot.lane.b32.xlu0 %v3198, 4
      %v3209 = vpop.permute.xlu0 %3208
      %3210 = vrot.lane.b32.xlu0 %v3199, 4
      %v3211 = vpop.permute.xlu0 %3210
      %vm3212 = vcmask 31744
      %v3213 = vsel %vm3212, %v3205, %v3207
      %v3214 = vsel %vm3212, %v3207, %v3209
      %v3215 = vsel %vm3212, %v3209, %v3211
      %3219 = vst [vmem:[#allocation3 + $0x48] sm:$0xff] %v3213
      %3220 = vst [vmem:[#allocation3 + $0x50] sm:$0xff] %v3214
      %3221 = vst [vmem:[#allocation3 + $0x58] sm:$0xff] %v3215
      %v3222 = vld [vmem:[#allocation2 + $0x10] sm:$0xff]
      %v3223 = vld [vmem:[#allocation2 + $0x18] sm:$0xff]
      %v3224 = vld [vmem:[#allocation2 + $0x20] sm:$0xff]
      %3225 = vst [vmem:[#allocation3 + $0x60] sm:$0xff] %v3222
      %3226 = vst [vmem:[#allocation3 + $0x68] sm:$0xff] %v3223
      %3227 = vst [vmem:[#allocation3 + $0x70] sm:$0xff] %v3224
      %v3228 = vld [vmem:[#allocation2 + $0x10] sm:$0xff]
      %v3229 = vld [vmem:[#allocation2 + $0x18] sm:$0xff]
      %v3230 = vld [vmem:[#allocation2 + $0x20] sm:$0xff]
      %v3231 = vld [vmem:[#allocation2 + $0x28] sm:$0xff]
      %3236 = vrot.lane.b32.xlu0 %v3228, 124
      %v3237 = vpop.permute.xlu0 %3236
      %3238 = vrot.lane.b32.xlu0 %v3229, 124
      %v3239 = vpop.permute.xlu0 %3238
      %3240 = vrot.lane.b32.xlu0 %v3230, 124
      %v3241 = vpop.permute.xlu0 %3240
      %3242 = vrot.lane.b32.xlu0 %v3231, 124
      %v3243 = vpop.permute.xlu0 %3242
      %vm3244 = vcmask 1014784
      %v3245 = vsel %vm3244, %v3237, %v3239
      %v3246 = vsel %vm3244, %v3239, %v3241
      %v3247 = vsel %vm3244, %v3241, %v3243
      %3251 = vst [vmem:[#allocation3 + $0x78] sm:$0xff] %v3245
      %3252 = vst [vmem:[#allocation3 + $0x80] sm:$0xff] %v3246
      %3253 = vst [vmem:[#allocation3 + $0x88] sm:$0xff] %v3247
      %v3254 = vld [vmem:[#allocation2 + $0x10] sm:$0xff]
      %v3255 = vld [vmem:[#allocation2 + $0x18] sm:$0xff]
      %v3256 = vld [vmem:[#allocation2 + $0x20] sm:$0xff]
      %v3257 = vld [vmem:[#allocation2 + $0x28] sm:$0xff]
      %3262 = vrot.lane.b32.xlu0 %v3254, 36
      %v3263 = vpop.permute.xlu0 %3262
      %3264 = vrot.lane.b32.xlu0 %v3255, 36
      %v3265 = vpop.permute.xlu0 %3264
      %3266 = vrot.lane.b32.xlu0 %v3256, 36
      %v3267 = vpop.permute.xlu0 %3266
      %3268 = vrot.lane.b32.xlu0 %v3257, 36
      %v3269 = vpop.permute.xlu0 %3268
      %vm3270 = vcmask 293888
      %v3271 = vsel %vm3270, %v3263, %v3265
      %v3272 = vsel %vm3270, %v3265, %v3267
      %v3273 = vsel %vm3270, %v3267, %v3269
      %3277 = vst [vmem:[#allocation3 + $0x90] sm:$0xff] %v3271
      %3278 = vst [vmem:[#allocation3 + $0x98] sm:$0xff] %v3272
      %3279 = vst [vmem:[#allocation3 + $0xa0] sm:$0xff] %v3273
      %v3280 = vld [vmem:[#allocation2 + $0x10] sm:$0xff]
      %v3281 = vld [vmem:[#allocation2 + $0x18] sm:$0xff]
      %v3282 = vld [vmem:[#allocation2 + $0x20] sm:$0xff]
      %v3283 = vld [vmem:[#allocation2 + $0x28] sm:$0xff]
      %3288 = vrot.lane.b32.xlu0 %v3280, 32
      %v3289 = vpop.permute.xlu0 %3288
      %3290 = vrot.lane.b32.xlu0 %v3281, 32
      %v3291 = vpop.permute.xlu0 %3290
      %3292 = vrot.lane.b32.xlu0 %v3282, 32
      %v3293 = vpop.permute.xlu0 %3292
      %3294 = vrot.lane.b32.xlu0 %v3283, 32
      %v3295 = vpop.permute.xlu0 %3294
      %vm3296 = vcmask 261120
      %v3297 = vsel %vm3296, %v3289, %v3291
      %v3298 = vsel %vm3296, %v3291, %v3293
      %v3299 = vsel %vm3296, %v3293, %v3295
      %3303 = vst [vmem:[#allocation3 + $0xa8] sm:$0xff] %v3297
      %3304 = vst [vmem:[#allocation3 + $0xb0] sm:$0xff] %v3298
      %3305 = vst [vmem:[#allocation3 + $0xb8] sm:$0xff] %v3299
      %v3306 = vld [vmem:[#allocation2 + $0x10] sm:$0xff]
      %v3307 = vld [vmem:[#allocation2 + $0x18] sm:$0xff]
      %v3308 = vld [vmem:[#allocation2 + $0x20] sm:$0xff]
      %v3309 = vld [vmem:[#allocation2 + $0x28] sm:$0xff]
      %3314 = vrot.lane.b32.xlu0 %v3306, 28
      %v3315 = vpop.permute.xlu0 %3314
      %3316 = vrot.lane.b32.xlu0 %v3307, 28
      %v3317 = vpop.permute.xlu0 %3316
      %3318 = vrot.lane.b32.xlu0 %v3308, 28
      %v3319 = vpop.permute.xlu0 %3318
      %3320 = vrot.lane.b32.xlu0 %v3309, 28
      %v3321 = vpop.permute.xlu0 %3320
      %vm3322 = vcmask 228352
      %v3323 = vsel %vm3322, %v3315, %v3317
      %v3324 = vsel %vm3322, %v3317, %v3319
      %v3325 = vsel %vm3322, %v3319, %v3321
      %3329 = vst [vmem:[#allocation3 + $0xc0] sm:$0xff] %v3323
      %3330 = vst [vmem:[#allocation3 + $0xc8] sm:$0xff] %v3324
      %3331 = vst [vmem:[#allocation3 + $0xd0] sm:$0xff] %v3325
      %s3332 = scalar_lea.vmem %s3, 8
      %v3333 = vld [vmem:[%s3332] sm:$0xff]
      %v3334 = vld [vmem:[#allocation3] sm:$0xff]
      %v3335 = vld [vmem:[#allocation3 + $0x8] sm:$0xff]
      %v3336 = vld [vmem:[#allocation3 + $0x10] sm:$0xff]
      %v3337 = vld [vmem:[#allocation3 + $0x18] sm:$0xff]
      %v3338 = vld [vmem:[#allocation3 + $0x20] sm:$0xff]
      %v3339 = vld [vmem:[#allocation3 + $0x28] sm:$0xff]
      %v3340 = vld [vmem:[#allocation3 + $0x30] sm:$0xff]
      %v3341 = vld [vmem:[#allocation3 + $0x38] sm:$0xff]
      %v3342 = vld [vmem:[#allocation3 + $0x40] sm:$0xff]
      %v3343 = vld [vmem:[#allocation3 + $0x48] sm:$0xff]
      %v3344 = vld [vmem:[#allocation3 + $0x50] sm:$0xff]
      %v3345 = vld [vmem:[#allocation3 + $0x58] sm:$0xff]
      %v3346 = vld [vmem:[#allocation3 + $0x60] sm:$0xff]
      %v3347 = vld [vmem:[#allocation3 + $0x68] sm:$0xff]
      %v3348 = vld [vmem:[#allocation3 + $0x70] sm:$0xff]
      %v3349 = vld [vmem:[#allocation3 + $0x78] sm:$0xff]
      %v3350 = vld [vmem:[#allocation3 + $0x80] sm:$0xff]
      %v3351 = vld [vmem:[#allocation3 + $0x88] sm:$0xff]
      %v3352 = vld [vmem:[#allocation3 + $0x90] sm:$0xff]
      %v3353 = vld [vmem:[#allocation3 + $0x98] sm:$0xff]
      %v3354 = vld [vmem:[#allocation3 + $0xa0] sm:$0xff]
      %v3355 = vld [vmem:[#allocation3 + $0xa8] sm:$0xff]
      %v3356 = vld [vmem:[#allocation3 + $0xb0] sm:$0xff]
      %v3357 = vld [vmem:[#allocation3 + $0xb8] sm:$0xff]
      %v3358 = vld [vmem:[#allocation3 + $0xc0] sm:$0xff]
      %v3359 = vld [vmem:[#allocation3 + $0xc8] sm:$0xff]
      %v3360 = vld [vmem:[#allocation3 + $0xd0] sm:$0xff]
      %s3361 = scalar_lea.vmem %s6, 16
      %v3362 = vld [vmem:[%s3361] sm:$0xff]
      %3364 = vset.pattern.permute.xlu0 0
      %3365 = vperm.xlu0 %3364, %v3362
      %v3366 = vpop.permute.xlu0 %3365
      %v3369 = vsel %vm2961, %v3333, 0
      %3371 = vmatprep.subr.mxu0 0.0
      %3372 = vmatpush1.msra.mxu0 0.0
      %3373 = vmatprep.subr.mxu0 0.0
      %3374 = vmatpush1.msra.mxu0 0.0
      %3375 = vmatprep.subr.mxu0 0.0
      %3376 = vmatpush1.msra.mxu0 0.0
      %3377 = vmatprep.subr.mxu0 0.0
      %3378 = vmatpush1.msra.mxu0 0.0
      %3379 = vmatprep.subr.mxu0 0.0
      %3380 = vmatpush1.msra.mxu0 0.0
      %3381 = vmatprep.subr.mxu0 0.0
      %3382 = vmatpush1.msra.mxu0 0.0
      %3383 = vmatprep.subr.mxu0 0.0
      %3384 = vmatpush1.msra.mxu0 0.0
      %3385 = vmatprep.subr.mxu0 %v3359
      %3386 = vmatpush1.msra.mxu0 %v3358
      %3387 = vmatprep.subr.mxu0 %v3356
      %3388 = vmatpush1.msra.mxu0 %v3355
      %3389 = vmatprep.subr.mxu0 %v3353
      %3390 = vmatpush1.msra.mxu0 %v3352
      %3391 = vmatprep.subr.mxu0 %v3350
      %3392 = vmatpush1.msra.mxu0 %v3349
      %3393 = vmatprep.subr.mxu0 %v3347
      %3394 = vmatpush1.msra.mxu0 %v3346
      %3395 = vmatprep.subr.mxu0 %v3344
      %3396 = vmatpush1.msra.mxu0 %v3343
      %3397 = vmatprep.subr.mxu0 %v3341
      %3398 = vmatpush1.msra.mxu0 %v3340
      %3399 = vmatprep.subr.mxu0 %v3338
      %3400 = vmatpush1.msra.mxu0 %v3337
      %3401 = vmatprep.subr.mxu0 %v3335
      %3402 = vmatpush1.msra.mxu0 %v3334
      %3403 = vmatprep.subr.mxu0 0.0
      %3404 = vmatpush2.msra.mxu0 0.0
      %3405 = vmatprep.subr.mxu0 0.0
      %3406 = vmatpush2.msra.mxu0 0.0
      %3407 = vmatprep.subr.mxu0 0.0
      %3408 = vmatpush2.msra.mxu0 0.0
      %3409 = vmatprep.subr.mxu0 0.0
      %3410 = vmatpush2.msra.mxu0 0.0
      %3411 = vmatprep.subr.mxu0 0.0
      %3412 = vmatpush2.msra.mxu0 0.0
      %3413 = vmatprep.subr.mxu0 0.0
      %3414 = vmatpush2.msra.mxu0 0.0
      %3415 = vmatprep.subr.mxu0 0.0
      %3416 = vmatpush2.msra.mxu0 0.0
      %3417 = vmatprep.subr.mxu0 0.0
      %3418 = vmatpush2.msra.mxu0 0.0
      %3419 = vmatprep.subr.mxu0 0.0
      %3420 = vmatpush2.msra.mxu0 0.0
      %3421 = vmatprep.subr.mxu0 0.0
      %3422 = vmatpush2.msra.mxu0 0.0
      %3423 = vmatprep.subr.mxu0 0.0
      %3424 = vmatpush2.msra.mxu0 0.0
      %3425 = vmatprep.subr.mxu0 0.0
      %3426 = vmatpush2.msra.mxu0 0.0
      %3427 = vmatprep.subr.mxu0 0.0
      %3428 = vmatpush2.msra.mxu0 0.0
      %3429 = vmatprep.subr.mxu0 0.0
      %3430 = vmatpush2.msra.mxu0 0.0
      %3431 = vmatprep.subr.mxu0 0.0
      %3432 = vmatpush2.msra.mxu0 0.0
      %3433 = vmatprep.subr.mxu0 0.0
      %3434 = vmatpush2.msra.mxu0 0.0
      %3435 = vmatprep.mubr.f32.mxu0 0.0
      %3436 = vmatmul.mubr.f32.gmra.mxu0 %v3369
      %v3437 = vpop.f32.mrf.mxu0
      %v3438 = vadd.f32 %v3366, %v3437
      %v3439 = vpop.f32.mrf.mxu0
      %v3440 = vadd.f32 %v3366, %v3439
      %3441 = vdwg.mxu0
      %3442 = vmatprep.subr.mxu0 0.0
      %3443 = vmatpush1.msra.mxu0 0.0
      %3444 = vmatprep.subr.mxu0 0.0
      %3445 = vmatpush1.msra.mxu0 0.0
      %3446 = vmatprep.subr.mxu0 0.0
      %3447 = vmatpush1.msra.mxu0 0.0
      %3448 = vmatprep.subr.mxu0 0.0
      %3449 = vmatpush1.msra.mxu0 0.0
      %3450 = vmatprep.subr.mxu0 0.0
      %3451 = vmatpush1.msra.mxu0 0.0
      %3452 = vmatprep.subr.mxu0 0.0
      %3453 = vmatpush1.msra.mxu0 0.0
      %3454 = vmatprep.subr.mxu0 0.0
      %3455 = vmatpush1.msra.mxu0 0.0
      %3456 = vmatprep.subr.mxu0 0.0
      %3457 = vmatpush1.msra.mxu0 %v3360
      %3458 = vmatprep.subr.mxu0 0.0
      %3459 = vmatpush1.msra.mxu0 %v3357
      %3460 = vmatprep.subr.mxu0 0.0
      %3461 = vmatpush1.msra.mxu0 %v3354
      %3462 = vmatprep.subr.mxu0 0.0
      %3463 = vmatpush1.msra.mxu0 %v3351
      %3464 = vmatprep.subr.mxu0 0.0
      %3465 = vmatpush1.msra.mxu0 %v3348
      %3466 = vmatprep.subr.mxu0 0.0
      %3467 = vmatpush1.msra.mxu0 %v3345
      %3468 = vmatprep.subr.mxu0 0.0
      %3469 = vmatpush1.msra.mxu0 %v3342
      %3470 = vmatprep.subr.mxu0 0.0
      %3471 = vmatpush1.msra.mxu0 %v3339
      %3472 = vmatprep.subr.mxu0 0.0
      %3473 = vmatpush1.msra.mxu0 %v3336
      %3474 = vmatprep.subr.mxu0 0.0
      %3475 = vmatpush2.msra.mxu0 0.0
      %3476 = vmatprep.subr.mxu0 0.0
      %3477 = vmatpush2.msra.mxu0 0.0
      %3478 = vmatprep.subr.mxu0 0.0
      %3479 = vmatpush2.msra.mxu0 0.0
      %3480 = vmatprep.subr.mxu0 0.0
      %3481 = vmatpush2.msra.mxu0 0.0
      %3482 = vmatprep.subr.mxu0 0.0
      %3483 = vmatpush2.msra.mxu0 0.0
      %3484 = vmatprep.subr.mxu0 0.0
      %3485 = vmatpush2.msra.mxu0 0.0
      %3486 = vmatprep.subr.mxu0 0.0
      %3487 = vmatpush2.msra.mxu0 0.0
      %3488 = vmatprep.subr.mxu0 0.0
      %3489 = vmatpush2.msra.mxu0 0.0
      %3490 = vmatprep.subr.mxu0 0.0
      %3491 = vmatpush2.msra.mxu0 0.0
      %3492 = vmatprep.subr.mxu0 0.0
      %3493 = vmatpush2.msra.mxu0 0.0
      %3494 = vmatprep.subr.mxu0 0.0
      %3495 = vmatpush2.msra.mxu0 0.0
      %3496 = vmatprep.subr.mxu0 0.0
      %3497 = vmatpush2.msra.mxu0 0.0
      %3498 = vmatprep.subr.mxu0 0.0
      %3499 = vmatpush2.msra.mxu0 0.0
      %3500 = vmatprep.subr.mxu0 0.0
      %3501 = vmatpush2.msra.mxu0 0.0
      %3502 = vmatprep.subr.mxu0 0.0
      %3503 = vmatpush2.msra.mxu0 0.0
      %3504 = vmatprep.subr.mxu0 0.0
      %3505 = vmatpush2.msra.mxu0 0.0
      %3506 = vmatprep.mubr.f32.mxu0 0.0
      %3507 = vmatmul.mubr.f32.gmra.mxu0 %v3369
      %v3508 = vpop.f32.mrf.mxu0
      %v3509 = vadd.f32 %v3366, %v3508
      %v3510 = vpop.f32.mrf.mxu0
      %3511 = vdwg.mxu0
      %v3512 = vmax.f32 %v3438, 0.0
      %v3513 = vmax.f32 %v3440, 0.0
      %v3514 = vmax.f32 %v3509, 0.0
      %v3515 = vmul.f32 %v3512, %v2694
      %v3516 = vmul.f32 %v3513, %v2698
      %v3517 = vmul.f32 %v3514, %v2702
      %v3518 = vadd.f32 %v3112, %v3515
      %v3519 = vadd.f32 %v3113, %v3516
      %v3520 = vadd.f32 %v3114, %v3517
      %3521 = vst [vmem:[#allocation2 + $0x10] sm:$0xff] %v3515
      %3522 = vst [vmem:[#allocation2 + $0x18] sm:$0xff] %v3516
      %3523 = vst [vmem:[#allocation2 + $0x20] sm:$0xff] %v3517
      %v3524 = vld [vmem:[#allocation2] sm:$0xff]
      %v3525 = vld [vmem:[#allocation2 + $0x8] sm:$0xff]
      %v3526 = vld [vmem:[#allocation2 + $0x10] sm:$0xff]
      %v3527 = vld [vmem:[#allocation2 + $0x18] sm:$0xff]
      %3532 = vrot.lane.b32.xlu0 %v3524, 72
      %v3533 = vpop.permute.xlu0 %3532
      %3534 = vrot.lane.b32.xlu0 %v3525, 72
      %v3535 = vpop.permute.xlu0 %3534
      %3536 = vrot.lane.b32.xlu0 %v3526, 72
      %v3537 = vpop.permute.xlu0 %3536
      %3538 = vrot.lane.b32.xlu0 %v3527, 72
      %v3539 = vpop.permute.xlu0 %3538
      %v3540 = vsel %vm2961, %v3533, %v3535
      %v3541 = vsel %vm2961, %v3535, %v3537
      %v3542 = vsel %vm2961, %v3537, %v3539
      %3546 = vst [vmem:[#allocation3] sm:$0xff] %v3540
      %3547 = vst [vmem:[#allocation3 + $0x8] sm:$0xff] %v3541
      %3548 = vst [vmem:[#allocation3 + $0x10] sm:$0xff] %v3542
      %v3549 = vld [vmem:[#allocation2] sm:$0xff]
      %v3550 = vld [vmem:[#allocation2 + $0x8] sm:$0xff]
      %v3551 = vld [vmem:[#allocation2 + $0x10] sm:$0xff]
      %v3552 = vld [vmem:[#allocation2 + $0x18] sm:$0xff]
      %3557 = vrot.lane.b32.xlu0 %v3549, 64
      %v3558 = vpop.permute.xlu0 %3557
      %3559 = vrot.lane.b32.xlu0 %v3550, 64
      %v3560 = vpop.permute.xlu0 %3559
      %3561 = vrot.lane.b32.xlu0 %v3551, 64
      %v3562 = vpop.permute.xlu0 %3561
      %3563 = vrot.lane.b32.xlu0 %v3552, 64
      %v3564 = vpop.permute.xlu0 %3563
      %v3565 = vsel %vm491, %v3558, %v3560
      %v3566 = vsel %vm491, %v3560, %v3562
      %v3567 = vsel %vm491, %v3562, %v3564
      %3571 = vst [vmem:[#allocation3 + $0x18] sm:$0xff] %v3565
      %3572 = vst [vmem:[#allocation3 + $0x20] sm:$0xff] %v3566
      %3573 = vst [vmem:[#allocation3 + $0x28] sm:$0xff] %v3567
      %v3574 = vld [vmem:[#allocation2] sm:$0xff]
      %v3575 = vld [vmem:[#allocation2 + $0x8] sm:$0xff]
      %v3576 = vld [vmem:[#allocation2 + $0x10] sm:$0xff]
      %v3577 = vld [vmem:[#allocation2 + $0x18] sm:$0xff]
      %3582 = vrot.lane.b32.xlu0 %v3574, 56
      %v3583 = vpop.permute.xlu0 %3582
      %3584 = vrot.lane.b32.xlu0 %v3575, 56
      %v3585 = vpop.permute.xlu0 %3584
      %3586 = vrot.lane.b32.xlu0 %v3576, 56
      %v3587 = vpop.permute.xlu0 %3586
      %3588 = vrot.lane.b32.xlu0 %v3577, 56
      %v3589 = vpop.permute.xlu0 %3588
      %vm3590 = vcmask 457728
      %v3591 = vsel %vm3590, %v3583, %v3585
      %v3592 = vsel %vm3590, %v3585, %v3587
      %v3593 = vsel %vm3590, %v3587, %v3589
      %3597 = vst [vmem:[#allocation3 + $0x30] sm:$0xff] %v3591
      %3598 = vst [vmem:[#allocation3 + $0x38] sm:$0xff] %v3592
      %3599 = vst [vmem:[#allocation3 + $0x40] sm:$0xff] %v3593
      %v3600 = vld [vmem:[#allocation2 + $0x8] sm:$0xff]
      %v3601 = vld [vmem:[#allocation2 + $0x10] sm:$0xff]
      %v3602 = vld [vmem:[#allocation2 + $0x18] sm:$0xff]
      %v3603 = vld [vmem:[#allocation2 + $0x20] sm:$0xff]
      %3608 = vrot.lane.b32.xlu0 %v3600, 8
      %v3609 = vpop.permute.xlu0 %3608
      %3610 = vrot.lane.b32.xlu0 %v3601, 8
      %v3611 = vpop.permute.xlu0 %3610
      %3612 = vrot.lane.b32.xlu0 %v3602, 8
      %v3613 = vpop.permute.xlu0 %3612
      %3614 = vrot.lane.b32.xlu0 %v3603, 8
      %v3615 = vpop.permute.xlu0 %3614
      %vm3616 = vcmask 64512
      %v3617 = vsel %vm3616, %v3609, %v3611
      %v3618 = vsel %vm3616, %v3611, %v3613
      %v3619 = vsel %vm3616, %v3613, %v3615
      %3623 = vst [vmem:[#allocation3 + $0x48] sm:$0xff] %v3617
      %3624 = vst [vmem:[#allocation3 + $0x50] sm:$0xff] %v3618
      %3625 = vst [vmem:[#allocation3 + $0x58] sm:$0xff] %v3619
      %v3626 = vld [vmem:[#allocation2 + $0x10] sm:$0xff]
      %v3627 = vld [vmem:[#allocation2 + $0x18] sm:$0xff]
      %v3628 = vld [vmem:[#allocation2 + $0x20] sm:$0xff]
      %3629 = vst [vmem:[#allocation3 + $0x60] sm:$0xff] %v3626
      %3630 = vst [vmem:[#allocation3 + $0x68] sm:$0xff] %v3627
      %3631 = vst [vmem:[#allocation3 + $0x70] sm:$0xff] %v3628
      %v3632 = vld [vmem:[#allocation2 + $0x10] sm:$0xff]
      %v3633 = vld [vmem:[#allocation2 + $0x18] sm:$0xff]
      %v3634 = vld [vmem:[#allocation2 + $0x20] sm:$0xff]
      %v3635 = vld [vmem:[#allocation2 + $0x28] sm:$0xff]
      %3640 = vrot.lane.b32.xlu0 %v3632, 120
      %v3641 = vpop.permute.xlu0 %3640
      %3642 = vrot.lane.b32.xlu0 %v3633, 120
      %v3643 = vpop.permute.xlu0 %3642
      %3644 = vrot.lane.b32.xlu0 %v3634, 120
      %v3645 = vpop.permute.xlu0 %3644
      %3646 = vrot.lane.b32.xlu0 %v3635, 120
      %v3647 = vpop.permute.xlu0 %3646
      %vm3648 = vcmask 982016
      %v3649 = vsel %vm3648, %v3641, %v3643
      %v3650 = vsel %vm3648, %v3643, %v3645
      %v3651 = vsel %vm3648, %v3645, %v3647
      %3655 = vst [vmem:[#allocation3 + $0x78] sm:$0xff] %v3649
      %3656 = vst [vmem:[#allocation3 + $0x80] sm:$0xff] %v3650
      %3657 = vst [vmem:[#allocation3 + $0x88] sm:$0xff] %v3651
      %v3658 = vld [vmem:[#allocation2 + $0x18] sm:$0xff]
      %v3659 = vld [vmem:[#allocation2 + $0x20] sm:$0xff]
      %v3660 = vld [vmem:[#allocation2 + $0x28] sm:$0xff]
      %v3661 = vld [vmem:[#allocation2 + $0x30] sm:$0xff]
      %3666 = vrot.lane.b32.xlu0 %v3658, 72
      %v3667 = vpop.permute.xlu0 %3666
      %3668 = vrot.lane.b32.xlu0 %v3659, 72
      %v3669 = vpop.permute.xlu0 %3668
      %3670 = vrot.lane.b32.xlu0 %v3660, 72
      %v3671 = vpop.permute.xlu0 %3670
      %3672 = vrot.lane.b32.xlu0 %v3661, 72
      %v3673 = vpop.permute.xlu0 %3672
      %v3674 = vsel %vm2961, %v3667, %v3669
      %v3675 = vsel %vm2961, %v3669, %v3671
      %v3676 = vsel %vm2961, %v3671, %v3673
      %3680 = vst [vmem:[#allocation3 + $0x90] sm:$0xff] %v3674
      %3681 = vst [vmem:[#allocation3 + $0x98] sm:$0xff] %v3675
      %3682 = vst [vmem:[#allocation3 + $0xa0] sm:$0xff] %v3676
      %v3683 = vld [vmem:[#allocation2 + $0x18] sm:$0xff]
      %v3684 = vld [vmem:[#allocation2 + $0x20] sm:$0xff]
      %v3685 = vld [vmem:[#allocation2 + $0x28] sm:$0xff]
      %v3686 = vld [vmem:[#allocation2 + $0x30] sm:$0xff]
      %3691 = vrot.lane.b32.xlu0 %v3683, 64
      %v3692 = vpop.permute.xlu0 %3691
      %3693 = vrot.lane.b32.xlu0 %v3684, 64
      %v3694 = vpop.permute.xlu0 %3693
      %3695 = vrot.lane.b32.xlu0 %v3685, 64
      %v3696 = vpop.permute.xlu0 %3695
      %3697 = vrot.lane.b32.xlu0 %v3686, 64
      %v3698 = vpop.permute.xlu0 %3697
      %v3699 = vsel %vm491, %v3692, %v3694
      %v3700 = vsel %vm491, %v3694, %v3696
      %v3701 = vsel %vm491, %v3696, %v3698
      %3705 = vst [vmem:[#allocation3 + $0xa8] sm:$0xff] %v3699
      %3706 = vst [vmem:[#allocation3 + $0xb0] sm:$0xff] %v3700
      %3707 = vst [vmem:[#allocation3 + $0xb8] sm:$0xff] %v3701
      %v3708 = vld [vmem:[#allocation2 + $0x18] sm:$0xff]
      %v3709 = vld [vmem:[#allocation2 + $0x20] sm:$0xff]
      %v3710 = vld [vmem:[#allocation2 + $0x28] sm:$0xff]
      %v3711 = vld [vmem:[#allocation2 + $0x30] sm:$0xff]
      %3716 = vrot.lane.b32.xlu0 %v3708, 56
      %v3717 = vpop.permute.xlu0 %3716
      %3718 = vrot.lane.b32.xlu0 %v3709, 56
      %v3719 = vpop.permute.xlu0 %3718
      %3720 = vrot.lane.b32.xlu0 %v3710, 56
      %v3721 = vpop.permute.xlu0 %3720
      %3722 = vrot.lane.b32.xlu0 %v3711, 56
      %v3723 = vpop.permute.xlu0 %3722
      %v3724 = vsel %vm3590, %v3717, %v3719
      %v3725 = vsel %vm3590, %v3719, %v3721
      %v3726 = vsel %vm3590, %v3721, %v3723
      %3730 = vst [vmem:[#allocation3 + $0xc0] sm:$0xff] %v3724
      %3731 = vst [vmem:[#allocation3 + $0xc8] sm:$0xff] %v3725
      %3732 = vst [vmem:[#allocation3 + $0xd0] sm:$0xff] %v3726
      %s3733 = scalar_lea.vmem %s3, 16
      %v3734 = vld [vmem:[%s3733] sm:$0xff]
      %v3735 = vld [vmem:[#allocation3] sm:$0xff]
      %v3736 = vld [vmem:[#allocation3 + $0x8] sm:$0xff]
      %v3737 = vld [vmem:[#allocation3 + $0x10] sm:$0xff]
      %v3738 = vld [vmem:[#allocation3 + $0x18] sm:$0xff]
      %v3739 = vld [vmem:[#allocation3 + $0x20] sm:$0xff]
      %v3740 = vld [vmem:[#allocation3 + $0x28] sm:$0xff]
      %v3741 = vld [vmem:[#allocation3 + $0x30] sm:$0xff]
      %v3742 = vld [vmem:[#allocation3 + $0x38] sm:$0xff]
      %v3743 = vld [vmem:[#allocation3 + $0x40] sm:$0xff]
      %v3744 = vld [vmem:[#allocation3 + $0x48] sm:$0xff]
      %v3745 = vld [vmem:[#allocation3 + $0x50] sm:$0xff]
      %v3746 = vld [vmem:[#allocation3 + $0x58] sm:$0xff]
      %v3747 = vld [vmem:[#allocation3 + $0x60] sm:$0xff]
      %v3748 = vld [vmem:[#allocation3 + $0x68] sm:$0xff]
      %v3749 = vld [vmem:[#allocation3 + $0x70] sm:$0xff]
      %v3750 = vld [vmem:[#allocation3 + $0x78] sm:$0xff]
      %v3751 = vld [vmem:[#allocation3 + $0x80] sm:$0xff]
      %v3752 = vld [vmem:[#allocation3 + $0x88] sm:$0xff]
      %v3753 = vld [vmem:[#allocation3 + $0x90] sm:$0xff]
      %v3754 = vld [vmem:[#allocation3 + $0x98] sm:$0xff]
      %v3755 = vld [vmem:[#allocation3 + $0xa0] sm:$0xff]
      %v3756 = vld [vmem:[#allocation3 + $0xa8] sm:$0xff]
      %v3757 = vld [vmem:[#allocation3 + $0xb0] sm:$0xff]
      %v3758 = vld [vmem:[#allocation3 + $0xb8] sm:$0xff]
      %v3759 = vld [vmem:[#allocation3 + $0xc0] sm:$0xff]
      %v3760 = vld [vmem:[#allocation3 + $0xc8] sm:$0xff]
      %v3761 = vld [vmem:[#allocation3 + $0xd0] sm:$0xff]
      %s3762 = scalar_lea.vmem %s6, 24
      %v3763 = vld [vmem:[%s3762] sm:$0xff]
      %3765 = vset.pattern.permute.xlu0 0
      %3766 = vperm.xlu0 %3765, %v3763
      %v3767 = vpop.permute.xlu0 %3766
      %v3770 = vsel %vm2961, %v3734, 0
      %3772 = vmatprep.subr.mxu0 0.0
      %3773 = vmatpush1.msra.mxu0 0.0
      %3774 = vmatprep.subr.mxu0 0.0
      %3775 = vmatpush1.msra.mxu0 0.0
      %3776 = vmatprep.subr.mxu0 0.0
      %3777 = vmatpush1.msra.mxu0 0.0
      %3778 = vmatprep.subr.mxu0 0.0
      %3779 = vmatpush1.msra.mxu0 0.0
      %3780 = vmatprep.subr.mxu0 0.0
      %3781 = vmatpush1.msra.mxu0 0.0
      %3782 = vmatprep.subr.mxu0 0.0
      %3783 = vmatpush1.msra.mxu0 0.0
      %3784 = vmatprep.subr.mxu0 0.0
      %3785 = vmatpush1.msra.mxu0 0.0
      %3786 = vmatprep.subr.mxu0 %v3760
      %3787 = vmatpush1.msra.mxu0 %v3759
      %3788 = vmatprep.subr.mxu0 %v3757
      %3789 = vmatpush1.msra.mxu0 %v3756
      %3790 = vmatprep.subr.mxu0 %v3754
      %3791 = vmatpush1.msra.mxu0 %v3753
      %3792 = vmatprep.subr.mxu0 %v3751
      %3793 = vmatpush1.msra.mxu0 %v3750
      %3794 = vmatprep.subr.mxu0 %v3748
      %3795 = vmatpush1.msra.mxu0 %v3747
      %3796 = vmatprep.subr.mxu0 %v3745
      %3797 = vmatpush1.msra.mxu0 %v3744
      %3798 = vmatprep.subr.mxu0 %v3742
      %3799 = vmatpush1.msra.mxu0 %v3741
      %3800 = vmatprep.subr.mxu0 %v3739
      %3801 = vmatpush1.msra.mxu0 %v3738
      %3802 = vmatprep.subr.mxu0 %v3736
      %3803 = vmatpush1.msra.mxu0 %v3735
      %3804 = vmatprep.subr.mxu0 0.0
      %3805 = vmatpush2.msra.mxu0 0.0
      %3806 = vmatprep.subr.mxu0 0.0
      %3807 = vmatpush2.msra.mxu0 0.0
      %3808 = vmatprep.subr.mxu0 0.0
      %3809 = vmatpush2.msra.mxu0 0.0
      %3810 = vmatprep.subr.mxu0 0.0
      %3811 = vmatpush2.msra.mxu0 0.0
      %3812 = vmatprep.subr.mxu0 0.0
      %3813 = vmatpush2.msra.mxu0 0.0
      %3814 = vmatprep.subr.mxu0 0.0
      %3815 = vmatpush2.msra.mxu0 0.0
      %3816 = vmatprep.subr.mxu0 0.0
      %3817 = vmatpush2.msra.mxu0 0.0
      %3818 = vmatprep.subr.mxu0 0.0
      %3819 = vmatpush2.msra.mxu0 0.0
      %3820 = vmatprep.subr.mxu0 0.0
      %3821 = vmatpush2.msra.mxu0 0.0
      %3822 = vmatprep.subr.mxu0 0.0
      %3823 = vmatpush2.msra.mxu0 0.0
      %3824 = vmatprep.subr.mxu0 0.0
      %3825 = vmatpush2.msra.mxu0 0.0
      %3826 = vmatprep.subr.mxu0 0.0
      %3827 = vmatpush2.msra.mxu0 0.0
      %3828 = vmatprep.subr.mxu0 0.0
      %3829 = vmatpush2.msra.mxu0 0.0
      %3830 = vmatprep.subr.mxu0 0.0
      %3831 = vmatpush2.msra.mxu0 0.0
      %3832 = vmatprep.subr.mxu0 0.0
      %3833 = vmatpush2.msra.mxu0 0.0
      %3834 = vmatprep.subr.mxu0 0.0
      %3835 = vmatpush2.msra.mxu0 0.0
      %3836 = vmatprep.mubr.f32.mxu0 0.0
      %3837 = vmatmul.mubr.f32.gmra.mxu0 %v3770
      %v3838 = vpop.f32.mrf.mxu0
      %v3839 = vadd.f32 %v3767, %v3838
      %v3840 = vpop.f32.mrf.mxu0
      %v3841 = vadd.f32 %v3767, %v3840
      %3842 = vdwg.mxu0
      %3843 = vmatprep.subr.mxu0 0.0
      %3844 = vmatpush1.msra.mxu0 0.0
      %3845 = vmatprep.subr.mxu0 0.0
      %3846 = vmatpush1.msra.mxu0 0.0
      %3847 = vmatprep.subr.mxu0 0.0
      %3848 = vmatpush1.msra.mxu0 0.0
      %3849 = vmatprep.subr.mxu0 0.0
      %3850 = vmatpush1.msra.mxu0 0.0
      %3851 = vmatprep.subr.mxu0 0.0
      %3852 = vmatpush1.msra.mxu0 0.0
      %3853 = vmatprep.subr.mxu0 0.0
      %3854 = vmatpush1.msra.mxu0 0.0
      %3855 = vmatprep.subr.mxu0 0.0
      %3856 = vmatpush1.msra.mxu0 0.0
      %3857 = vmatprep.subr.mxu0 0.0
      %3858 = vmatpush1.msra.mxu0 %v3761
      %3859 = vmatprep.subr.mxu0 0.0
      %3860 = vmatpush1.msra.mxu0 %v3758
      %3861 = vmatprep.subr.mxu0 0.0
      %3862 = vmatpush1.msra.mxu0 %v3755
      %3863 = vmatprep.subr.mxu0 0.0
      %3864 = vmatpush1.msra.mxu0 %v3752
      %3865 = vmatprep.subr.mxu0 0.0
      %3866 = vmatpush1.msra.mxu0 %v3749
      %3867 = vmatprep.subr.mxu0 0.0
      %3868 = vmatpush1.msra.mxu0 %v3746
      %3869 = vmatprep.subr.mxu0 0.0
      %3870 = vmatpush1.msra.mxu0 %v3743
      %3871 = vmatprep.subr.mxu0 0.0
      %3872 = vmatpush1.msra.mxu0 %v3740
      %3873 = vmatprep.subr.mxu0 0.0
      %3874 = vmatpush1.msra.mxu0 %v3737
      %3875 = vmatprep.subr.mxu0 0.0
      %3876 = vmatpush2.msra.mxu0 0.0
      %3877 = vmatprep.subr.mxu0 0.0
      %3878 = vmatpush2.msra.mxu0 0.0
      %3879 = vmatprep.subr.mxu0 0.0
      %3880 = vmatpush2.msra.mxu0 0.0
      %3881 = vmatprep.subr.mxu0 0.0
      %3882 = vmatpush2.msra.mxu0 0.0
      %3883 = vmatprep.subr.mxu0 0.0
      %3884 = vmatpush2.msra.mxu0 0.0
      %3885 = vmatprep.subr.mxu0 0.0
      %3886 = vmatpush2.msra.mxu0 0.0
      %3887 = vmatprep.subr.mxu0 0.0
      %3888 = vmatpush2.msra.mxu0 0.0
      %3889 = vmatprep.subr.mxu0 0.0
      %3890 = vmatpush2.msra.mxu0 0.0
      %3891 = vmatprep.subr.mxu0 0.0
      %3892 = vmatpush2.msra.mxu0 0.0
      %3893 = vmatprep.subr.mxu0 0.0
      %3894 = vmatpush2.msra.mxu0 0.0
      %3895 = vmatprep.subr.mxu0 0.0
      %3896 = vmatpush2.msra.mxu0 0.0
      %3897 = vmatprep.subr.mxu0 0.0
      %3898 = vmatpush2.msra.mxu0 0.0
      %3899 = vmatprep.subr.mxu0 0.0
      %3900 = vmatpush2.msra.mxu0 0.0
      %3901 = vmatprep.subr.mxu0 0.0
      %3902 = vmatpush2.msra.mxu0 0.0
      %3903 = vmatprep.subr.mxu0 0.0
      %3904 = vmatpush2.msra.mxu0 0.0
      %3905 = vmatprep.subr.mxu0 0.0
      %3906 = vmatpush2.msra.mxu0 0.0
      %3907 = vmatprep.mubr.f32.mxu0 0.0
      %3908 = vmatmul.mubr.f32.gmra.mxu0 %v3770
      %v3909 = vpop.f32.mrf.mxu0
      %v3910 = vadd.f32 %v3767, %v3909
      %v3911 = vpop.f32.mrf.mxu0
      %3912 = vdwg.mxu0
      %v3913 = vmax.f32 %v3839, 0.0
      %v3914 = vmax.f32 %v3841, 0.0
      %v3915 = vmax.f32 %v3910, 0.0
      %v3916 = vmul.f32 %v3913, %v2694
      %v3917 = vmul.f32 %v3914, %v2698
      %v3918 = vmul.f32 %v3915, %v2702
      %v3919 = vadd.f32 %v3518, %v3916
      %v3920 = vadd.f32 %v3519, %v3917
      %v3921 = vadd.f32 %v3520, %v3918
      %v3922 = vld [vmem:[%s4] sm:$0xff]
      %s3923 = scalar_lea.vmem %s6, 32
      %v3924 = vld [vmem:[%s3923] sm:$0xff]
      %3926 = vset.pattern.permute.xlu0 0
      %3927 = vperm.xlu0 %3926, %v3924
      %v3928 = vpop.permute.xlu0 %3927
      %v3931 = vsel %vm3616, %v3922, 0
      %3933 = vmatprep.subr.mxu0 0.0
      %3934 = vmatpush1.msra.mxu0 0.0
      %3935 = vmatprep.subr.mxu0 0.0
      %3936 = vmatpush1.msra.mxu0 0.0
      %3937 = vmatprep.subr.mxu0 0.0
      %3938 = vmatpush1.msra.mxu0 0.0
      %3939 = vmatprep.subr.mxu0 0.0
      %3940 = vmatpush1.msra.mxu0 0.0
      %3941 = vmatprep.subr.mxu0 0.0
      %3942 = vmatpush1.msra.mxu0 0.0
      %3943 = vmatprep.subr.mxu0 0.0
      %3944 = vmatpush1.msra.mxu0 0.0
      %3945 = vmatprep.subr.mxu0 0.0
      %3946 = vmatpush1.msra.mxu0 0.0
      %3947 = vmatprep.subr.mxu0 0.0
      %3948 = vmatpush1.msra.mxu0 0.0
      %3949 = vmatprep.subr.mxu0 0.0
      %3950 = vmatpush1.msra.mxu0 0.0
      %3951 = vmatprep.subr.mxu0 0.0
      %3952 = vmatpush1.msra.mxu0 0.0
      %3953 = vmatprep.subr.mxu0 0.0
      %3954 = vmatpush1.msra.mxu0 0.0
      %3955 = vmatprep.subr.mxu0 0.0
      %3956 = vmatpush1.msra.mxu0 0.0
      %3957 = vmatprep.subr.mxu0 0.0
      %3958 = vmatpush1.msra.mxu0 0.0
      %3959 = vmatprep.subr.mxu0 0.0
      %3960 = vmatpush1.msra.mxu0 0.0
      %3961 = vmatprep.subr.mxu0 0.0
      %3962 = vmatpush1.msra.mxu0 0.0
      %3963 = vmatprep.subr.mxu0 %v3917
      %3964 = vmatpush1.msra.mxu0 %v3916
      %3965 = vmatprep.subr.mxu0 0.0
      %3966 = vmatpush2.msra.mxu0 0.0
      %3967 = vmatprep.subr.mxu0 0.0
      %3968 = vmatpush2.msra.mxu0 0.0
      %3969 = vmatprep.subr.mxu0 0.0
      %3970 = vmatpush2.msra.mxu0 0.0
      %3971 = vmatprep.subr.mxu0 0.0
      %3972 = vmatpush2.msra.mxu0 0.0
      %3973 = vmatprep.subr.mxu0 0.0
      %3974 = vmatpush2.msra.mxu0 0.0
      %3975 = vmatprep.subr.mxu0 0.0
      %3976 = vmatpush2.msra.mxu0 0.0
      %3977 = vmatprep.subr.mxu0 0.0
      %3978 = vmatpush2.msra.mxu0 0.0
      %3979 = vmatprep.subr.mxu0 0.0
      %3980 = vmatpush2.msra.mxu0 0.0
      %3981 = vmatprep.subr.mxu0 0.0
      %3982 = vmatpush2.msra.mxu0 0.0
      %3983 = vmatprep.subr.mxu0 0.0
      %3984 = vmatpush2.msra.mxu0 0.0
      %3985 = vmatprep.subr.mxu0 0.0
      %3986 = vmatpush2.msra.mxu0 0.0
      %3987 = vmatprep.subr.mxu0 0.0
      %3988 = vmatpush2.msra.mxu0 0.0
      %3989 = vmatprep.subr.mxu0 0.0
      %3990 = vmatpush2.msra.mxu0 0.0
      %3991 = vmatprep.subr.mxu0 0.0
      %3992 = vmatpush2.msra.mxu0 0.0
      %3993 = vmatprep.subr.mxu0 0.0
      %3994 = vmatpush2.msra.mxu0 0.0
      %3995 = vmatprep.subr.mxu0 0.0
      %3996 = vmatpush2.msra.mxu0 0.0
      %3997 = vmatprep.mubr.f32.mxu0 0.0
      %3998 = vmatmul.mubr.f32.gmra.mxu0 %v3931
      %v3999 = vpop.f32.mrf.mxu0
      %v4000 = vadd.f32 %v3928, %v3999
      %v4001 = vpop.f32.mrf.mxu0
      %v4002 = vadd.f32 %v3928, %v4001
      %4003 = vdwg.mxu0
      %4004 = vmatprep.subr.mxu0 0.0
      %4005 = vmatpush1.msra.mxu0 0.0
      %4006 = vmatprep.subr.mxu0 0.0
      %4007 = vmatpush1.msra.mxu0 0.0
      %4008 = vmatprep.subr.mxu0 0.0
      %4009 = vmatpush1.msra.mxu0 0.0
      %4010 = vmatprep.subr.mxu0 0.0
      %4011 = vmatpush1.msra.mxu0 0.0
      %4012 = vmatprep.subr.mxu0 0.0
      %4013 = vmatpush1.msra.mxu0 0.0
      %4014 = vmatprep.subr.mxu0 0.0
      %4015 = vmatpush1.msra.mxu0 0.0
      %4016 = vmatprep.subr.mxu0 0.0
      %4017 = vmatpush1.msra.mxu0 0.0
      %4018 = vmatprep.subr.mxu0 0.0
      %4019 = vmatpush1.msra.mxu0 0.0
      %4020 = vmatprep.subr.mxu0 0.0
      %4021 = vmatpush1.msra.mxu0 0.0
      %4022 = vmatprep.subr.mxu0 0.0
      %4023 = vmatpush1.msra.mxu0 0.0
      %4024 = vmatprep.subr.mxu0 0.0
      %4025 = vmatpush1.msra.mxu0 0.0
      %4026 = vmatprep.subr.mxu0 0.0
      %4027 = vmatpush1.msra.mxu0 0.0
      %4028 = vmatprep.subr.mxu0 0.0
      %4029 = vmatpush1.msra.mxu0 0.0
      %4030 = vmatprep.subr.mxu0 0.0
      %4031 = vmatpush1.msra.mxu0 0.0
      %4032 = vmatprep.subr.mxu0 0.0
      %4033 = vmatpush1.msra.mxu0 0.0
      %4034 = vmatprep.subr.mxu0 0.0
      %4035 = vmatpush1.msra.mxu0 %v3918
      %4036 = vmatprep.subr.mxu0 0.0
      %4037 = vmatpush2.msra.mxu0 0.0
      %4038 = vmatprep.subr.mxu0 0.0
      %4039 = vmatpush2.msra.mxu0 0.0
      %4040 = vmatprep.subr.mxu0 0.0
      %4041 = vmatpush2.msra.mxu0 0.0
      %4042 = vmatprep.subr.mxu0 0.0
      %4043 = vmatpush2.msra.mxu0 0.0
      %4044 = vmatprep.subr.mxu0 0.0
      %4045 = vmatpush2.msra.mxu0 0.0
      %4046 = vmatprep.subr.mxu0 0.0
      %4047 = vmatpush2.msra.mxu0 0.0
      %4048 = vmatprep.subr.mxu0 0.0
      %4049 = vmatpush2.msra.mxu0 0.0
      %4050 = vmatprep.subr.mxu0 0.0
      %4051 = vmatpush2.msra.mxu0 0.0
      %4052 = vmatprep.subr.mxu0 0.0
      %4053 = vmatpush2.msra.mxu0 0.0
      %4054 = vmatprep.subr.mxu0 0.0
      %4055 = vmatpush2.msra.mxu0 0.0
      %4056 = vmatprep.subr.mxu0 0.0
      %4057 = vmatpush2.msra.mxu0 0.0
      %4058 = vmatprep.subr.mxu0 0.0
      %4059 = vmatpush2.msra.mxu0 0.0
      %4060 = vmatprep.subr.mxu0 0.0
      %4061 = vmatpush2.msra.mxu0 0.0
      %4062 = vmatprep.subr.mxu0 0.0
      %4063 = vmatpush2.msra.mxu0 0.0
      %4064 = vmatprep.subr.mxu0 0.0
      %4065 = vmatpush2.msra.mxu0 0.0
      %4066 = vmatprep.subr.mxu0 0.0
      %4067 = vmatpush2.msra.mxu0 0.0
      %4068 = vmatprep.mubr.f32.mxu0 0.0
      %4069 = vmatmul.mubr.f32.gmra.mxu0 %v3931
      %v4070 = vpop.f32.mrf.mxu0
      %v4071 = vadd.f32 %v3928, %v4070
      %v4072 = vpop.f32.mrf.mxu0
      %4073 = vdwg.mxu0
      %v4074 = vmax.f32 %v4000, 0.0
      %v4075 = vmax.f32 %v4002, 0.0
      %v4076 = vmax.f32 %v4071, 0.0
      %v4077 = vmul.f32 %v4074, %v2694
      %v4078 = vmul.f32 %v4075, %v2698
      %v4079 = vmul.f32 %v4076, %v2702
      %v4080 = vadd.f32 %v3919, %v4077
      %v4081 = vadd.f32 %v3920, %v4078
      %v4082 = vadd.f32 %v3921, %v4079
      %s4083 = scalar_lea.vmem %s4, 8
      %v4084 = vld [vmem:[%s4083] sm:$0xff]
      %s4085 = scalar_lea.vmem %s6, 40
      %v4086 = vld [vmem:[%s4085] sm:$0xff]
      %4088 = vset.pattern.permute.xlu0 0
      %4089 = vperm.xlu0 %4088, %v4086
      %v4090 = vpop.permute.xlu0 %4089
      %v4093 = vsel %vm3616, %v4084, 0
      %4095 = vmatprep.subr.mxu0 0.0
      %4096 = vmatpush1.msra.mxu0 0.0
      %4097 = vmatprep.subr.mxu0 0.0
      %4098 = vmatpush1.msra.mxu0 0.0
      %4099 = vmatprep.subr.mxu0 0.0
      %4100 = vmatpush1.msra.mxu0 0.0
      %4101 = vmatprep.subr.mxu0 0.0
      %4102 = vmatpush1.msra.mxu0 0.0
      %4103 = vmatprep.subr.mxu0 0.0
      %4104 = vmatpush1.msra.mxu0 0.0
      %4105 = vmatprep.subr.mxu0 0.0
      %4106 = vmatpush1.msra.mxu0 0.0
      %4107 = vmatprep.subr.mxu0 0.0
      %4108 = vmatpush1.msra.mxu0 0.0
      %4109 = vmatprep.subr.mxu0 0.0
      %4110 = vmatpush1.msra.mxu0 0.0
      %4111 = vmatprep.subr.mxu0 0.0
      %4112 = vmatpush1.msra.mxu0 0.0
      %4113 = vmatprep.subr.mxu0 0.0
      %4114 = vmatpush1.msra.mxu0 0.0
      %4115 = vmatprep.subr.mxu0 0.0
      %4116 = vmatpush1.msra.mxu0 0.0
      %4117 = vmatprep.subr.mxu0 0.0
      %4118 = vmatpush1.msra.mxu0 0.0
      %4119 = vmatprep.subr.mxu0 0.0
      %4120 = vmatpush1.msra.mxu0 0.0
      %4121 = vmatprep.subr.mxu0 0.0
      %4122 = vmatpush1.msra.mxu0 0.0
      %4123 = vmatprep.subr.mxu0 0.0
      %4124 = vmatpush1.msra.mxu0 0.0
      %4125 = vmatprep.subr.mxu0 %v4078
      %4126 = vmatpush1.msra.mxu0 %v4077
      %4127 = vmatprep.subr.mxu0 0.0
      %4128 = vmatpush2.msra.mxu0 0.0
      %4129 = vmatprep.subr.mxu0 0.0
      %4130 = vmatpush2.msra.mxu0 0.0
      %4131 = vmatprep.subr.mxu0 0.0
      %4132 = vmatpush2.msra.mxu0 0.0
      %4133 = vmatprep.subr.mxu0 0.0
      %4134 = vmatpush2.msra.mxu0 0.0
      %4135 = vmatprep.subr.mxu0 0.0
      %4136 = vmatpush2.msra.mxu0 0.0
      %4137 = vmatprep.subr.mxu0 0.0
      %4138 = vmatpush2.msra.mxu0 0.0
      %4139 = vmatprep.subr.mxu0 0.0
      %4140 = vmatpush2.msra.mxu0 0.0
      %4141 = vmatprep.subr.mxu0 0.0
      %4142 = vmatpush2.msra.mxu0 0.0
      %4143 = vmatprep.subr.mxu0 0.0
      %4144 = vmatpush2.msra.mxu0 0.0
      %4145 = vmatprep.subr.mxu0 0.0
      %4146 = vmatpush2.msra.mxu0 0.0
      %4147 = vmatprep.subr.mxu0 0.0
      %4148 = vmatpush2.msra.mxu0 0.0
      %4149 = vmatprep.subr.mxu0 0.0
      %4150 = vmatpush2.msra.mxu0 0.0
      %4151 = vmatprep.subr.mxu0 0.0
      %4152 = vmatpush2.msra.mxu0 0.0
      %4153 = vmatprep.subr.mxu0 0.0
      %4154 = vmatpush2.msra.mxu0 0.0
      %4155 = vmatprep.subr.mxu0 0.0
      %4156 = vmatpush2.msra.mxu0 0.0
      %4157 = vmatprep.subr.mxu0 0.0
      %4158 = vmatpush2.msra.mxu0 0.0
      %4159 = vmatprep.mubr.f32.mxu0 0.0
      %4160 = vmatmul.mubr.f32.gmra.mxu0 %v4093
      %v4161 = vpop.f32.mrf.mxu0
      %v4162 = vadd.f32 %v4090, %v4161
      %v4163 = vpop.f32.mrf.mxu0
      %v4164 = vadd.f32 %v4090, %v4163
      %4165 = vdwg.mxu0
      %4166 = vmatprep.subr.mxu0 0.0
      %4167 = vmatpush1.msra.mxu0 0.0
      %4168 = vmatprep.subr.mxu0 0.0
      %4169 = vmatpush1.msra.mxu0 0.0
      %4170 = vmatprep.subr.mxu0 0.0
      %4171 = vmatpush1.msra.mxu0 0.0
      %4172 = vmatprep.subr.mxu0 0.0
      %4173 = vmatpush1.msra.mxu0 0.0
      %4174 = vmatprep.subr.mxu0 0.0
      %4175 = vmatpush1.msra.mxu0 0.0
      %4176 = vmatprep.subr.mxu0 0.0
      %4177 = vmatpush1.msra.mxu0 0.0
      %4178 = vmatprep.subr.mxu0 0.0
      %4179 = vmatpush1.msra.mxu0 0.0
      %4180 = vmatprep.subr.mxu0 0.0
      %4181 = vmatpush1.msra.mxu0 0.0
      %4182 = vmatprep.subr.mxu0 0.0
      %4183 = vmatpush1.msra.mxu0 0.0
      %4184 = vmatprep.subr.mxu0 0.0
      %4185 = vmatpush1.msra.mxu0 0.0
      %4186 = vmatprep.subr.mxu0 0.0
      %4187 = vmatpush1.msra.mxu0 0.0
      %4188 = vmatprep.subr.mxu0 0.0
      %4189 = vmatpush1.msra.mxu0 0.0
      %4190 = vmatprep.subr.mxu0 0.0
      %4191 = vmatpush1.msra.mxu0 0.0
      %4192 = vmatprep.subr.mxu0 0.0
      %4193 = vmatpush1.msra.mxu0 0.0
      %4194 = vmatprep.subr.mxu0 0.0
      %4195 = vmatpush1.msra.mxu0 0.0
      %4196 = vmatprep.subr.mxu0 0.0
      %4197 = vmatpush1.msra.mxu0 %v4079
      %4198 = vmatprep.subr.mxu0 0.0
      %4199 = vmatpush2.msra.mxu0 0.0
      %4200 = vmatprep.subr.mxu0 0.0
      %4201 = vmatpush2.msra.mxu0 0.0
      %4202 = vmatprep.subr.mxu0 0.0
      %4203 = vmatpush2.msra.mxu0 0.0
      %4204 = vmatprep.subr.mxu0 0.0
      %4205 = vmatpush2.msra.mxu0 0.0
      %4206 = vmatprep.subr.mxu0 0.0
      %4207 = vmatpush2.msra.mxu0 0.0
      %4208 = vmatprep.subr.mxu0 0.0
      %4209 = vmatpush2.msra.mxu0 0.0
      %4210 = vmatprep.subr.mxu0 0.0
      %4211 = vmatpush2.msra.mxu0 0.0
      %4212 = vmatprep.subr.mxu0 0.0
      %4213 = vmatpush2.msra.mxu0 0.0
      %4214 = vmatprep.subr.mxu0 0.0
      %4215 = vmatpush2.msra.mxu0 0.0
      %4216 = vmatprep.subr.mxu0 0.0
      %4217 = vmatpush2.msra.mxu0 0.0
      %4218 = vmatprep.subr.mxu0 0.0
      %4219 = vmatpush2.msra.mxu0 0.0
      %4220 = vmatprep.subr.mxu0 0.0
      %4221 = vmatpush2.msra.mxu0 0.0
      %4222 = vmatprep.subr.mxu0 0.0
      %4223 = vmatpush2.msra.mxu0 0.0
      %4224 = vmatprep.subr.mxu0 0.0
      %4225 = vmatpush2.msra.mxu0 0.0
      %4226 = vmatprep.subr.mxu0 0.0
      %4227 = vmatpush2.msra.mxu0 0.0
      %4228 = vmatprep.subr.mxu0 0.0
      %4229 = vmatpush2.msra.mxu0 0.0
      %4230 = vmatprep.mubr.f32.mxu0 0.0
      %4231 = vmatmul.mubr.f32.gmra.mxu0 %v4093
      %v4232 = vpop.f32.mrf.mxu0
      %v4233 = vadd.f32 %v4090, %v4232
      %v4234 = vpop.f32.mrf.mxu0
      %4235 = vdwg.mxu0
      %v4236 = vmax.f32 %v4162, 0.0
      %v4237 = vmax.f32 %v4164, 0.0
      %v4238 = vmax.f32 %v4233, 0.0
      %v4239 = vmul.f32 %v4236, %v2694
      %v4240 = vmul.f32 %v4237, %v2698
      %v4241 = vmul.f32 %v4238, %v2702
      %v4242 = vadd.f32 %v4080, %v4239
      %v4243 = vadd.f32 %v4081, %v4240
      %v4244 = vadd.f32 %v4082, %v4241
      %4245 = vst [vmem:[#allocation2 + $0x10] sm:$0xff] %v4242
      %4246 = vst [vmem:[#allocation2 + $0x18] sm:$0xff] %v4243
      %4247 = vst [vmem:[#allocation2 + $0x20] sm:$0xff] %v4244
      %v4248 = vld [vmem:[#allocation2 + $0x8] sm:$0xff]
      %v4249 = vld [vmem:[#allocation2 + $0x10] sm:$0xff]
      %v4250 = vld [vmem:[#allocation2 + $0x18] sm:$0xff]
      %v4251 = vld [vmem:[#allocation2 + $0x20] sm:$0xff]
      %4256 = vrot.lane.b32.xlu0 %v4248, 25
      %v4257 = vpop.permute.xlu0 %4256
      %4258 = vrot.lane.b32.xlu0 %v4249, 25
      %v4259 = vpop.permute.xlu0 %4258
      %4260 = vrot.lane.b32.xlu0 %v4250, 25
      %v4261 = vpop.permute.xlu0 %4260
      %4262 = vrot.lane.b32.xlu0 %v4251, 25
      %v4263 = vpop.permute.xlu0 %4262
      %v4264 = vsel %vm700, %v4257, %v4259
      %v4265 = vsel %vm700, %v4259, %v4261
      %v4266 = vsel %vm700, %v4261, %v4263
      %4270 = vst [vmem:[#allocation3] sm:$0xff] %v4264
      %4271 = vst [vmem:[#allocation3 + $0x8] sm:$0xff] %v4265
      %4272 = vst [vmem:[#allocation3 + $0x10] sm:$0xff] %v4266
      %v4273 = vld [vmem:[#allocation2 + $0x8] sm:$0xff]
      %v4274 = vld [vmem:[#allocation2 + $0x10] sm:$0xff]
      %v4275 = vld [vmem:[#allocation2 + $0x18] sm:$0xff]
      %v4276 = vld [vmem:[#allocation2 + $0x20] sm:$0xff]
      %4281 = vrot.lane.b32.xlu0 %v4273, 24
      %v4282 = vpop.permute.xlu0 %4281
      %4283 = vrot.lane.b32.xlu0 %v4274, 24
      %v4284 = vpop.permute.xlu0 %4283
      %4285 = vrot.lane.b32.xlu0 %v4275, 24
      %v4286 = vpop.permute.xlu0 %4285
      %4287 = vrot.lane.b32.xlu0 %v4276, 24
      %v4288 = vpop.permute.xlu0 %4287
      %v4289 = vsel %vm442, %v4282, %v4284
      %v4290 = vsel %vm442, %v4284, %v4286
      %v4291 = vsel %vm442, %v4286, %v4288
      %4295 = vst [vmem:[#allocation3 + $0x18] sm:$0xff] %v4289
      %4296 = vst [vmem:[#allocation3 + $0x20] sm:$0xff] %v4290
      %4297 = vst [vmem:[#allocation3 + $0x28] sm:$0xff] %v4291
      %v4298 = vld [vmem:[#allocation2 + $0x8] sm:$0xff]
      %v4299 = vld [vmem:[#allocation2 + $0x10] sm:$0xff]
      %v4300 = vld [vmem:[#allocation2 + $0x18] sm:$0xff]
      %v4301 = vld [vmem:[#allocation2 + $0x20] sm:$0xff]
      %4306 = vrot.lane.b32.xlu0 %v4298, 23
      %v4307 = vpop.permute.xlu0 %4306
      %4308 = vrot.lane.b32.xlu0 %v4299, 23
      %v4309 = vpop.permute.xlu0 %4308
      %4310 = vrot.lane.b32.xlu0 %v4300, 23
      %v4311 = vpop.permute.xlu0 %4310
      %4312 = vrot.lane.b32.xlu0 %v4301, 23
      %v4313 = vpop.permute.xlu0 %4312
      %v4314 = vsel %vm959, %v4307, %v4309
      %v4315 = vsel %vm959, %v4309, %v4311
      %v4316 = vsel %vm959, %v4311, %v4313
      %4320 = vst [vmem:[#allocation3 + $0x30] sm:$0xff] %v4314
      %4321 = vst [vmem:[#allocation3 + $0x38] sm:$0xff] %v4315
      %4322 = vst [vmem:[#allocation3 + $0x40] sm:$0xff] %v4316
      %v4323 = vld [vmem:[#allocation2 + $0x8] sm:$0xff]
      %v4324 = vld [vmem:[#allocation2 + $0x10] sm:$0xff]
      %v4325 = vld [vmem:[#allocation2 + $0x18] sm:$0xff]
      %v4326 = vld [vmem:[#allocation2 + $0x20] sm:$0xff]
      %4331 = vrot.lane.b32.xlu0 %v4323, 1
      %v4332 = vpop.permute.xlu0 %4331
      %4333 = vrot.lane.b32.xlu0 %v4324, 1
      %v4334 = vpop.permute.xlu0 %4333
      %4335 = vrot.lane.b32.xlu0 %v4325, 1
      %v4336 = vpop.permute.xlu0 %4335
      %4337 = vrot.lane.b32.xlu0 %v4326, 1
      %v4338 = vpop.permute.xlu0 %4337
      %v4339 = vsel %vm1221, %v4332, %v4334
      %v4340 = vsel %vm1221, %v4334, %v4336
      %v4341 = vsel %vm1221, %v4336, %v4338
      %4345 = vst [vmem:[#allocation3 + $0x48] sm:$0xff] %v4339
      %4346 = vst [vmem:[#allocation3 + $0x50] sm:$0xff] %v4340
      %4347 = vst [vmem:[#allocation3 + $0x58] sm:$0xff] %v4341
      %v4348 = vld [vmem:[#allocation2 + $0x10] sm:$0xff]
      %v4349 = vld [vmem:[#allocation2 + $0x18] sm:$0xff]
      %v4350 = vld [vmem:[#allocation2 + $0x20] sm:$0xff]
      %4351 = vst [vmem:[#allocation3 + $0x60] sm:$0xff] %v4348
      %4352 = vst [vmem:[#allocation3 + $0x68] sm:$0xff] %v4349
      %4353 = vst [vmem:[#allocation3 + $0x70] sm:$0xff] %v4350
      %v4354 = vld [vmem:[#allocation2 + $0x10] sm:$0xff]
      %v4355 = vld [vmem:[#allocation2 + $0x18] sm:$0xff]
      %v4356 = vld [vmem:[#allocation2 + $0x20] sm:$0xff]
      %v4357 = vld [vmem:[#allocation2 + $0x28] sm:$0xff]
      %4362 = vrot.lane.b32.xlu0 %v4354, 127
      %v4363 = vpop.permute.xlu0 %4362
      %4364 = vrot.lane.b32.xlu0 %v4355, 127
      %v4365 = vpop.permute.xlu0 %4364
      %4366 = vrot.lane.b32.xlu0 %v4356, 127
      %v4367 = vpop.permute.xlu0 %4366
      %4368 = vrot.lane.b32.xlu0 %v4357, 127
      %v4369 = vpop.permute.xlu0 %4368
      %v4370 = vsel %vm1696, %v4363, %v4365
      %v4371 = vsel %vm1696, %v4365, %v4367
      %v4372 = vsel %vm1696, %v4367, %v4369
      %4376 = vst [vmem:[#allocation3 + $0x78] sm:$0xff] %v4370
      %4377 = vst [vmem:[#allocation3 + $0x80] sm:$0xff] %v4371
      %4378 = vst [vmem:[#allocation3 + $0x88] sm:$0xff] %v4372
      %v4379 = vld [vmem:[#allocation2 + $0x10] sm:$0xff]
      %v4380 = vld [vmem:[#allocation2 + $0x18] sm:$0xff]
      %v4381 = vld [vmem:[#allocation2 + $0x20] sm:$0xff]
      %v4382 = vld [vmem:[#allocation2 + $0x28] sm:$0xff]
      %4387 = vrot.lane.b32.xlu0 %v4379, 105
      %v4388 = vpop.permute.xlu0 %4387
      %4389 = vrot.lane.b32.xlu0 %v4380, 105
      %v4390 = vpop.permute.xlu0 %4389
      %4391 = vrot.lane.b32.xlu0 %v4381, 105
      %v4392 = vpop.permute.xlu0 %4391
      %4393 = vrot.lane.b32.xlu0 %v4382, 105
      %v4394 = vpop.permute.xlu0 %4393
      %v4395 = vsel %vm1958, %v4388, %v4390
      %v4396 = vsel %vm1958, %v4390, %v4392
      %v4397 = vsel %vm1958, %v4392, %v4394
      %4401 = vst [vmem:[#allocation3 + $0x90] sm:$0xff] %v4395
      %4402 = vst [vmem:[#allocation3 + $0x98] sm:$0xff] %v4396
      %4403 = vst [vmem:[#allocation3 + $0xa0] sm:$0xff] %v4397
      %v4404 = vld [vmem:[#allocation2 + $0x10] sm:$0xff]
      %v4405 = vld [vmem:[#allocation2 + $0x18] sm:$0xff]
      %v4406 = vld [vmem:[#allocation2 + $0x20] sm:$0xff]
      %v4407 = vld [vmem:[#allocation2 + $0x28] sm:$0xff]
      %4412 = vrot.lane.b32.xlu0 %v4404, 104
      %v4413 = vpop.permute.xlu0 %4412
      %4414 = vrot.lane.b32.xlu0 %v4405, 104
      %v4415 = vpop.permute.xlu0 %4414
      %4416 = vrot.lane.b32.xlu0 %v4406, 104
      %v4417 = vpop.permute.xlu0 %4416
      %4418 = vrot.lane.b32.xlu0 %v4407, 104
      %v4419 = vpop.permute.xlu0 %4418
      %v4420 = vsel %vm2220, %v4413, %v4415
      %v4421 = vsel %vm2220, %v4415, %v4417
      %v4422 = vsel %vm2220, %v4417, %v4419
      %4426 = vst [vmem:[#allocation3 + $0xa8] sm:$0xff] %v4420
      %4427 = vst [vmem:[#allocation3 + $0xb0] sm:$0xff] %v4421
      %4428 = vst [vmem:[#allocation3 + $0xb8] sm:$0xff] %v4422
      %v4429 = vld [vmem:[#allocation2 + $0x10] sm:$0xff]
      %v4430 = vld [vmem:[#allocation2 + $0x18] sm:$0xff]
      %v4431 = vld [vmem:[#allocation2 + $0x20] sm:$0xff]
      %v4432 = vld [vmem:[#allocation2 + $0x28] sm:$0xff]
      %4437 = vrot.lane.b32.xlu0 %v4429, 103
      %v4438 = vpop.permute.xlu0 %4437
      %4439 = vrot.lane.b32.xlu0 %v4430, 103
      %v4440 = vpop.permute.xlu0 %4439
      %4441 = vrot.lane.b32.xlu0 %v4431, 103
      %v4442 = vpop.permute.xlu0 %4441
      %4443 = vrot.lane.b32.xlu0 %v4432, 103
      %v4444 = vpop.permute.xlu0 %4443
      %v4445 = vsel %vm2482, %v4438, %v4440
      %v4446 = vsel %vm2482, %v4440, %v4442
      %v4447 = vsel %vm2482, %v4442, %v4444
      %4451 = vst [vmem:[#allocation3 + $0xc0] sm:$0xff] %v4445
      %4452 = vst [vmem:[#allocation3 + $0xc8] sm:$0xff] %v4446
      %4453 = vst [vmem:[#allocation3 + $0xd0] sm:$0xff] %v4447
      %v4454 = vld [vmem:[%s5] sm:$0xff]
      %v4455 = vld [vmem:[%s5 + $0x8] sm:$0xff]
      %v4456 = vld [vmem:[%s5 + $0x10] sm:$0xff]
      %v4457 = vld [vmem:[%s5 + $0x18] sm:$0xff]
      %v4458 = vld [vmem:[%s5 + $0x20] sm:$0xff]
      %v4459 = vld [vmem:[%s5 + $0x28] sm:$0xff]
      %v4460 = vld [vmem:[%s5 + $0x30] sm:$0xff]
      %v4461 = vld [vmem:[%s5 + $0x38] sm:$0xff]
      %v4462 = vld [vmem:[#allocation3] sm:$0xff]
      %v4463 = vld [vmem:[#allocation3 + $0x8] sm:$0xff]
      %v4464 = vld [vmem:[#allocation3 + $0x10] sm:$0xff]
      %v4465 = vld [vmem:[#allocation3 + $0x18] sm:$0xff]
      %v4466 = vld [vmem:[#allocation3 + $0x20] sm:$0xff]
      %v4467 = vld [vmem:[#allocation3 + $0x28] sm:$0xff]
      %v4468 = vld [vmem:[#allocation3 + $0x30] sm:$0xff]
      %v4469 = vld [vmem:[#allocation3 + $0x38] sm:$0xff]
      %v4470 = vld [vmem:[#allocation3 + $0x40] sm:$0xff]
      %v4471 = vld [vmem:[#allocation3 + $0x48] sm:$0xff]
      %v4472 = vld [vmem:[#allocation3 + $0x50] sm:$0xff]
      %v4473 = vld [vmem:[#allocation3 + $0x58] sm:$0xff]
      %v4474 = vld [vmem:[#allocation3 + $0x60] sm:$0xff]
      %v4475 = vld [vmem:[#allocation3 + $0x68] sm:$0xff]
      %v4476 = vld [vmem:[#allocation3 + $0x70] sm:$0xff]
      %v4477 = vld [vmem:[#allocation3 + $0x78] sm:$0xff]
      %v4478 = vld [vmem:[#allocation3 + $0x80] sm:$0xff]
      %v4479 = vld [vmem:[#allocation3 + $0x88] sm:$0xff]
      %v4480 = vld [vmem:[#allocation3 + $0x90] sm:$0xff]
      %v4481 = vld [vmem:[#allocation3 + $0x98] sm:$0xff]
      %v4482 = vld [vmem:[#allocation3 + $0xa0] sm:$0xff]
      %v4483 = vld [vmem:[#allocation3 + $0xa8] sm:$0xff]
      %v4484 = vld [vmem:[#allocation3 + $0xb0] sm:$0xff]
      %v4485 = vld [vmem:[#allocation3 + $0xb8] sm:$0xff]
      %v4486 = vld [vmem:[#allocation3 + $0xc0] sm:$0xff]
      %v4487 = vld [vmem:[#allocation3 + $0xc8] sm:$0xff]
      %v4488 = vld [vmem:[#allocation3 + $0xd0] sm:$0xff]
      %v4489 = vld [vmem:[%s7] sm:$0xff]
      %v4490 = vld [vmem:[%s7 + $0x8] sm:$0xff]
      %v4491 = vld [vmem:[%s7 + $0x10] sm:$0xff]
      %v4492 = vld [vmem:[%s7 + $0x18] sm:$0xff]
      %v4493 = vld [vmem:[%s7 + $0x20] sm:$0xff]
      %v4494 = vld [vmem:[%s7 + $0x28] sm:$0xff]
      %v4495 = vld [vmem:[%s7 + $0x30] sm:$0xff]
      %v4496 = vld [vmem:[%s7 + $0x38] sm:$0xff]
      %4498 = vset.pattern.permute.xlu0 0
      %4499 = vperm.xlu0 %4498, %v4489
      %v4500 = vpop.permute.xlu0 %4499
      %4503 = vset.pattern.permute.xlu0 0
      %4504 = vperm.xlu0 %4503, %v4490
      %v4505 = vpop.permute.xlu0 %4504
      %4508 = vset.pattern.permute.xlu0 0
      %4509 = vperm.xlu0 %4508, %v4491
      %v4510 = vpop.permute.xlu0 %4509
      %4513 = vset.pattern.permute.xlu0 0
      %4514 = vperm.xlu0 %4513, %v4492
      %v4515 = vpop.permute.xlu0 %4514
      %4518 = vset.pattern.permute.xlu0 0
      %4519 = vperm.xlu0 %4518, %v4493
      %v4520 = vpop.permute.xlu0 %4519
      %4523 = vset.pattern.permute.xlu0 0
      %4524 = vperm.xlu0 %4523, %v4494
      %v4525 = vpop.permute.xlu0 %4524
      %4528 = vset.pattern.permute.xlu0 0
      %4529 = vperm.xlu0 %4528, %v4495
      %v4530 = vpop.permute.xlu0 %4529
      %4533 = vset.pattern.permute.xlu0 0
      %4534 = vperm.xlu0 %4533, %v4496
      %v4535 = vpop.permute.xlu0 %4534
      %v4538 = vsel %vm2961, %v4454, 0
      %v4541 = vsel %vm2961, %v4455, 0
      %v4544 = vsel %vm2961, %v4456, 0
      %v4547 = vsel %vm2961, %v4457, 0
      %v4550 = vsel %vm2961, %v4458, 0
      %v4553 = vsel %vm2961, %v4459, 0
      %v4556 = vsel %vm2961, %v4460, 0
      %v4559 = vsel %vm2961, %v4461, 0
      %4561 = vmatprep.subr.mxu0 0.0
      %4562 = vmatpush1.msra.mxu0 0.0
      %4563 = vmatprep.subr.mxu0 0.0
      %4564 = vmatpush1.msra.mxu0 0.0
      %4565 = vmatprep.subr.mxu0 0.0
      %4566 = vmatpush1.msra.mxu0 0.0
      %4567 = vmatprep.subr.mxu0 0.0
      %4568 = vmatpush1.msra.mxu0 0.0
      %4569 = vmatprep.subr.mxu0 0.0
      %4570 = vmatpush1.msra.mxu0 0.0
      %4571 = vmatprep.subr.mxu0 0.0
      %4572 = vmatpush1.msra.mxu0 0.0
      %4573 = vmatprep.subr.mxu0 0.0
      %4574 = vmatpush1.msra.mxu0 0.0
      %4575 = vmatprep.subr.mxu0 %v4487
      %4576 = vmatpush1.msra.mxu0 %v4486
      %4577 = vmatprep.subr.mxu0 %v4484
      %4578 = vmatpush1.msra.mxu0 %v4483
      %4579 = vmatprep.subr.mxu0 %v4481
      %4580 = vmatpush1.msra.mxu0 %v4480
      %4581 = vmatprep.subr.mxu0 %v4478
      %4582 = vmatpush1.msra.mxu0 %v4477
      %4583 = vmatprep.subr.mxu0 %v4475
      %4584 = vmatpush1.msra.mxu0 %v4474
      %4585 = vmatprep.subr.mxu0 %v4472
      %4586 = vmatpush1.msra.mxu0 %v4471
      %4587 = vmatprep.subr.mxu0 %v4469
      %4588 = vmatpush1.msra.mxu0 %v4468
      %4589 = vmatprep.subr.mxu0 %v4466
      %4590 = vmatpush1.msra.mxu0 %v4465
      %4591 = vmatprep.subr.mxu0 %v4463
      %4592 = vmatpush1.msra.mxu0 %v4462
      %4593 = vmatprep.subr.mxu0 0.0
      %4594 = vmatpush2.msra.mxu0 0.0
      %4595 = vmatprep.subr.mxu0 0.0
      %4596 = vmatpush2.msra.mxu0 0.0
      %4597 = vmatprep.subr.mxu0 0.0
      %4598 = vmatpush2.msra.mxu0 0.0
      %4599 = vmatprep.subr.mxu0 0.0
      %4600 = vmatpush2.msra.mxu0 0.0
      %4601 = vmatprep.subr.mxu0 0.0
      %4602 = vmatpush2.msra.mxu0 0.0
      %4603 = vmatprep.subr.mxu0 0.0
      %4604 = vmatpush2.msra.mxu0 0.0
      %4605 = vmatprep.subr.mxu0 0.0
      %4606 = vmatpush2.msra.mxu0 0.0
      %4607 = vmatprep.subr.mxu0 0.0
      %4608 = vmatpush2.msra.mxu0 0.0
      %4609 = vmatprep.subr.mxu0 0.0
      %4610 = vmatpush2.msra.mxu0 0.0
      %4611 = vmatprep.subr.mxu0 0.0
      %4612 = vmatpush2.msra.mxu0 0.0
      %4613 = vmatprep.subr.mxu0 0.0
      %4614 = vmatpush2.msra.mxu0 0.0
      %4615 = vmatprep.subr.mxu0 0.0
      %4616 = vmatpush2.msra.mxu0 0.0
      %4617 = vmatprep.subr.mxu0 0.0
      %4618 = vmatpush2.msra.mxu0 0.0
      %4619 = vmatprep.subr.mxu0 0.0
      %4620 = vmatpush2.msra.mxu0 0.0
      %4621 = vmatprep.subr.mxu0 0.0
      %4622 = vmatpush2.msra.mxu0 0.0
      %4623 = vmatprep.subr.mxu0 0.0
      %4624 = vmatpush2.msra.mxu0 0.0
      %4625 = vmatprep.mubr.f32.mxu0 0.0
      %4626 = vmatmul.mubr.f32.gmra.mxu0 %v4538
      %v4627 = vpop.f32.mrf.mxu0
      %v4628 = vadd.f32 %v4500, %v4627
      %v4629 = vpop.f32.mrf.mxu0
      %v4630 = vadd.f32 %v4500, %v4629
      %4631 = vmatprep.mubr.f32.mxu0 0.0
      %4632 = vmatmul.mubr.f32.gmra.mxu0 %v4541
      %v4633 = vpop.f32.mrf.mxu0
      %v4634 = vadd.f32 %v4505, %v4633
      %v4635 = vpop.f32.mrf.mxu0
      %v4636 = vadd.f32 %v4505, %v4635
      %4637 = vmatprep.mubr.f32.mxu0 0.0
      %4638 = vmatmul.mubr.f32.gmra.mxu0 %v4544
      %v4639 = vpop.f32.mrf.mxu0
      %v4640 = vadd.f32 %v4510, %v4639
      %v4641 = vpop.f32.mrf.mxu0
      %v4642 = vadd.f32 %v4510, %v4641
      %4643 = vmatprep.mubr.f32.mxu0 0.0
      %4644 = vmatmul.mubr.f32.gmra.mxu0 %v4547
      %v4645 = vpop.f32.mrf.mxu0
      %v4646 = vadd.f32 %v4515, %v4645
      %v4647 = vpop.f32.mrf.mxu0
      %v4648 = vadd.f32 %v4515, %v4647
      %4649 = vmatprep.mubr.f32.mxu0 0.0
      %4650 = vmatmul.mubr.f32.gmra.mxu0 %v4550
      %v4651 = vpop.f32.mrf.mxu0
      %v4652 = vadd.f32 %v4520, %v4651
      %v4653 = vpop.f32.mrf.mxu0
      %v4654 = vadd.f32 %v4520, %v4653
      %4655 = vmatprep.mubr.f32.mxu0 0.0
      %4656 = vmatmul.mubr.f32.gmra.mxu0 %v4553
      %v4657 = vpop.f32.mrf.mxu0
      %v4658 = vadd.f32 %v4525, %v4657
      %v4659 = vpop.f32.mrf.mxu0
      %v4660 = vadd.f32 %v4525, %v4659
      %4661 = vmatprep.mubr.f32.mxu0 0.0
      %4662 = vmatmul.mubr.f32.gmra.mxu0 %v4556
      %v4663 = vpop.f32.mrf.mxu0
      %v4664 = vadd.f32 %v4530, %v4663
      %v4665 = vpop.f32.mrf.mxu0
      %v4666 = vadd.f32 %v4530, %v4665
      %4667 = vmatprep.mubr.f32.mxu0 0.0
      %4668 = vmatmul.mubr.f32.gmra.mxu0 %v4559
      %v4669 = vpop.f32.mrf.mxu0
      %v4670 = vadd.f32 %v4535, %v4669
      %v4671 = vpop.f32.mrf.mxu0
      %v4672 = vadd.f32 %v4535, %v4671
      %4673 = vdwg.mxu0
      %4674 = vmatprep.subr.mxu0 0.0
      %4675 = vmatpush1.msra.mxu0 0.0
      %4676 = vmatprep.subr.mxu0 0.0
      %4677 = vmatpush1.msra.mxu0 0.0
      %4678 = vmatprep.subr.mxu0 0.0
      %4679 = vmatpush1.msra.mxu0 0.0
      %4680 = vmatprep.subr.mxu0 0.0
      %4681 = vmatpush1.msra.mxu0 0.0
      %4682 = vmatprep.subr.mxu0 0.0
      %4683 = vmatpush1.msra.mxu0 0.0
      %4684 = vmatprep.subr.mxu0 0.0
      %4685 = vmatpush1.msra.mxu0 0.0
      %4686 = vmatprep.subr.mxu0 0.0
      %4687 = vmatpush1.msra.mxu0 0.0
      %4688 = vmatprep.subr.mxu0 0.0
      %4689 = vmatpush1.msra.mxu0 %v4488
      %4690 = vmatprep.subr.mxu0 0.0
      %4691 = vmatpush1.msra.mxu0 %v4485
      %4692 = vmatprep.subr.mxu0 0.0
      %4693 = vmatpush1.msra.mxu0 %v4482
      %4694 = vmatprep.subr.mxu0 0.0
      %4695 = vmatpush1.msra.mxu0 %v4479
      %4696 = vmatprep.subr.mxu0 0.0
      %4697 = vmatpush1.msra.mxu0 %v4476
      %4698 = vmatprep.subr.mxu0 0.0
      %4699 = vmatpush1.msra.mxu0 %v4473
      %4700 = vmatprep.subr.mxu0 0.0
      %4701 = vmatpush1.msra.mxu0 %v4470
      %4702 = vmatprep.subr.mxu0 0.0
      %4703 = vmatpush1.msra.mxu0 %v4467
      %4704 = vmatprep.subr.mxu0 0.0
      %4705 = vmatpush1.msra.mxu0 %v4464
      %4706 = vmatprep.subr.mxu0 0.0
      %4707 = vmatpush2.msra.mxu0 0.0
      %4708 = vmatprep.subr.mxu0 0.0
      %4709 = vmatpush2.msra.mxu0 0.0
      %4710 = vmatprep.subr.mxu0 0.0
      %4711 = vmatpush2.msra.mxu0 0.0
      %4712 = vmatprep.subr.mxu0 0.0
      %4713 = vmatpush2.msra.mxu0 0.0
      %4714 = vmatprep.subr.mxu0 0.0
      %4715 = vmatpush2.msra.mxu0 0.0
      %4716 = vmatprep.subr.mxu0 0.0
      %4717 = vmatpush2.msra.mxu0 0.0
      %4718 = vmatprep.subr.mxu0 0.0
      %4719 = vmatpush2.msra.mxu0 0.0
      %4720 = vmatprep.subr.mxu0 0.0
      %4721 = vmatpush2.msra.mxu0 0.0
      %4722 = vmatprep.subr.mxu0 0.0
      %4723 = vmatpush2.msra.mxu0 0.0
      %4724 = vmatprep.subr.mxu0 0.0
      %4725 = vmatpush2.msra.mxu0 0.0
      %4726 = vmatprep.subr.mxu0 0.0
      %4727 = vmatpush2.msra.mxu0 0.0
      %4728 = vmatprep.subr.mxu0 0.0
      %4729 = vmatpush2.msra.mxu0 0.0
      %4730 = vmatprep.subr.mxu0 0.0
      %4731 = vmatpush2.msra.mxu0 0.0
      %4732 = vmatprep.subr.mxu0 0.0
      %4733 = vmatpush2.msra.mxu0 0.0
      %4734 = vmatprep.subr.mxu0 0.0
      %4735 = vmatpush2.msra.mxu0 0.0
      %4736 = vmatprep.subr.mxu0 0.0
      %4737 = vmatpush2.msra.mxu0 0.0
      %4738 = vmatprep.mubr.f32.mxu0 0.0
      %4739 = vmatmul.mubr.f32.gmra.mxu0 %v4538
      %v4740 = vpop.f32.mrf.mxu0
      %v4741 = vadd.f32 %v4500, %v4740
      %v4742 = vpop.f32.mrf.mxu0
      %4743 = vmatprep.mubr.f32.mxu0 0.0
      %4744 = vmatmul.mubr.f32.gmra.mxu0 %v4541
      %v4745 = vpop.f32.mrf.mxu0
      %v4746 = vadd.f32 %v4505, %v4745
      %v4747 = vpop.f32.mrf.mxu0
      %4748 = vmatprep.mubr.f32.mxu0 0.0
      %4749 = vmatmul.mubr.f32.gmra.mxu0 %v4544
      %v4750 = vpop.f32.mrf.mxu0
      %v4751 = vadd.f32 %v4510, %v4750
      %v4752 = vpop.f32.mrf.mxu0
      %4753 = vmatprep.mubr.f32.mxu0 0.0
      %4754 = vmatmul.mubr.f32.gmra.mxu0 %v4547
      %v4755 = vpop.f32.mrf.mxu0
      %v4756 = vadd.f32 %v4515, %v4755
      %v4757 = vpop.f32.mrf.mxu0
      %4758 = vmatprep.mubr.f32.mxu0 0.0
      %4759 = vmatmul.mubr.f32.gmra.mxu0 %v4550
      %v4760 = vpop.f32.mrf.mxu0
      %v4761 = vadd.f32 %v4520, %v4760
      %v4762 = vpop.f32.mrf.mxu0
      %4763 = vmatprep.mubr.f32.mxu0 0.0
      %4764 = vmatmul.mubr.f32.gmra.mxu0 %v4553
      %v4765 = vpop.f32.mrf.mxu0
      %v4766 = vadd.f32 %v4525, %v4765
      %v4767 = vpop.f32.mrf.mxu0
      %4768 = vmatprep.mubr.f32.mxu0 0.0
      %4769 = vmatmul.mubr.f32.gmra.mxu0 %v4556
      %v4770 = vpop.f32.mrf.mxu0
      %v4771 = vadd.f32 %v4530, %v4770
      %v4772 = vpop.f32.mrf.mxu0
      %4773 = vmatprep.mubr.f32.mxu0 0.0
      %4774 = vmatmul.mubr.f32.gmra.mxu0 %v4559
      %v4775 = vpop.f32.mrf.mxu0
      %v4776 = vadd.f32 %v4535, %v4775
      %v4777 = vpop.f32.mrf.mxu0
      %4778 = vdwg.mxu0
      %v4779 = vld [vmem:[%s300 + $0x8] sm:$0xff]
      %v4780 = vld [vmem:[%s300 + $0x10] sm:$0xff]
      %v4781 = vld [vmem:[%s300 + $0x18] sm:$0xff]
      %v4782 = vld [vmem:[%s300 + $0x30] sm:$0xff]
      %v4783 = vld [vmem:[%s300 + $0x38] sm:$0xff]
      %v4784 = vld [vmem:[%s300 + $0x40] sm:$0xff]
      %v4785 = vld [vmem:[%s300 + $0x58] sm:$0xff]
      %v4786 = vld [vmem:[%s300 + $0x60] sm:$0xff]
      %v4787 = vld [vmem:[%s300 + $0x68] sm:$0xff]
      %v4788 = vld [vmem:[%s300 + $0x80] sm:$0xff]
      %v4789 = vld [vmem:[%s300 + $0x88] sm:$0xff]
      %v4790 = vld [vmem:[%s300 + $0x90] sm:$0xff]
      %v4791 = vld [vmem:[%s300 + $0xa8] sm:$0xff]
      %v4792 = vld [vmem:[%s300 + $0xb0] sm:$0xff]
      %v4793 = vld [vmem:[%s300 + $0xb8] sm:$0xff]
      %v4794 = vld [vmem:[%s300 + $0xd0] sm:$0xff]
      %v4795 = vld [vmem:[%s300 + $0xd8] sm:$0xff]
      %v4796 = vld [vmem:[%s300 + $0xe0] sm:$0xff]
      %v4797 = vld [vmem:[%s300 + $0xf8] sm:$0xff]
      %v4798 = vld [vmem:[%s300 + $0x100] sm:$0xff]
      %v4799 = vld [vmem:[%s300 + $0x108] sm:$0xff]
      %v4800 = vld [vmem:[%s300 + $0x120] sm:$0xff]
      %v4801 = vld [vmem:[%s300 + $0x128] sm:$0xff]
      %v4802 = vld [vmem:[%s300 + $0x130] sm:$0xff]
      %v4803 = vadd.f32 %v4628, %v4779
      %v4804 = vadd.f32 %v4630, %v4780
      %v4805 = vadd.f32 %v4741, %v4781
      %v4806 = vadd.f32 %v4634, %v4782
      %v4807 = vadd.f32 %v4636, %v4783
      %v4808 = vadd.f32 %v4746, %v4784
      %v4809 = vadd.f32 %v4640, %v4785
      %v4810 = vadd.f32 %v4642, %v4786
      %v4811 = vadd.f32 %v4751, %v4787
      %v4812 = vadd.f32 %v4646, %v4788
      %v4813 = vadd.f32 %v4648, %v4789
      %v4814 = vadd.f32 %v4756, %v4790
      %v4815 = vadd.f32 %v4652, %v4791
      %v4816 = vadd.f32 %v4654, %v4792
      %v4817 = vadd.f32 %v4761, %v4793
      %v4818 = vadd.f32 %v4658, %v4794
      %v4819 = vadd.f32 %v4660, %v4795
      %v4820 = vadd.f32 %v4766, %v4796
      %v4821 = vadd.f32 %v4664, %v4797
      %v4822 = vadd.f32 %v4666, %v4798
      %v4823 = vadd.f32 %v4771, %v4799
      %v4824 = vadd.f32 %v4670, %v4800
      %v4825 = vadd.f32 %v4672, %v4801
      %v4826 = vadd.f32 %v4776, %v4802
      %4827 = vst [vmem:[%s305] sm:$0xff] %v4803
      %4828 = vst [vmem:[%s305 + $0x8] sm:$0xff] %v4804
      %4829 = vst [vmem:[%s305 + $0x10] sm:$0xff] %v4805
      %4830 = vst [vmem:[%s305 + $0x18] sm:$0xff] %v4806
      %4831 = vst [vmem:[%s305 + $0x20] sm:$0xff] %v4807
      %4832 = vst [vmem:[%s305 + $0x28] sm:$0xff] %v4808
      %4833 = vst [vmem:[%s305 + $0x30] sm:$0xff] %v4809
      %4834 = vst [vmem:[%s305 + $0x38] sm:$0xff] %v4810
      %4835 = vst [vmem:[%s305 + $0x40] sm:$0xff] %v4811
      %4836 = vst [vmem:[%s305 + $0x48] sm:$0xff] %v4812
      %4837 = vst [vmem:[%s305 + $0x50] sm:$0xff] %v4813
      %4838 = vst [vmem:[%s305 + $0x58] sm:$0xff] %v4814
      %4839 = vst [vmem:[%s305 + $0x60] sm:$0xff] %v4815
      %4840 = vst [vmem:[%s305 + $0x68] sm:$0xff] %v4816
      %4841 = vst [vmem:[%s305 + $0x70] sm:$0xff] %v4817
      %4842 = vst [vmem:[%s305 + $0x78] sm:$0xff] %v4818
      %4843 = vst [vmem:[%s305 + $0x80] sm:$0xff] %v4819
      %4844 = vst [vmem:[%s305 + $0x88] sm:$0xff] %v4820
      %4845 = vst [vmem:[%s305 + $0x90] sm:$0xff] %v4821
      %4846 = vst [vmem:[%s305 + $0x98] sm:$0xff] %v4822
      %4847 = vst [vmem:[%s305 + $0xa0] sm:$0xff] %v4823
      %4848 = vst [vmem:[%s305 + $0xa8] sm:$0xff] %v4824
      %4849 = vst [vmem:[%s305 + $0xb0] sm:$0xff] %v4825
      %4850 = vst [vmem:[%s305 + $0xb8] sm:$0xff] %v4826
      %p4851 = scmp.lt.s32.totalorder %s19, 1
      %s4852 = scalar_select %p4851, %s19, 1
      %s4853 = smul.addr %s4852, 24
      %s4854 = smul.addr %s4853, 8
      %s4855 = scalar_lea.vmem %s8, %s4854
      // Predicated region
      $region53: #{rrm_forward.1} parent=51 // pred_check
        %p4856 = pneg %p210
      $region54: #{rrm_forward.1} parent=51 // pred_check_branch
        %4858 = sbr.rel (%p4856) target = $region56
      $region55: #{rrm_forward.1} parent=51 // pred_region
        _
      $region56: #{rrm_forward.1} parent=51 // pred_fallthru
        _
    $region52: #{rrm_forward.1} parent=5 // pred_fallthru
      _
    %p4859 = scmp.le.s32.totalorder 2, %s14
    // Predicated region
    $region57: #{rrm_forward.1} parent=5 // pred_check
      %p4860 = pneg %p4859
    $region58: #{rrm_forward.1} parent=5 // pred_check_branch
      %4862 = sbr.rel (%p4860) target = $region60
    $region59: #{rrm_forward.1} parent=5 // pred_region
      %s4863 = ssub.s32 %s14, 2
      // Predicated region
      $region61: #{rrm_forward.1} parent=59 // pred_check
        %p4864 = pneg %p216
      $region62: #{rrm_forward.1} parent=59 // pred_check_branch
        %4866 = sbr.rel (%p4864) target = $region64
      $region63: #{rrm_forward.1} parent=59 // pred_region
        %p4867 = scmp.lt.s32.totalorder %s20, 1
        %s4868 = scalar_select %p4867, %s20, 1
        %s4869 = smul.addr %s4868, 24
        %s4870 = smul.addr %s4869, 8
        %s4871 = scalar_lea.vmem %s8, %s4870
      $region64: #{rrm_forward.1} parent=59 // pred_fallthru
        _
    $region60: #{rrm_forward.1} parent=5 // pred_fallthru
      _
  $region6: #{rrm_forward.1} parent=0 // loop_footer
    %s18 = sadd.s32 1, %s14
  $region7: #{rrm_forward.1} parent=0 // loop_footer_branch
    %13 = sbr.rel target = $region3
  $region8: #{rrm_forward.1} parent=0 // loop_exit
    _

</llo_original>
